<compile_context>
chip_gen: v7x
topology: tpu7x:2x2x1
jax: 0.10.0
libtpu: 0.0.40
codegen_flags: <defaults>
</compile_context>

<pallas_src>
import numpy as np

import jax
import jax.numpy as jnp
from jax.experimental import pallas as pl
from jax.experimental.pallas import tpu as pltpu


# --------------------------------------------------------------------------
# kymatio-style Morlet filter bank (deterministic, built in numpy at setup)
# --------------------------------------------------------------------------
def _gabor_2d(M, N, sigma, theta, xi, slant=1.0):
    gab = np.zeros((M, N), np.complex128)
    R = np.array([[np.cos(theta), -np.sin(theta)], [np.sin(theta), np.cos(theta)]])
    R_inv = np.array([[np.cos(theta), np.sin(theta)], [-np.sin(theta), np.cos(theta)]])
    D = np.array([[1.0, 0.0], [0.0, slant * slant]])
    curv = R @ D @ R_inv / (2.0 * sigma * sigma)
    for ex in (-2, -1, 0, 1, 2):
        for ey in (-2, -1, 0, 1, 2):
            xx, yy = np.mgrid[ex * M:M + ex * M, ey * N:N + ey * N]
            arg = (-(curv[0, 0] * xx * xx + (curv[0, 1] + curv[1, 0]) * xx * yy
                     + curv[1, 1] * yy * yy)
                   + 1j * (xx * xi * np.cos(theta) + yy * xi * np.sin(theta)))
            gab += np.exp(arg)
    gab /= 2.0 * np.pi * sigma * sigma / slant
    return gab


def _morlet_2d(M, N, sigma, theta, xi, slant=0.5):
    wv = _gabor_2d(M, N, sigma, theta, xi, slant)
    wv_mod = _gabor_2d(M, N, sigma, theta, 0.0, slant)
    K = np.sum(wv) / np.sum(wv_mod)
    return wv - K * wv_mod


def make_filter_bank(M_pad, N_pad, J, L):
    psi_f, psi_j = [], []
    for j in range(J):
        for t in range(L):
            theta = (int(L - L / 2 - 1) - t) * np.pi / L
            psi = _morlet_2d(M_pad, N_pad, 0.8 * 2 ** j, theta,
                             3.0 / 4.0 * np.pi / 2 ** j, 4.0 / L)
            # TODO(synk): kymatio keeps the (tiny) imaginary part of fft2(psi);
            # we drop it (np.real) -> minor numerical deviation.
            psi_f.append(np.real(np.fft.fft2(psi)))
            psi_j.append(j)
    phi = _gabor_2d(M_pad, N_pad, 0.8 * 2 ** (J - 1), 0.0, 0.0)
    phi_f = np.real(np.fft.fft2(phi))
    return (np.stack(psi_f).astype(np.float32),
            np.array(psi_j, np.int64),
            phi_f.astype(np.float32))


# --------------------------------------------------------------------------
# helpers
# --------------------------------------------------------------------------
def _round_up(x, m):
    return (x + m - 1) // m * m


def _pick_row_tile(n, cols, max_block_bytes=2 * 1024 * 1024):
    """Largest multiple-of-8 divisor of n whose (tile, cols) f32 block stays
    under max_block_bytes; prefers >= 2 grid steps when that costs nothing.
    Falls back to the full extent n (exempt from the /8 rule)."""
    bytes_per_row = cols * 4
    max_rows = max(8, (max_block_bytes // bytes_per_row) // 8 * 8)
    upper = min(n, max_rows)
    if upper >= n:                      # whole thing fits one block: still try to split
        upper = max(8, n // 2)
    for cand in range(min(upper, n), 7, -1):
        if n % cand == 0 and cand % 8 == 0:
            return cand
    return n


# --------------------------------------------------------------------------
# Pallas kernel 1: elementwise complex modulus (scattering non-linearity)
# --------------------------------------------------------------------------
def _modulus_kernel(re_ref, im_ref, o_ref):
    re = re_ref[...]
    im = im_ref[...]
    o_ref[...] = jnp.sqrt(re * re + im * im)


def pallas_modulus(z):
    """z: complex64 (..., H, W) -> float32 |z| computed in a Pallas kernel."""
    shape = z.shape
    hw = shape[-2] * shape[-1]
    n = int(np.prod(shape[:-2])) if len(shape) > 2 else 1

    # Lane-dense 2-D layout: merge rows so the last dim is a multiple of 128
    # (unmasked vector stores) whenever the row count allows it.
    g = int(np.gcd(hw, 128))
    k = 128 // g
    if n % k == 0:
        rows, cols = n // k, k * hw
    else:
        rows, cols = n, hw

    # TODO(synk): the real/imag extraction could be fused into the kernel via a
    # bitcast + in-kernel lane deinterleave; here it stays in XLA (fused under
    # jit into a single pass over the complex array).
    re = jnp.real(z).astype(jnp.float32).reshape(rows, cols)
    im = jnp.imag(z).astype(jnp.float32).reshape(rows, cols)

    tile = _pick_row_tile(rows, cols)
    grid = (rows // tile,)

    total = rows * cols
    ce = pl.CostEstimate(flops=int(3 * total),
                         transcendentals=int(total),
                         bytes_accessed=int(3 * total * 4))

    out = pl.pallas_call(
        _modulus_kernel,
        out_shape=jax.ShapeDtypeStruct((rows, cols), jnp.float32),
        grid=grid,
        in_specs=[pl.BlockSpec((tile, cols), lambda i: (i, 0)),
                  pl.BlockSpec((tile, cols), lambda i: (i, 0))],
        out_specs=pl.BlockSpec((tile, cols), lambda i: (i, 0)),
        compiler_params=pltpu.CompilerParams(
            dimension_semantics=("parallel",),
            vmem_limit_bytes=32 * 1024 * 1024),
        cost_estimate=ce,
    )(re, im)
    return out.reshape(shape)


# --------------------------------------------------------------------------
# Scattering2D forward (J=3, L=8, order 2) -- Fourier-domain wavelet convs
# --------------------------------------------------------------------------
def scattering2d(x, psi_f, psi_j, phi_f, J):
    """x: (B, C, M, N) float32 -> (B, C, K, M', N') float32."""
    B, C, M, N = x.shape
    Mp, Np_ = phi_f.shape
    pad_m, pad_n = (Mp - M) // 2, (Np_ - N) // 2
    k = 2 ** J

    xs = x.reshape(B * C, M, N)
    xp = jnp.pad(xs, ((0, 0),
                      (pad_m, Mp - M - pad_m),
                      (pad_n, Np_ - N - pad_n)), mode="reflect")
    Xf = jnp.fft.fft2(xp)                                         # (BC, Mp, Np)

    def lowpass(Yf):
        # TODO(synk): kymatio periodizes in the Fourier domain before ifft;
        # here we subsample after the spatial ifft.
        y = jnp.real(jnp.fft.ifft2(Yf * phi_f))
        y = y[..., ::k, ::k]
        return y[..., 1:-1, 1:-1]                                 # unpad

    # order 0
    S0 = lowpass(Xf)[:, None]                                     # (BC, 1, h, w)

    # order 1
    U1 = pallas_modulus(jnp.fft.ifft2(Xf[:, None] * psi_f[None])) # (BC, JL, Mp, Np)
    U1f = jnp.fft.fft2(U1)
    S1 = lowpass(U1f)                                             # (BC, JL, h, w)

    # order 2 (j2 > j1), kymatio channel ordering
    n1_idx, n2_idx = [], []
    for n1 in range(len(psi_j)):
        for n2 in range(len(psi_j)):
            if psi_j[n2] > psi_j[n1]:
                n1_idx.append(n1)
                n2_idx.append(n2)
    n1_idx = np.asarray(n1_idx)
    n2_idx = np.asarray(n2_idx)
    U2 = pallas_modulus(jnp.fft.ifft2(U1f[:, n1_idx] * psi_f[n2_idx][None]))
    S2 = lowpass(jnp.fft.fft2(U2))                                # (BC, P2, h, w)

    S = jnp.concatenate([S0, S1, S2], axis=1)
    K = S.shape[1]
    return S.reshape(B, C, K, S.shape[-2], S.shape[-1])


# --------------------------------------------------------------------------
# Pallas kernel 2: fused classifier  relu(x @ W1 + b1) @ W2 + b2
# (single step over F; whole W1/W2 resident in VMEM; bf16 MXU, f32 accumulate)
# --------------------------------------------------------------------------
def _mlp_kernel(x_ref, w1_ref, b1_ref, w2_ref, b2_ref, o_ref):
    h = jnp.dot(x_ref[...], w1_ref[...], preferred_element_type=jnp.float32)
    h = jnp.maximum(h + b1_ref[...], 0.0)
    o_ref[...] = (jnp.dot(h.astype(w2_ref.dtype), w2_ref[...],
                          preferred_element_type=jnp.float32)
                  + b2_ref[...])


def pallas_classifier(x, w1_bf, b1_r, w2_bf, b2_r, num_classes, *, max_tb=256):
    """x: (B, F) f32; w1_bf: (F, H) bf16; w2_bf: (H, Cp) bf16 (padded at init).
    Returns (B, num_classes) f32."""
    B, F = x.shape
    H = w1_bf.shape[1]
    Cp = w2_bf.shape[1]

    if B <= max_tb:
        # Tiny / moderate batch: latency bound -> single grid step, no padding.
        TB, Bp = B, B
        xb = x.astype(jnp.bfloat16)
    else:
        # Large batch: tile B (parallel axis), keep F un-tiled (W1 resident).
        TB = max_tb
        Bp = _round_up(B, TB)
        xb = jnp.pad(x, ((0, Bp - B), (0, 0))).astype(jnp.bfloat16)

    nb = Bp // TB
    ce = pl.CostEstimate(
        flops=int(2 * Bp * F * H + 2 * Bp * H * Cp),
        transcendentals=0,
        bytes_accessed=int(Bp * F * 2 + F * H * 2 + H * Cp * 2
                           + (H + Cp) * 4 + Bp * Cp * 4))

    out = pl.pallas_call(
        _mlp_kernel,
        out_shape=jax.ShapeDtypeStruct((Bp, Cp), jnp.float32),
        grid=(nb,),
        in_specs=[
            pl.BlockSpec((TB, F), lambda i: (i, 0)),   # x tile over B
            pl.BlockSpec((F, H), lambda i: (0, 0)),    # W1 resident
            pl.BlockSpec((1, H), lambda i: (0, 0)),    # b1 resident
            pl.BlockSpec((H, Cp), lambda i: (0, 0)),   # W2 resident
            pl.BlockSpec((1, Cp), lambda i: (0, 0)),   # b2 resident
        ],
        out_specs=pl.BlockSpec((TB, Cp), lambda i: (i, 0)),
        compiler_params=pltpu.CompilerParams(
            dimension_semantics=("parallel",),
            vmem_limit_bytes=32 * 1024 * 1024),
        cost_estimate=ce,
    )(xb, w1_bf, b1_r, w2_bf, b2_r)
    return out[:B, :num_classes]


# --------------------------------------------------------------------------
# Model wrapper (mirrors the PyTorch ScatteringModel)
# --------------------------------------------------------------------------
class ScatteringModelPallas:
    def __init__(self, J=3, L=8, order=2, input_shape=(1, 28, 28),
                 num_classes=10, key=None):
        assert order == 2, "this implementation mirrors max_order=2"
        M, N = input_shape[-2], input_shape[-1]
        Mp = ((M + 2 ** J) // 2 ** J + 1) * 2 ** J
        Np_ = ((N + 2 ** J) // 2 ** J + 1) * 2 ** J
        psi_f, psi_j, phi_f = make_filter_bank(Mp, Np_, J, L)
        self.psi_f = jnp.asarray(psi_f)
        self.psi_j = psi_j
        self.phi_f = jnp.asarray(phi_f)
        self.J = J
        self.num_classes = num_classes

        # mimic the torch module: dummy forward (abstract, no TPU work) to
        # determine flattened_size
        dummy = jax.ShapeDtypeStruct((1,) + tuple(input_shape), jnp.float32)
        dummy_out = jax.eval_shape(
            lambda d: scattering2d(d, self.psi_f, self.psi_j, self.phi_f, J),
            dummy)
        self.flattened_size = int(np.prod(dummy_out.shape[1:]))

        # classifier params (deterministic, PyTorch nn.Linear-style uniform init)
        H = 128
        k0, k1, k2, k3 = jax.random.split(key, 4)
        lim1 = 1.0 / np.sqrt(self.flattened_size)
        w1 = jax.random.uniform(k0, (self.flattened_size, H),
                                jnp.float32, -lim1, lim1)
        b1 = jax.random.uniform(k1, (H,), jnp.float32, -lim1, lim1)
        lim2 = 1.0 / np.sqrt(float(H))
        w2 = jax.random.uniform(k2, (H, num_classes), jnp.float32, -lim2, lim2)
        b2 = jax.random.uniform(k3, (num_classes,), jnp.float32, -lim2, lim2)

        # Hoisted, kernel-ready parameter layout (done once, not per forward):
        #  - W1/W2 in bf16 for the MXU (f32 accumulation preserved in-kernel)
        #  - W2/b2 zero-padded to a lane-dense 128-wide output
        Cp = _round_up(num_classes, 128)
        self.w1_bf = w1.astype(jnp.bfloat16)                       # (F, 128)
        self.b1_r = b1.reshape(1, H).astype(jnp.float32)           # (1, 128)
        self.w2_bf = (jnp.zeros((H, Cp), jnp.float32)
                      .at[:, :num_classes].set(w2)).astype(jnp.bfloat16)
        self.b2_r = (jnp.zeros((1, Cp), jnp.float32)
                     .at[0, :num_classes].set(b2))

    def __call__(self, x):
        s = scattering2d(x, self.psi_f, self.psi_j, self.phi_f, self.J)
        feats = s.reshape(s.shape[0], -1)            # torch x.view(B, -1)
        return pallas_classifier(feats, self.w1_bf, self.b1_r,
                                 self.w2_bf, self.b2_r, self.num_classes)


if __name__ == "__main__":
    key = jax.random.PRNGKey(0)
    pkey, xkey = jax.random.split(key)

    model = ScatteringModelPallas(J=3, L=8, order=2,
                                  input_shape=(1, 28, 28),
                                  num_classes=10, key=pkey)

    # small deterministic example batch: (B, C, H, W) = (2, 1, 28, 28)
    x = jax.random.normal(xkey, (2, 1, 28, 28), jnp.float32)

    forward = jax.jit(lambda inp: model(inp))
    out = forward(x)
    out = jax.block_until_ready(out)
    assert out.shape == (2, 10) and out.dtype == jnp.float32
    print("KERNEL_OK")
</pallas_src>

<mosaic_0001>
module attributes {stable_mosaic.version = 11 : i64} {
  func.func @_modulus_kernel(%arg0: i32, %arg1: memref<8x3200xf32, #tpu.memory_space<vmem>>, %arg2: memref<8x3200xf32, #tpu.memory_space<vmem>>, %arg3: memref<8x3200xf32, #tpu.memory_space<vmem>>) attributes {dimension_semantics = [#tpu.dimension_semantics<parallel>], iteration_bounds = array<i64: 3>, scalar_prefetch = 0 : i64, scratch_operands = 0 : i64, tpu.core_type = #tpu.core_type<tc>, window_params = [{transform_indices = @transform_0, window_bounds = array<i64: 8, 3200>}, {transform_indices = @transform_1, window_bounds = array<i64: 8, 3200>}, {transform_indices = @transform_2, window_bounds = array<i64: 8, 3200>}]} {
    %c0 = arith.constant 0 : index
    %c0_0 = arith.constant 0 : index
    %0 = vector.load %arg1[%c0, %c0_0] : memref<8x3200xf32, #tpu.memory_space<vmem>>, vector<8x3200xf32>
    %c0_1 = arith.constant 0 : index
    %c0_2 = arith.constant 0 : index
    %1 = vector.load %arg2[%c0_1, %c0_2] : memref<8x3200xf32, #tpu.memory_space<vmem>>, vector<8x3200xf32>
    %2 = arith.mulf %0, %0 : vector<8x3200xf32>
    %3 = arith.mulf %1, %1 : vector<8x3200xf32>
    %4 = arith.addf %2, %3 : vector<8x3200xf32>
    %5 = math.sqrt %4 : vector<8x3200xf32>
    %c0_3 = arith.constant 0 : index
    %c0_4 = arith.constant 0 : index
    %6 = vector.load %arg3[%c0_3, %c0_4] : memref<8x3200xf32, #tpu.memory_space<vmem>>, vector<8x3200xf32>
    tpu.vector_store %arg3[%c0_3, %c0_4], %5 {strides = array<i32>} : memref<8x3200xf32, #tpu.memory_space<vmem>>, vector<8x3200xf32>,
    return
  }
  func.func @transform_0(%arg0: i32) -> (i32, i32) {
    %c0_i32 = arith.constant 0 : i32
    %c0_i32_0 = arith.constant 0 : i32
    return %arg0, %c0_i32 : i32, i32
  }
  func.func @transform_1(%arg0: i32) -> (i32, i32) {
    %c0_i32 = arith.constant 0 : i32
    %c0_i32_0 = arith.constant 0 : i32
    return %arg0, %c0_i32 : i32, i32
  }
  func.func @transform_2(%arg0: i32) -> (i32, i32) {
    %c0_i32 = arith.constant 0 : i32
    %c0_i32_0 = arith.constant 0 : i32
    return %arg0, %c0_i32 : i32, i32
  }
}

module attributes {stable_mosaic.version = 11 : i64} {
  func.func @_modulus_kernel(%arg0: i32, %arg1: memref<96x3200xf32, #tpu.memory_space<vmem>>, %arg2: memref<96x3200xf32, #tpu.memory_space<vmem>>, %arg3: memref<96x3200xf32, #tpu.memory_space<vmem>>) attributes {dimension_semantics = [#tpu.dimension_semantics<parallel>], iteration_bounds = array<i64: 2>, scalar_prefetch = 0 : i64, scratch_operands = 0 : i64, tpu.core_type = #tpu.core_type<tc>, window_params = [{transform_indices = @transform_0, window_bounds = array<i64: 96, 3200>}, {transform_indices = @transform_1, window_bounds = array<i64: 96, 3200>}, {transform_indices = @transform_2, window_bounds = array<i64: 96, 3200>}]} {
    %c0 = arith.constant 0 : index
    %c0_0 = arith.constant 0 : index
    %0 = vector.load %arg1[%c0, %c0_0] : memref<96x3200xf32, #tpu.memory_space<vmem>>, vector<96x3200xf32>
    %c0_1 = arith.constant 0 : index
    %c0_2 = arith.constant 0 : index
    %1 = vector.load %arg2[%c0_1, %c0_2] : memref<96x3200xf32, #tpu.memory_space<vmem>>, vector<96x3200xf32>
    %2 = arith.mulf %0, %0 : vector<96x3200xf32>
    %3 = arith.mulf %1, %1 : vector<96x3200xf32>
    %4 = arith.addf %2, %3 : vector<96x3200xf32>
    %5 = math.sqrt %4 : vector<96x3200xf32>
    %c0_3 = arith.constant 0 : index
    %c0_4 = arith.constant 0 : index
    %6 = vector.load %arg3[%c0_3, %c0_4] : memref<96x3200xf32, #tpu.memory_space<vmem>>, vector<96x3200xf32>
    tpu.vector_store %arg3[%c0_3, %c0_4], %5 {strides = array<i32>} : memref<96x3200xf32, #tpu.memory_space<vmem>>, vector<96x3200xf32>,
    return
  }
  func.func @transform_0(%arg0: i32) -> (i32, i32) {
    %c0_i32 = arith.constant 0 : i32
    %c0_i32_0 = arith.constant 0 : i32
    return %arg0, %c0_i32 : i32, i32
  }
  func.func @transform_1(%arg0: i32) -> (i32, i32) {
    %c0_i32 = arith.constant 0 : i32
    %c0_i32_0 = arith.constant 0 : i32
    return %arg0, %c0_i32 : i32, i32
  }
  func.func @transform_2(%arg0: i32) -> (i32, i32) {
    %c0_i32 = arith.constant 0 : i32
    %c0_i32_0 = arith.constant 0 : i32
    return %arg0, %c0_i32 : i32, i32
  }
}

module attributes {stable_mosaic.version = 11 : i64} {
  func.func @_mlp_kernel(%arg0: i32, %arg1: memref<2x1953xbf16, #tpu.memory_space<vmem>>, %arg2: memref<1953x128xbf16, #tpu.memory_space<vmem>>, %arg3: memref<1x128xf32, #tpu.memory_space<vmem>>, %arg4: memref<128x128xbf16, #tpu.memory_space<vmem>>, %arg5: memref<1x128xf32, #tpu.memory_space<vmem>>, %arg6: memref<2x128xf32, #tpu.memory_space<vmem>>) attributes {dimension_semantics = [#tpu.dimension_semantics<parallel>], iteration_bounds = array<i64: 1>, scalar_prefetch = 0 : i64, scratch_operands = 0 : i64, tpu.core_type = #tpu.core_type<tc>, window_params = [{transform_indices = @transform_0, window_bounds = array<i64: 2, 1953>}, {pipeline_mode = #tpu.pipeline_mode<synchronous>, transform_indices = @transform_1, window_bounds = array<i64: 1953, 128>}, {pipeline_mode = #tpu.pipeline_mode<synchronous>, transform_indices = @transform_2, window_bounds = array<i64: 1, 128>}, {pipeline_mode = #tpu.pipeline_mode<synchronous>, transform_indices = @transform_3, window_bounds = array<i64: 128, 128>}, {pipeline_mode = #tpu.pipeline_mode<synchronous>, transform_indices = @transform_4, window_bounds = array<i64: 1, 128>}, {transform_indices = @transform_5, window_bounds = array<i64: 2, 128>}]} {
    %c0 = arith.constant 0 : index
    %c0_0 = arith.constant 0 : index
    %0 = vector.load %arg1[%c0, %c0_0] : memref<2x1953xbf16, #tpu.memory_space<vmem>>, vector<2x1953xbf16>
    %c0_1 = arith.constant 0 : index
    %c0_2 = arith.constant 0 : index
    %1 = vector.load %arg2[%c0_1, %c0_2] : memref<1953x128xbf16, #tpu.memory_space<vmem>>, vector<1953x128xbf16>
    %cst = arith.constant dense<0.000000e+00> : vector<2x128xf32>
    %2 = tpu.matmul %0, %1, %cst {dimension_numbers = #tpu.dot_dimension_numbers<[1], [0], [0], [1], [0, 0, 1, 1], [], []>} : vector<2x1953xbf16>, vector<1953x128xbf16>, vector<2x128xf32> -> vector<2x128xf32>
    %c0_3 = arith.constant 0 : index
    %c0_4 = arith.constant 0 : index
    %3 = vector.load %arg3[%c0_3, %c0_4] : memref<1x128xf32, #tpu.memory_space<vmem>>, vector<1x128xf32>
    %4 = vector.broadcast %3 : vector<1x128xf32> to vector<2x128xf32>
    %5 = arith.addf %2, %4 : vector<2x128xf32>
    %cst_5 = arith.constant 0.000000e+00 : f32
    %6 = vector.broadcast %cst_5 : f32 to vector<2x128xf32>
    %7 = arith.maximumf %5, %6 : vector<2x128xf32>
    %8 = arith.truncf %7 : vector<2x128xf32> to vector<2x128xbf16>
    %c0_6 = arith.constant 0 : index
    %c0_7 = arith.constant 0 : index
    %9 = vector.load %arg4[%c0_6, %c0_7] : memref<128x128xbf16, #tpu.memory_space<vmem>>, vector<128x128xbf16>
    %cst_8 = arith.constant dense<0.000000e+00> : vector<2x128xf32>
    %10 = tpu.matmul %8, %9, %cst_8 {dimension_numbers = #tpu.dot_dimension_numbers<[1], [0], [0], [1], [0, 0, 1, 1], [], []>} : vector<2x128xbf16>, vector<128x128xbf16>, vector<2x128xf32> -> vector<2x128xf32>
    %c0_9 = arith.constant 0 : index
    %c0_10 = arith.constant 0 : index
    %11 = vector.load %arg5[%c0_9, %c0_10] : memref<1x128xf32, #tpu.memory_space<vmem>>, vector<1x128xf32>
    %12 = vector.broadcast %11 : vector<1x128xf32> to vector<2x128xf32>
    %13 = arith.addf %10, %12 : vector<2x128xf32>
    %c0_11 = arith.constant 0 : index
    %c0_12 = arith.constant 0 : index
    %14 = vector.load %arg6[%c0_11, %c0_12] : memref<2x128xf32, #tpu.memory_space<vmem>>, vector<2x128xf32>
    tpu.vector_store %arg6[%c0_11, %c0_12], %13 {strides = array<i32>} : memref<2x128xf32, #tpu.memory_space<vmem>>, vector<2x128xf32>,
    return
  }
  func.func @transform_0(%arg0: i32) -> (i32, i32) {
    %c0_i32 = arith.constant 0 : i32
    %c0_i32_0 = arith.constant 0 : i32
    return %arg0, %c0_i32 : i32, i32
  }
  func.func @transform_1(%arg0: i32) -> (i32, i32) {
    %c0_i32 = arith.constant 0 : i32
    %c0_i32_0 = arith.constant 0 : i32
    %c0_i32_1 = arith.constant 0 : i32
    return %c0_i32, %c0_i32_0 : i32, i32
  }
  func.func @transform_2(%arg0: i32) -> (i32, i32) {
    %c0_i32 = arith.constant 0 : i32
    %c0_i32_0 = arith.constant 0 : i32
    %c0_i32_1 = arith.constant 0 : i32
    return %c0_i32, %c0_i32_0 : i32, i32
  }
  func.func @transform_3(%arg0: i32) -> (i32, i32) {
    %c0_i32 = arith.constant 0 : i32
    %c0_i32_0 = arith.constant 0 : i32
    %c0_i32_1 = arith.constant 0 : i32
    return %c0_i32, %c0_i32_0 : i32, i32
  }
  func.func @transform_4(%arg0: i32) -> (i32, i32) {
    %c0_i32 = arith.constant 0 : i32
    %c0_i32_0 = arith.constant 0 : i32
    %c0_i32_1 = arith.constant 0 : i32
    return %c0_i32, %c0_i32_0 : i32, i32
  }
  func.func @transform_5(%arg0: i32) -> (i32, i32) {
    %c0_i32 = arith.constant 0 : i32
    %c0_i32_0 = arith.constant 0 : i32
    return %arg0, %c0_i32 : i32, i32
  }
}

</mosaic_0001>

<llo_original>
// kernel: _lambda_.3
$region0: #{_lambda_.3}
  #allocation0 [shape = 'u32[]', space=smem, size = 0x4, offset = 0x4, fixed_abs, tag = 'smem constant byte address 0x4 - core index']
  #allocation1 [shape = 'u32[144,128]{1,0:T(1,128)}', space=vmem, size = 0x12000, scoped, tag = 'internal scratch']
  %s0 = inlined_call_operand.vmem [shape: f32[24,3200], index: 0, kind: input, shape index: {}]
  %s1 = inlined_call_operand.vmem [shape: f32[24,3200], index: 1, kind: input, shape index: {}]
  %s2 = inlined_call_operand.vmem [shape: f32[24,3200], index: 2, kind: output, shape index: {}]
  %s3 = sld [smem:[#allocation0]]
  $region41: #{_lambda_.3} parent=0
    _
  %s5 = ssub.s32 1, %s3
  %s6 = scalar_select 0, %s5, %s3
  loop: start=0, step=1, limit=5
  $region2: #{_lambda_.3} parent=0 // loop_pre_header
    _
  $region3: #{_lambda_.3} parent=0 // loop_header
    %s8 = sphi 0, %s12
    %p9 = scmp.ge.s32.totalorder %s8, 5
    %s18 = sphi 0, %s20
    %s21 = sphi 0, %s18
    %s22 = sphi 0, %s21
    %s38 = sphi 0, %s22
    %s44 = sphi 0, %s46
    %s47 = sphi 0, %s44
    %s48 = sphi 0, %s47
    %s64 = sphi 0, %s48
    %s70 = sphi 0, %s72
    %s73 = sphi 0, %s70
    %s74 = sphi 0, %s73
    %s90 = sphi 0, %s74
  $region4: #{_lambda_.3} parent=0 // loop_header_branch
    %11 = sbr.rel (%p9) target = $region8
  $region5: #{_lambda_.3} parent=0 // loop_body
    %s13 = ssub.s32 %s8, 1
    %s14 = ssub.s32 %s8, 2
    %s15 = sadd.s32 %s8, 1
    %s16 = ssub.s32 %s8, %s15
    %p17 = scmp.eq.s32.totalorder %s16, 0
    %s19 = sadd.s32 %s18, 1
    %s20 = scalar_select %p17, %s18, %s19
    %p23 = pneg %p17
    %p24 = scmp.eq.s32.totalorder %s8, 2
    %p25 = por %p23, %p24
    %p26 = scmp.ne.s32.totalorder %s18, %s21
    %p27 = scmp.eq.s32.totalorder %s8, 0
    %p28 = por %p26, %p27
    %p29 = scmp.ne.s32.totalorder %s18, %s21
    %p30 = scmp.eq.s32.totalorder %s13, 2
    %p31 = por %p29, %p30
    %p32 = scmp.ne.s32.totalorder %s21, %s22
    %p33 = scmp.eq.s32.totalorder %s13, 0
    %p34 = por %p32, %p33
    %p35 = scmp.ne.s32.totalorder %s21, %s22
    %p36 = scmp.eq.s32.totalorder %s14, 2
    %p37 = por %p35, %p36
    %p39 = scmp.ne.s32.totalorder %s22, %s38
    %p40 = scmp.eq.s32.totalorder %s14, 0
    %p41 = por %p39, %p40
    %s42 = ssub.s32 %s8, %s15
    %p43 = scmp.eq.s32.totalorder %s42, 0
    %s45 = sadd.s32 %s44, 1
    %s46 = scalar_select %p43, %s44, %s45
    %p49 = pneg %p43
    %p50 = scmp.eq.s32.totalorder %s8, 2
    %p51 = por %p49, %p50
    %p52 = scmp.ne.s32.totalorder %s44, %s47
    %p53 = scmp.eq.s32.totalorder %s8, 0
    %p54 = por %p52, %p53
    %p55 = scmp.ne.s32.totalorder %s44, %s47
    %p56 = scmp.eq.s32.totalorder %s13, 2
    %p57 = por %p55, %p56
    %p58 = scmp.ne.s32.totalorder %s47, %s48
    %p59 = scmp.eq.s32.totalorder %s13, 0
    %p60 = por %p58, %p59
    %p61 = scmp.ne.s32.totalorder %s47, %s48
    %p62 = scmp.eq.s32.totalorder %s14, 2
    %p63 = por %p61, %p62
    %p65 = scmp.ne.s32.totalorder %s48, %s64
    %p66 = scmp.eq.s32.totalorder %s14, 0
    %p67 = por %p65, %p66
    %s68 = ssub.s32 %s8, %s15
    %p69 = scmp.eq.s32.totalorder %s68, 0
    %s71 = sadd.s32 %s70, 1
    %s72 = scalar_select %p69, %s70, %s71
    %p75 = pneg %p69
    %p76 = scmp.eq.s32.totalorder %s8, 2
    %p77 = por %p75, %p76
    %p78 = scmp.ne.s32.totalorder %s70, %s73
    %p79 = scmp.eq.s32.totalorder %s8, 0
    %p80 = por %p78, %p79
    %p81 = scmp.ne.s32.totalorder %s70, %s73
    %p82 = scmp.eq.s32.totalorder %s13, 2
    %p83 = por %p81, %p82
    %p84 = scmp.ne.s32.totalorder %s73, %s74
    %p85 = scmp.eq.s32.totalorder %s13, 0
    %p86 = por %p84, %p85
    %p87 = scmp.ne.s32.totalorder %s73, %s74
    %p88 = scmp.eq.s32.totalorder %s14, 2
    %p89 = por %p87, %p88
    %p91 = scmp.ne.s32.totalorder %s74, %s90
    %p92 = scmp.eq.s32.totalorder %s14, 0
    %p93 = por %p91, %p92
    %p94 = scmp.le.s32.totalorder 1, %s8
    %p95 = scmp.lt.s32.totalorder %s8, 4
    %p96 = pnand %p94, %p95
    %p97 = pneg %p96
    // Predicated region
    $region9: #{_lambda_.3} parent=5 // pred_check
      _
    $region10: #{_lambda_.3} parent=5 // pred_check_branch
      %99 = sbr.rel (%p96) target = $region12
    $region11: #{_lambda_.3} parent=5 // pred_region
      %s100 = ssub.s32 %s8, 1
    $region12: #{_lambda_.3} parent=5 // pred_fallthru
      _
    %p101 = scmp.lt.s32.totalorder %s8, 3
    // Predicated region
    $region13: #{_lambda_.3} parent=5 // pred_check
      %p102 = pneg %p101
    $region14: #{_lambda_.3} parent=5 // pred_check_branch
      %104 = sbr.rel (%p102) target = $region16
    $region15: #{_lambda_.3} parent=5 // pred_region
      // Predicated region
      $region17: #{_lambda_.3} parent=15 // pred_check
        %p105 = pneg %p28
      $region18: #{_lambda_.3} parent=15 // pred_check_branch
        %107 = sbr.rel (%p105) target = $region20
      $region19: #{_lambda_.3} parent=15 // pred_region
        %p108 = scmp.lt.s32.totalorder %s8, 2
        %s109 = scalar_select %p108, %s8, 2
        %s110 = smul.addr %s109, 25
        %s111 = smul.addr %s110, 8
        %s112 = scalar_lea.vmem %s0, %s111
      $region20: #{_lambda_.3} parent=15 // pred_fallthru
        _
      // Predicated region
      $region21: #{_lambda_.3} parent=15 // pred_check
        %p113 = pneg %p54
      $region22: #{_lambda_.3} parent=15 // pred_check_branch
        %115 = sbr.rel (%p113) target = $region24
      $region23: #{_lambda_.3} parent=15 // pred_region
        %p116 = scmp.lt.s32.totalorder %s8, 2
        %s117 = scalar_select %p116, %s8, 2
        %s118 = smul.addr %s117, 25
        %s119 = smul.addr %s118, 8
        %s120 = scalar_lea.vmem %s1, %s119
      $region24: #{_lambda_.3} parent=15 // pred_fallthru
        _
    $region16: #{_lambda_.3} parent=5 // pred_fallthru
      _
    %p121 = scmp.le.s32.totalorder 1, %s8
    %p122 = scmp.lt.s32.totalorder %s8, 4
    %p123 = pnand %p121, %p122
    %p124 = pneg %p123
    // Predicated region
    $region25: #{_lambda_.3} parent=5 // pred_check
      _
    $region26: #{_lambda_.3} parent=5 // pred_check_branch
      %126 = sbr.rel (%p123) target = $region28
    $region27: #{_lambda_.3} parent=5 // pred_region
      %s127 = ssub.s32 %s8, 1
      %p128 = scmp.lt.s32.totalorder %s13, 2
      %s129 = scalar_select %p128, %s13, 2
      %s130 = smul.addr %s129, 25
      %s131 = smul.addr %s130, 8
      %s132 = scalar_lea.vmem %s0, %s131
      %p133 = pneg %p34
      %p134 = pneg %p31
      %p135 = scmp.lt.s32.totalorder %s13, 2
      %s136 = scalar_select %p135, %s13, 2
      %s137 = smul.addr %s136, 25
      %s138 = smul.addr %s137, 8
      %s139 = scalar_lea.vmem %s1, %s138
      %p140 = pneg %p60
      %p141 = pneg %p57
      %p142 = pneg %p86
      %p143 = pneg %p83
      %p144 = scmp.lt.s32.totalorder %s13, 2
      %s145 = scalar_select %p144, %s13, 2
      %s146 = smul.addr %s145, 25
      %s147 = smul.addr %s146, 8
      %s148 = scalar_lea.vmem %s2, %s147
      %p149 = scmp.lt.s32.totalorder %s13, 2
      %s150 = scalar_select %p149, %s13, 2
      %s151 = smul.addr %s150, 25
      %s152 = smul.addr %s151, 8
      %s153 = scalar_lea.vmem %s0, %s152
      %p154 = scmp.lt.s32.totalorder %s13, 2
      %s155 = scalar_select %p154, %s13, 2
      %s156 = smul.addr %s155, 25
      %s157 = smul.addr %s156, 8
      %s158 = scalar_lea.vmem %s1, %s157
      %p159 = scmp.lt.s32.totalorder %s13, 2
      %s160 = scalar_select %p159, %s13, 2
      %s161 = smul.addr %s160, 25
      %s162 = smul.addr %s161, 8
      %s163 = scalar_lea.vmem %s2, %s162
      %v164 = vld [vmem:[%s153] sm:$0xff]
      %v165 = vld [vmem:[%s153 + $0x8] sm:$0xff]
      %v166 = vld [vmem:[%s153 + $0x10] sm:$0xff]
      %v167 = vld [vmem:[%s153 + $0x18] sm:$0xff]
      %v168 = vld [vmem:[%s153 + $0x20] sm:$0xff]
      %v169 = vld [vmem:[%s153 + $0x28] sm:$0xff]
      %v170 = vld [vmem:[%s153 + $0x30] sm:$0xff]
      %v171 = vld [vmem:[%s153 + $0x38] sm:$0xff]
      %v172 = vld [vmem:[%s153 + $0x40] sm:$0xff]
      %v173 = vld [vmem:[%s153 + $0x48] sm:$0xff]
      %v174 = vld [vmem:[%s153 + $0x50] sm:$0xff]
      %v175 = vld [vmem:[%s153 + $0x58] sm:$0xff]
      %v176 = vld [vmem:[%s153 + $0x60] sm:$0xff]
      %v177 = vld [vmem:[%s153 + $0x68] sm:$0xff]
      %v178 = vld [vmem:[%s153 + $0x70] sm:$0xff]
      %v179 = vld [vmem:[%s153 + $0x78] sm:$0xff]
      %v180 = vld [vmem:[%s153 + $0x80] sm:$0xff]
      %v181 = vld [vmem:[%s153 + $0x88] sm:$0xff]
      %v182 = vld [vmem:[%s153 + $0x90] sm:$0xff]
      %v183 = vld [vmem:[%s153 + $0x98] sm:$0xff]
      %v184 = vld [vmem:[%s153 + $0xa0] sm:$0xff]
      %v185 = vld [vmem:[%s153 + $0xa8] sm:$0xff]
      %v186 = vld [vmem:[%s153 + $0xb0] sm:$0xff]
      %v187 = vld [vmem:[%s153 + $0xb8] sm:$0xff]
      %v188 = vld [vmem:[%s153 + $0xc0] sm:$0xff]
      %v189 = vld [vmem:[%s158] sm:$0xff]
      %v190 = vld [vmem:[%s158 + $0x8] sm:$0xff]
      %v191 = vld [vmem:[%s158 + $0x10] sm:$0xff]
      %v192 = vld [vmem:[%s158 + $0x18] sm:$0xff]
      %v193 = vld [vmem:[%s158 + $0x20] sm:$0xff]
      %v194 = vld [vmem:[%s158 + $0x28] sm:$0xff]
      %v195 = vld [vmem:[%s158 + $0x30] sm:$0xff]
      %v196 = vld [vmem:[%s158 + $0x38] sm:$0xff]
      %v197 = vld [vmem:[%s158 + $0x40] sm:$0xff]
      %v198 = vld [vmem:[%s158 + $0x48] sm:$0xff]
      %v199 = vld [vmem:[%s158 + $0x50] sm:$0xff]
      %v200 = vld [vmem:[%s158 + $0x58] sm:$0xff]
      %v201 = vld [vmem:[%s158 + $0x60] sm:$0xff]
      %v202 = vld [vmem:[%s158 + $0x68] sm:$0xff]
      %v203 = vld [vmem:[%s158 + $0x70] sm:$0xff]
      %v204 = vld [vmem:[%s158 + $0x78] sm:$0xff]
      %v205 = vld [vmem:[%s158 + $0x80] sm:$0xff]
      %v206 = vld [vmem:[%s158 + $0x88] sm:$0xff]
      %v207 = vld [vmem:[%s158 + $0x90] sm:$0xff]
      %v208 = vld [vmem:[%s158 + $0x98] sm:$0xff]
      %v209 = vld [vmem:[%s158 + $0xa0] sm:$0xff]
      %v210 = vld [vmem:[%s158 + $0xa8] sm:$0xff]
      %v211 = vld [vmem:[%s158 + $0xb0] sm:$0xff]
      %v212 = vld [vmem:[%s158 + $0xb8] sm:$0xff]
      %v213 = vld [vmem:[%s158 + $0xc0] sm:$0xff]
      %v214 = vmul.f32 %v164, %v164
      %v215 = vmul.f32 %v165, %v165
      %v216 = vmul.f32 %v166, %v166
      %v217 = vmul.f32 %v167, %v167
      %v218 = vmul.f32 %v168, %v168
      %v219 = vmul.f32 %v169, %v169
      %v220 = vmul.f32 %v170, %v170
      %v221 = vmul.f32 %v171, %v171
      %v222 = vmul.f32 %v172, %v172
      %v223 = vmul.f32 %v173, %v173
      %v224 = vmul.f32 %v174, %v174
      %v225 = vmul.f32 %v175, %v175
      %v226 = vmul.f32 %v176, %v176
      %v227 = vmul.f32 %v177, %v177
      %v228 = vmul.f32 %v178, %v178
      %v229 = vmul.f32 %v179, %v179
      %v230 = vmul.f32 %v180, %v180
      %v231 = vmul.f32 %v181, %v181
      %v232 = vmul.f32 %v182, %v182
      %v233 = vmul.f32 %v183, %v183
      %v234 = vmul.f32 %v184, %v184
      %v235 = vmul.f32 %v185, %v185
      %v236 = vmul.f32 %v186, %v186
      %v237 = vmul.f32 %v187, %v187
      %v238 = vmul.f32 %v188, %v188
      %v239 = vmul.f32 %v189, %v189
      %v240 = vmul.f32 %v190, %v190
      %v241 = vmul.f32 %v191, %v191
      %v242 = vmul.f32 %v192, %v192
      %v243 = vmul.f32 %v193, %v193
      %v244 = vmul.f32 %v194, %v194
      %v245 = vmul.f32 %v195, %v195
      %v246 = vmul.f32 %v196, %v196
      %v247 = vmul.f32 %v197, %v197
      %v248 = vmul.f32 %v198, %v198
      %v249 = vmul.f32 %v199, %v199
      %v250 = vmul.f32 %v200, %v200
      %v251 = vmul.f32 %v201, %v201
      %v252 = vmul.f32 %v202, %v202
      %v253 = vmul.f32 %v203, %v203
      %v254 = vmul.f32 %v204, %v204
      %v255 = vmul.f32 %v205, %v205
      %v256 = vmul.f32 %v206, %v206
      %v257 = vmul.f32 %v207, %v207
      %v258 = vmul.f32 %v208, %v208
      %v259 = vmul.f32 %v209, %v209
      %v260 = vmul.f32 %v210, %v210
      %v261 = vmul.f32 %v211, %v211
      %v262 = vmul.f32 %v212, %v212
      %v263 = vmul.f32 %v213, %v213
      %v264 = vadd.f32 %v214, %v239
      %v265 = vadd.f32 %v215, %v240
      %v266 = vadd.f32 %v216, %v241
      %v267 = vadd.f32 %v217, %v242
      %v268 = vadd.f32 %v218, %v243
      %v269 = vadd.f32 %v219, %v244
      %v270 = vadd.f32 %v220, %v245
      %v271 = vadd.f32 %v221, %v246
      %v272 = vadd.f32 %v222, %v247
      %v273 = vadd.f32 %v223, %v248
      %v274 = vadd.f32 %v224, %v249
      %v275 = vadd.f32 %v225, %v250
      %v276 = vadd.f32 %v226, %v251
      %v277 = vadd.f32 %v227, %v252
      %v278 = vadd.f32 %v228, %v253
      %v279 = vadd.f32 %v229, %v254
      %v280 = vadd.f32 %v230, %v255
      %v281 = vadd.f32 %v231, %v256
      %v282 = vadd.f32 %v232, %v257
      %v283 = vadd.f32 %v233, %v258
      %v284 = vadd.f32 %v234, %v259
      %v285 = vadd.f32 %v235, %v260
      %v286 = vadd.f32 %v236, %v261
      %v287 = vadd.f32 %v237, %v262
      %v288 = vadd.f32 %v238, %v263
      %v289 = vrsqrt.pop %v264
      %v290 = vmul.f32 %v264, %v289
      %vm291 = vcmp.eq.f32.partialorder %v264, inf
      %v292 = vsel %vm291, %v264, %v290
      %vm293 = vcmp.eq.f32.partialorder %v264, 0.0
      %v294 = vand.u32 %v264, 2147483648
      %v295 = vsel %vm293, %v294, %v292
      %v296 = vrsqrt.pop %v265
      %v297 = vmul.f32 %v265, %v296
      %vm298 = vcmp.eq.f32.partialorder %v265, inf
      %v299 = vsel %vm298, %v265, %v297
      %vm300 = vcmp.eq.f32.partialorder %v265, 0.0
      %v301 = vand.u32 %v265, 2147483648
      %v302 = vsel %vm300, %v301, %v299
      %v303 = vrsqrt.pop %v266
      %v304 = vmul.f32 %v266, %v303
      %vm305 = vcmp.eq.f32.partialorder %v266, inf
      %v306 = vsel %vm305, %v266, %v304
      %vm307 = vcmp.eq.f32.partialorder %v266, 0.0
      %v308 = vand.u32 %v266, 2147483648
      %v309 = vsel %vm307, %v308, %v306
      %v310 = vrsqrt.pop %v267
      %v311 = vmul.f32 %v267, %v310
      %vm312 = vcmp.eq.f32.partialorder %v267, inf
      %v313 = vsel %vm312, %v267, %v311
      %vm314 = vcmp.eq.f32.partialorder %v267, 0.0
      %v315 = vand.u32 %v267, 2147483648
      %v316 = vsel %vm314, %v315, %v313
      %v317 = vrsqrt.pop %v268
      %v318 = vmul.f32 %v268, %v317
      %vm319 = vcmp.eq.f32.partialorder %v268, inf
      %v320 = vsel %vm319, %v268, %v318
      %vm321 = vcmp.eq.f32.partialorder %v268, 0.0
      %v322 = vand.u32 %v268, 2147483648
      %v323 = vsel %vm321, %v322, %v320
      %v324 = vrsqrt.pop %v269
      %v325 = vmul.f32 %v269, %v324
      %vm326 = vcmp.eq.f32.partialorder %v269, inf
      %v327 = vsel %vm326, %v269, %v325
      %vm328 = vcmp.eq.f32.partialorder %v269, 0.0
      %v329 = vand.u32 %v269, 2147483648
      %v330 = vsel %vm328, %v329, %v327
      %v331 = vrsqrt.pop %v270
      %v332 = vmul.f32 %v270, %v331
      %vm333 = vcmp.eq.f32.partialorder %v270, inf
      %v334 = vsel %vm333, %v270, %v332
      %vm335 = vcmp.eq.f32.partialorder %v270, 0.0
      %v336 = vand.u32 %v270, 2147483648
      %v337 = vsel %vm335, %v336, %v334
      %v338 = vrsqrt.pop %v271
      %v339 = vmul.f32 %v271, %v338
      %vm340 = vcmp.eq.f32.partialorder %v271, inf
      %v341 = vsel %vm340, %v271, %v339
      %vm342 = vcmp.eq.f32.partialorder %v271, 0.0
      %v343 = vand.u32 %v271, 2147483648
      %v344 = vsel %vm342, %v343, %v341
      %v345 = vrsqrt.pop %v272
      %v346 = vmul.f32 %v272, %v345
      %vm347 = vcmp.eq.f32.partialorder %v272, inf
      %v348 = vsel %vm347, %v272, %v346
      %vm349 = vcmp.eq.f32.partialorder %v272, 0.0
      %v350 = vand.u32 %v272, 2147483648
      %v351 = vsel %vm349, %v350, %v348
      %v352 = vrsqrt.pop %v273
      %v353 = vmul.f32 %v273, %v352
      %vm354 = vcmp.eq.f32.partialorder %v273, inf
      %v355 = vsel %vm354, %v273, %v353
      %vm356 = vcmp.eq.f32.partialorder %v273, 0.0
      %v357 = vand.u32 %v273, 2147483648
      %v358 = vsel %vm356, %v357, %v355
      %v359 = vrsqrt.pop %v274
      %v360 = vmul.f32 %v274, %v359
      %vm361 = vcmp.eq.f32.partialorder %v274, inf
      %v362 = vsel %vm361, %v274, %v360
      %vm363 = vcmp.eq.f32.partialorder %v274, 0.0
      %v364 = vand.u32 %v274, 2147483648
      %v365 = vsel %vm363, %v364, %v362
      %v366 = vrsqrt.pop %v275
      %v367 = vmul.f32 %v275, %v366
      %vm368 = vcmp.eq.f32.partialorder %v275, inf
      %v369 = vsel %vm368, %v275, %v367
      %vm370 = vcmp.eq.f32.partialorder %v275, 0.0
      %v371 = vand.u32 %v275, 2147483648
      %v372 = vsel %vm370, %v371, %v369
      %v373 = vrsqrt.pop %v276
      %v374 = vmul.f32 %v276, %v373
      %vm375 = vcmp.eq.f32.partialorder %v276, inf
      %v376 = vsel %vm375, %v276, %v374
      %vm377 = vcmp.eq.f32.partialorder %v276, 0.0
      %v378 = vand.u32 %v276, 2147483648
      %v379 = vsel %vm377, %v378, %v376
      %v380 = vrsqrt.pop %v277
      %v381 = vmul.f32 %v277, %v380
      %vm382 = vcmp.eq.f32.partialorder %v277, inf
      %v383 = vsel %vm382, %v277, %v381
      %vm384 = vcmp.eq.f32.partialorder %v277, 0.0
      %v385 = vand.u32 %v277, 2147483648
      %v386 = vsel %vm384, %v385, %v383
      %v387 = vrsqrt.pop %v278
      %v388 = vmul.f32 %v278, %v387
      %vm389 = vcmp.eq.f32.partialorder %v278, inf
      %v390 = vsel %vm389, %v278, %v388
      %vm391 = vcmp.eq.f32.partialorder %v278, 0.0
      %v392 = vand.u32 %v278, 2147483648
      %v393 = vsel %vm391, %v392, %v390
      %v394 = vrsqrt.pop %v279
      %v395 = vmul.f32 %v279, %v394
      %vm396 = vcmp.eq.f32.partialorder %v279, inf
      %v397 = vsel %vm396, %v279, %v395
      %vm398 = vcmp.eq.f32.partialorder %v279, 0.0
      %v399 = vand.u32 %v279, 2147483648
      %v400 = vsel %vm398, %v399, %v397
      %v401 = vrsqrt.pop %v280
      %v402 = vmul.f32 %v280, %v401
      %vm403 = vcmp.eq.f32.partialorder %v280, inf
      %v404 = vsel %vm403, %v280, %v402
      %vm405 = vcmp.eq.f32.partialorder %v280, 0.0
      %v406 = vand.u32 %v280, 2147483648
      %v407 = vsel %vm405, %v406, %v404
      %v408 = vrsqrt.pop %v281
      %v409 = vmul.f32 %v281, %v408
      %vm410 = vcmp.eq.f32.partialorder %v281, inf
      %v411 = vsel %vm410, %v281, %v409
      %vm412 = vcmp.eq.f32.partialorder %v281, 0.0
      %v413 = vand.u32 %v281, 2147483648
      %v414 = vsel %vm412, %v413, %v411
      %v415 = vrsqrt.pop %v282
      %v416 = vmul.f32 %v282, %v415
      %vm417 = vcmp.eq.f32.partialorder %v282, inf
      %v418 = vsel %vm417, %v282, %v416
      %vm419 = vcmp.eq.f32.partialorder %v282, 0.0
      %v420 = vand.u32 %v282, 2147483648
      %v421 = vsel %vm419, %v420, %v418
      %v422 = vrsqrt.pop %v283
      %v423 = vmul.f32 %v283, %v422
      %vm424 = vcmp.eq.f32.partialorder %v283, inf
      %v425 = vsel %vm424, %v283, %v423
      %vm426 = vcmp.eq.f32.partialorder %v283, 0.0
      %v427 = vand.u32 %v283, 2147483648
      %v428 = vsel %vm426, %v427, %v425
      %v429 = vrsqrt.pop %v284
      %v430 = vmul.f32 %v284, %v429
      %vm431 = vcmp.eq.f32.partialorder %v284, inf
      %v432 = vsel %vm431, %v284, %v430
      %vm433 = vcmp.eq.f32.partialorder %v284, 0.0
      %v434 = vand.u32 %v284, 2147483648
      %v435 = vsel %vm433, %v434, %v432
      %v436 = vrsqrt.pop %v285
      %v437 = vmul.f32 %v285, %v436
      %vm438 = vcmp.eq.f32.partialorder %v285, inf
      %v439 = vsel %vm438, %v285, %v437
      %vm440 = vcmp.eq.f32.partialorder %v285, 0.0
      %v441 = vand.u32 %v285, 2147483648
      %v442 = vsel %vm440, %v441, %v439
      %v443 = vrsqrt.pop %v286
      %v444 = vmul.f32 %v286, %v443
      %vm445 = vcmp.eq.f32.partialorder %v286, inf
      %v446 = vsel %vm445, %v286, %v444
      %vm447 = vcmp.eq.f32.partialorder %v286, 0.0
      %v448 = vand.u32 %v286, 2147483648
      %v449 = vsel %vm447, %v448, %v446
      %v450 = vrsqrt.pop %v287
      %v451 = vmul.f32 %v287, %v450
      %vm452 = vcmp.eq.f32.partialorder %v287, inf
      %v453 = vsel %vm452, %v287, %v451
      %vm454 = vcmp.eq.f32.partialorder %v287, 0.0
      %v455 = vand.u32 %v287, 2147483648
      %v456 = vsel %vm454, %v455, %v453
      %v457 = vrsqrt.pop %v288
      %v458 = vmul.f32 %v288, %v457
      %vm459 = vcmp.eq.f32.partialorder %v288, inf
      %v460 = vsel %vm459, %v288, %v458
      %vm461 = vcmp.eq.f32.partialorder %v288, 0.0
      %v462 = vand.u32 %v288, 2147483648
      %v463 = vsel %vm461, %v462, %v460
      %464 = vst [vmem:[%s163] sm:$0xff] %v295
      %465 = vst [vmem:[%s163 + $0x8] sm:$0xff] %v302
      %466 = vst [vmem:[%s163 + $0x10] sm:$0xff] %v309
      %467 = vst [vmem:[%s163 + $0x18] sm:$0xff] %v316
      %468 = vst [vmem:[%s163 + $0x20] sm:$0xff] %v323
      %469 = vst [vmem:[%s163 + $0x28] sm:$0xff] %v330
      %470 = vst [vmem:[%s163 + $0x30] sm:$0xff] %v337
      %471 = vst [vmem:[%s163 + $0x38] sm:$0xff] %v344
      %472 = vst [vmem:[%s163 + $0x40] sm:$0xff] %v351
      %473 = vst [vmem:[%s163 + $0x48] sm:$0xff] %v358
      %474 = vst [vmem:[%s163 + $0x50] sm:$0xff] %v365
      %475 = vst [vmem:[%s163 + $0x58] sm:$0xff] %v372
      %476 = vst [vmem:[%s163 + $0x60] sm:$0xff] %v379
      %477 = vst [vmem:[%s163 + $0x68] sm:$0xff] %v386
      %478 = vst [vmem:[%s163 + $0x70] sm:$0xff] %v393
      %479 = vst [vmem:[%s163 + $0x78] sm:$0xff] %v400
      %480 = vst [vmem:[%s163 + $0x80] sm:$0xff] %v407
      %481 = vst [vmem:[%s163 + $0x88] sm:$0xff] %v414
      %482 = vst [vmem:[%s163 + $0x90] sm:$0xff] %v421
      %483 = vst [vmem:[%s163 + $0x98] sm:$0xff] %v428
      %484 = vst [vmem:[%s163 + $0xa0] sm:$0xff] %v435
      %485 = vst [vmem:[%s163 + $0xa8] sm:$0xff] %v442
      %486 = vst [vmem:[%s163 + $0xb0] sm:$0xff] %v449
      %487 = vst [vmem:[%s163 + $0xb8] sm:$0xff] %v456
      %488 = vst [vmem:[%s163 + $0xc0] sm:$0xff] %v463
      %p489 = scmp.lt.s32.totalorder %s13, 2
      %s490 = scalar_select %p489, %s13, 2
      %s491 = smul.addr %s490, 25
      %s492 = smul.addr %s491, 8
      %s493 = scalar_lea.vmem %s2, %s492
      // Predicated region
      $region29: #{_lambda_.3} parent=27 // pred_check
        %p494 = pneg %p83
      $region30: #{_lambda_.3} parent=27 // pred_check_branch
        %496 = sbr.rel (%p494) target = $region32
      $region31: #{_lambda_.3} parent=27 // pred_region
        _
      $region32: #{_lambda_.3} parent=27 // pred_fallthru
        _
    $region28: #{_lambda_.3} parent=5 // pred_fallthru
      _
    %p497 = scmp.le.s32.totalorder 2, %s8
    // Predicated region
    $region33: #{_lambda_.3} parent=5 // pred_check
      %p498 = pneg %p497
    $region34: #{_lambda_.3} parent=5 // pred_check_branch
      %500 = sbr.rel (%p498) target = $region36
    $region35: #{_lambda_.3} parent=5 // pred_region
      %s501 = ssub.s32 %s8, 2
      // Predicated region
      $region37: #{_lambda_.3} parent=35 // pred_check
        %p502 = pneg %p89
      $region38: #{_lambda_.3} parent=35 // pred_check_branch
        %504 = sbr.rel (%p502) target = $region40
      $region39: #{_lambda_.3} parent=35 // pred_region
        %p505 = scmp.lt.s32.totalorder %s14, 2
        %s506 = scalar_select %p505, %s14, 2
        %s507 = smul.addr %s506, 25
        %s508 = smul.addr %s507, 8
        %s509 = scalar_lea.vmem %s2, %s508
      $region40: #{_lambda_.3} parent=35 // pred_fallthru
        _
    $region36: #{_lambda_.3} parent=5 // pred_fallthru
      _
  $region6: #{_lambda_.3} parent=0 // loop_footer
    %s12 = sadd.s32 1, %s8
  $region7: #{_lambda_.3} parent=0 // loop_footer_branch
    %7 = sbr.rel target = $region3
  $region8: #{_lambda_.3} parent=0 // loop_exit
    _

// kernel: _lambda_.4
$region0: #{_lambda_.4}
  #allocation0 [shape = 'u32[]', space=smem, size = 0x4, offset = 0x4, fixed_abs, tag = 'smem constant byte address 0x4 - core index']
  #allocation1 [shape = 'u32[144,128]{1,0:T(1,128)}', space=vmem, size = 0x12000, scoped, tag = 'internal scratch']
  %s0 = inlined_call_operand.vmem [shape: f32[192,3200], index: 0, kind: input, shape index: {}]
  %s1 = inlined_call_operand.vmem [shape: f32[192,3200], index: 1, kind: input, shape index: {}]
  %s2 = inlined_call_operand.vmem [shape: f32[192,3200], index: 2, kind: output, shape index: {}]
  %s3 = sld [smem:[#allocation0]]
  $region41: #{_lambda_.4} parent=0
    _
  %s5 = ssub.s32 1, %s3
  %s6 = scalar_select 0, %s5, %s3
  loop: start=0, step=1, limit=4
  $region2: #{_lambda_.4} parent=0 // loop_pre_header
    _
  $region3: #{_lambda_.4} parent=0 // loop_header
    %s8 = sphi 0, %s12
    %p9 = scmp.ge.s32.totalorder %s8, 4
    %s18 = sphi 0, %s20
    %s21 = sphi 0, %s18
    %s22 = sphi 0, %s21
    %s38 = sphi 0, %s22
    %s44 = sphi 0, %s46
    %s47 = sphi 0, %s44
    %s48 = sphi 0, %s47
    %s64 = sphi 0, %s48
    %s70 = sphi 0, %s72
    %s73 = sphi 0, %s70
    %s74 = sphi 0, %s73
    %s90 = sphi 0, %s74
  $region4: #{_lambda_.4} parent=0 // loop_header_branch
    %11 = sbr.rel (%p9) target = $region8
  $region5: #{_lambda_.4} parent=0 // loop_body
    %s13 = ssub.s32 %s8, 1
    %s14 = ssub.s32 %s8, 2
    %s15 = sadd.s32 %s8, 1
    %s16 = ssub.s32 %s8, %s15
    %p17 = scmp.eq.s32.totalorder %s16, 0
    %s19 = sadd.s32 %s18, 1
    %s20 = scalar_select %p17, %s18, %s19
    %p23 = pneg %p17
    %p24 = scmp.eq.s32.totalorder %s8, 1
    %p25 = por %p23, %p24
    %p26 = scmp.ne.s32.totalorder %s18, %s21
    %p27 = scmp.eq.s32.totalorder %s8, 0
    %p28 = por %p26, %p27
    %p29 = scmp.ne.s32.totalorder %s18, %s21
    %p30 = scmp.eq.s32.totalorder %s13, 1
    %p31 = por %p29, %p30
    %p32 = scmp.ne.s32.totalorder %s21, %s22
    %p33 = scmp.eq.s32.totalorder %s13, 0
    %p34 = por %p32, %p33
    %p35 = scmp.ne.s32.totalorder %s21, %s22
    %p36 = scmp.eq.s32.totalorder %s14, 1
    %p37 = por %p35, %p36
    %p39 = scmp.ne.s32.totalorder %s22, %s38
    %p40 = scmp.eq.s32.totalorder %s14, 0
    %p41 = por %p39, %p40
    %s42 = ssub.s32 %s8, %s15
    %p43 = scmp.eq.s32.totalorder %s42, 0
    %s45 = sadd.s32 %s44, 1
    %s46 = scalar_select %p43, %s44, %s45
    %p49 = pneg %p43
    %p50 = scmp.eq.s32.totalorder %s8, 1
    %p51 = por %p49, %p50
    %p52 = scmp.ne.s32.totalorder %s44, %s47
    %p53 = scmp.eq.s32.totalorder %s8, 0
    %p54 = por %p52, %p53
    %p55 = scmp.ne.s32.totalorder %s44, %s47
    %p56 = scmp.eq.s32.totalorder %s13, 1
    %p57 = por %p55, %p56
    %p58 = scmp.ne.s32.totalorder %s47, %s48
    %p59 = scmp.eq.s32.totalorder %s13, 0
    %p60 = por %p58, %p59
    %p61 = scmp.ne.s32.totalorder %s47, %s48
    %p62 = scmp.eq.s32.totalorder %s14, 1
    %p63 = por %p61, %p62
    %p65 = scmp.ne.s32.totalorder %s48, %s64
    %p66 = scmp.eq.s32.totalorder %s14, 0
    %p67 = por %p65, %p66
    %s68 = ssub.s32 %s8, %s15
    %p69 = scmp.eq.s32.totalorder %s68, 0
    %s71 = sadd.s32 %s70, 1
    %s72 = scalar_select %p69, %s70, %s71
    %p75 = pneg %p69
    %p76 = scmp.eq.s32.totalorder %s8, 1
    %p77 = por %p75, %p76
    %p78 = scmp.ne.s32.totalorder %s70, %s73
    %p79 = scmp.eq.s32.totalorder %s8, 0
    %p80 = por %p78, %p79
    %p81 = scmp.ne.s32.totalorder %s70, %s73
    %p82 = scmp.eq.s32.totalorder %s13, 1
    %p83 = por %p81, %p82
    %p84 = scmp.ne.s32.totalorder %s73, %s74
    %p85 = scmp.eq.s32.totalorder %s13, 0
    %p86 = por %p84, %p85
    %p87 = scmp.ne.s32.totalorder %s73, %s74
    %p88 = scmp.eq.s32.totalorder %s14, 1
    %p89 = por %p87, %p88
    %p91 = scmp.ne.s32.totalorder %s74, %s90
    %p92 = scmp.eq.s32.totalorder %s14, 0
    %p93 = por %p91, %p92
    %p94 = scmp.le.s32.totalorder 1, %s8
    %p95 = scmp.lt.s32.totalorder %s8, 3
    %p96 = pnand %p94, %p95
    %p97 = pneg %p96
    // Predicated region
    $region9: #{_lambda_.4} parent=5 // pred_check
      _
    $region10: #{_lambda_.4} parent=5 // pred_check_branch
      %99 = sbr.rel (%p96) target = $region12
    $region11: #{_lambda_.4} parent=5 // pred_region
      %s100 = ssub.s32 %s8, 1
    $region12: #{_lambda_.4} parent=5 // pred_fallthru
      _
    %p101 = scmp.lt.s32.totalorder %s8, 2
    // Predicated region
    $region13: #{_lambda_.4} parent=5 // pred_check
      %p102 = pneg %p101
    $region14: #{_lambda_.4} parent=5 // pred_check_branch
      %104 = sbr.rel (%p102) target = $region16
    $region15: #{_lambda_.4} parent=5 // pred_region
      // Predicated region
      $region17: #{_lambda_.4} parent=15 // pred_check
        %p105 = pneg %p28
      $region18: #{_lambda_.4} parent=15 // pred_check_branch
        %107 = sbr.rel (%p105) target = $region20
      $region19: #{_lambda_.4} parent=15 // pred_region
        %s108 = smul.u32 12, %s8
        %p109 = scmp.lt.s32.totalorder %s108, 23
        %s110 = scalar_select %p109, %s108, 23
        %s111 = smul.addr %s110, 25
        %s112 = smul.addr %s111, 8
        %s113 = scalar_lea.vmem %s0, %s112
        %s114 = smul.u32 12, %s8
      $region20: #{_lambda_.4} parent=15 // pred_fallthru
        _
      // Predicated region
      $region21: #{_lambda_.4} parent=15 // pred_check
        %p115 = pneg %p54
      $region22: #{_lambda_.4} parent=15 // pred_check_branch
        %117 = sbr.rel (%p115) target = $region24
      $region23: #{_lambda_.4} parent=15 // pred_region
        %s118 = smul.u32 12, %s8
        %p119 = scmp.lt.s32.totalorder %s118, 23
        %s120 = scalar_select %p119, %s118, 23
        %s121 = smul.addr %s120, 25
        %s122 = smul.addr %s121, 8
        %s123 = scalar_lea.vmem %s1, %s122
        %s124 = smul.u32 12, %s8
      $region24: #{_lambda_.4} parent=15 // pred_fallthru
        _
    $region16: #{_lambda_.4} parent=5 // pred_fallthru
      _
    %p125 = scmp.le.s32.totalorder 1, %s8
    %p126 = scmp.lt.s32.totalorder %s8, 3
    %p127 = pnand %p125, %p126
    %p128 = pneg %p127
    // Predicated region
    $region25: #{_lambda_.4} parent=5 // pred_check
      _
    $region26: #{_lambda_.4} parent=5 // pred_check_branch
      %130 = sbr.rel (%p127) target = $region28
    $region27: #{_lambda_.4} parent=5 // pred_region
      %s131 = ssub.s32 %s8, 1
      %s132 = smul.u32 12, %s13
      %p133 = scmp.lt.s32.totalorder %s132, 23
      %s134 = scalar_select %p133, %s132, 23
      %s135 = smul.addr %s134, 25
      %s136 = smul.addr %s135, 8
      %s137 = scalar_lea.vmem %s0, %s136
      %p138 = pneg %p34
      %p139 = pneg %p31
      %s140 = smul.u32 12, %s13
      %p141 = scmp.lt.s32.totalorder %s140, 23
      %s142 = scalar_select %p141, %s140, 23
      %s143 = smul.addr %s142, 25
      %s144 = smul.addr %s143, 8
      %s145 = scalar_lea.vmem %s1, %s144
      %p146 = pneg %p60
      %p147 = pneg %p57
      %p148 = pneg %p86
      %p149 = pneg %p83
      %s150 = smul.u32 12, %s13
      %p151 = scmp.lt.s32.totalorder %s150, 23
      %s152 = scalar_select %p151, %s150, 23
      %s153 = smul.addr %s152, 25
      %s154 = smul.addr %s153, 8
      %s155 = scalar_lea.vmem %s2, %s154
      %s156 = smul.u32 12, %s13
      %p157 = scmp.lt.s32.totalorder %s156, 23
      %s158 = scalar_select %p157, %s156, 23
      %s159 = smul.addr %s158, 25
      %s160 = smul.addr %s159, 8
      %s161 = scalar_lea.vmem %s0, %s160
      %s162 = smul.u32 12, %s13
      %s163 = smul.u32 12, %s13
      %p164 = scmp.lt.s32.totalorder %s163, 23
      %s165 = scalar_select %p164, %s163, 23
      %s166 = smul.addr %s165, 25
      %s167 = smul.addr %s166, 8
      %s168 = scalar_lea.vmem %s1, %s167
      %s169 = smul.u32 12, %s13
      %s170 = smul.u32 12, %s13
      %p171 = scmp.lt.s32.totalorder %s170, 23
      %s172 = scalar_select %p171, %s170, 23
      %s173 = smul.addr %s172, 25
      %s174 = smul.addr %s173, 8
      %s175 = scalar_lea.vmem %s2, %s174
      %s176 = smul.u32 12, %s13
      %v177 = vld [vmem:[%s161] sm:$0xff]
      %v178 = vld [vmem:[%s161 + $0x8] sm:$0xff]
      %v179 = vld [vmem:[%s161 + $0x10] sm:$0xff]
      %v180 = vld [vmem:[%s161 + $0x18] sm:$0xff]
      %v181 = vld [vmem:[%s161 + $0x20] sm:$0xff]
      %v182 = vld [vmem:[%s161 + $0x28] sm:$0xff]
      %v183 = vld [vmem:[%s161 + $0x30] sm:$0xff]
      %v184 = vld [vmem:[%s161 + $0x38] sm:$0xff]
      %v185 = vld [vmem:[%s161 + $0x40] sm:$0xff]
      %v186 = vld [vmem:[%s161 + $0x48] sm:$0xff]
      %v187 = vld [vmem:[%s161 + $0x50] sm:$0xff]
      %v188 = vld [vmem:[%s161 + $0x58] sm:$0xff]
      %v189 = vld [vmem:[%s161 + $0x60] sm:$0xff]
      %v190 = vld [vmem:[%s161 + $0x68] sm:$0xff]
      %v191 = vld [vmem:[%s161 + $0x70] sm:$0xff]
      %v192 = vld [vmem:[%s161 + $0x78] sm:$0xff]
      %v193 = vld [vmem:[%s161 + $0x80] sm:$0xff]
      %v194 = vld [vmem:[%s161 + $0x88] sm:$0xff]
      %v195 = vld [vmem:[%s161 + $0x90] sm:$0xff]
      %v196 = vld [vmem:[%s161 + $0x98] sm:$0xff]
      %v197 = vld [vmem:[%s161 + $0xa0] sm:$0xff]
      %v198 = vld [vmem:[%s161 + $0xa8] sm:$0xff]
      %v199 = vld [vmem:[%s161 + $0xb0] sm:$0xff]
      %v200 = vld [vmem:[%s161 + $0xb8] sm:$0xff]
      %v201 = vld [vmem:[%s161 + $0xc0] sm:$0xff]
      %v202 = vld [vmem:[%s161 + $0xc8] sm:$0xff]
      %v203 = vld [vmem:[%s161 + $0xd0] sm:$0xff]
      %v204 = vld [vmem:[%s161 + $0xd8] sm:$0xff]
      %v205 = vld [vmem:[%s161 + $0xe0] sm:$0xff]
      %v206 = vld [vmem:[%s161 + $0xe8] sm:$0xff]
      %v207 = vld [vmem:[%s161 + $0xf0] sm:$0xff]
      %v208 = vld [vmem:[%s161 + $0xf8] sm:$0xff]
      %v209 = vld [vmem:[%s161 + $0x100] sm:$0xff]
      %v210 = vld [vmem:[%s161 + $0x108] sm:$0xff]
      %v211 = vld [vmem:[%s161 + $0x110] sm:$0xff]
      %v212 = vld [vmem:[%s161 + $0x118] sm:$0xff]
      %v213 = vld [vmem:[%s161 + $0x120] sm:$0xff]
      %v214 = vld [vmem:[%s161 + $0x128] sm:$0xff]
      %v215 = vld [vmem:[%s161 + $0x130] sm:$0xff]
      %v216 = vld [vmem:[%s161 + $0x138] sm:$0xff]
      %v217 = vld [vmem:[%s161 + $0x140] sm:$0xff]
      %v218 = vld [vmem:[%s161 + $0x148] sm:$0xff]
      %v219 = vld [vmem:[%s161 + $0x150] sm:$0xff]
      %v220 = vld [vmem:[%s161 + $0x158] sm:$0xff]
      %v221 = vld [vmem:[%s161 + $0x160] sm:$0xff]
      %v222 = vld [vmem:[%s161 + $0x168] sm:$0xff]
      %v223 = vld [vmem:[%s161 + $0x170] sm:$0xff]
      %v224 = vld [vmem:[%s161 + $0x178] sm:$0xff]
      %v225 = vld [vmem:[%s161 + $0x180] sm:$0xff]
      %v226 = vld [vmem:[%s161 + $0x188] sm:$0xff]
      %v227 = vld [vmem:[%s161 + $0x190] sm:$0xff]
      %v228 = vld [vmem:[%s161 + $0x198] sm:$0xff]
      %v229 = vld [vmem:[%s161 + $0x1a0] sm:$0xff]
      %v230 = vld [vmem:[%s161 + $0x1a8] sm:$0xff]
      %v231 = vld [vmem:[%s161 + $0x1b0] sm:$0xff]
      %v232 = vld [vmem:[%s161 + $0x1b8] sm:$0xff]
      %v233 = vld [vmem:[%s161 + $0x1c0] sm:$0xff]
      %v234 = vld [vmem:[%s161 + $0x1c8] sm:$0xff]
      %v235 = vld [vmem:[%s161 + $0x1d0] sm:$0xff]
      %v236 = vld [vmem:[%s161 + $0x1d8] sm:$0xff]
      %v237 = vld [vmem:[%s161 + $0x1e0] sm:$0xff]
      %v238 = vld [vmem:[%s161 + $0x1e8] sm:$0xff]
      %v239 = vld [vmem:[%s161 + $0x1f0] sm:$0xff]
      %v240 = vld [vmem:[%s161 + $0x1f8] sm:$0xff]
      %v241 = vld [vmem:[%s161 + $0x200] sm:$0xff]
      %v242 = vld [vmem:[%s161 + $0x208] sm:$0xff]
      %v243 = vld [vmem:[%s161 + $0x210] sm:$0xff]
      %v244 = vld [vmem:[%s161 + $0x218] sm:$0xff]
      %v245 = vld [vmem:[%s161 + $0x220] sm:$0xff]
      %v246 = vld [vmem:[%s161 + $0x228] sm:$0xff]
      %v247 = vld [vmem:[%s161 + $0x230] sm:$0xff]
      %v248 = vld [vmem:[%s161 + $0x238] sm:$0xff]
      %v249 = vld [vmem:[%s161 + $0x240] sm:$0xff]
      %v250 = vld [vmem:[%s161 + $0x248] sm:$0xff]
      %v251 = vld [vmem:[%s161 + $0x250] sm:$0xff]
      %v252 = vld [vmem:[%s161 + $0x258] sm:$0xff]
      %v253 = vld [vmem:[%s161 + $0x260] sm:$0xff]
      %v254 = vld [vmem:[%s161 + $0x268] sm:$0xff]
      %v255 = vld [vmem:[%s161 + $0x270] sm:$0xff]
      %v256 = vld [vmem:[%s161 + $0x278] sm:$0xff]
      %v257 = vld [vmem:[%s161 + $0x280] sm:$0xff]
      %v258 = vld [vmem:[%s161 + $0x288] sm:$0xff]
      %v259 = vld [vmem:[%s161 + $0x290] sm:$0xff]
      %v260 = vld [vmem:[%s161 + $0x298] sm:$0xff]
      %v261 = vld [vmem:[%s161 + $0x2a0] sm:$0xff]
      %v262 = vld [vmem:[%s161 + $0x2a8] sm:$0xff]
      %v263 = vld [vmem:[%s161 + $0x2b0] sm:$0xff]
      %v264 = vld [vmem:[%s161 + $0x2b8] sm:$0xff]
      %v265 = vld [vmem:[%s161 + $0x2c0] sm:$0xff]
      %v266 = vld [vmem:[%s161 + $0x2c8] sm:$0xff]
      %v267 = vld [vmem:[%s161 + $0x2d0] sm:$0xff]
      %v268 = vld [vmem:[%s161 + $0x2d8] sm:$0xff]
      %v269 = vld [vmem:[%s161 + $0x2e0] sm:$0xff]
      %v270 = vld [vmem:[%s161 + $0x2e8] sm:$0xff]
      %v271 = vld [vmem:[%s161 + $0x2f0] sm:$0xff]
      %v272 = vld [vmem:[%s161 + $0x2f8] sm:$0xff]
      %v273 = vld [vmem:[%s161 + $0x300] sm:$0xff]
      %v274 = vld [vmem:[%s161 + $0x308] sm:$0xff]
      %v275 = vld [vmem:[%s161 + $0x310] sm:$0xff]
      %v276 = vld [vmem:[%s161 + $0x318] sm:$0xff]
      %v277 = vld [vmem:[%s161 + $0x320] sm:$0xff]
      %v278 = vld [vmem:[%s161 + $0x328] sm:$0xff]
      %v279 = vld [vmem:[%s161 + $0x330] sm:$0xff]
      %v280 = vld [vmem:[%s161 + $0x338] sm:$0xff]
      %v281 = vld [vmem:[%s161 + $0x340] sm:$0xff]
      %v282 = vld [vmem:[%s161 + $0x348] sm:$0xff]
      %v283 = vld [vmem:[%s161 + $0x350] sm:$0xff]
      %v284 = vld [vmem:[%s161 + $0x358] sm:$0xff]
      %v285 = vld [vmem:[%s161 + $0x360] sm:$0xff]
      %v286 = vld [vmem:[%s161 + $0x368] sm:$0xff]
      %v287 = vld [vmem:[%s161 + $0x370] sm:$0xff]
      %v288 = vld [vmem:[%s161 + $0x378] sm:$0xff]
      %v289 = vld [vmem:[%s161 + $0x380] sm:$0xff]
      %v290 = vld [vmem:[%s161 + $0x388] sm:$0xff]
      %v291 = vld [vmem:[%s161 + $0x390] sm:$0xff]
      %v292 = vld [vmem:[%s161 + $0x398] sm:$0xff]
      %v293 = vld [vmem:[%s161 + $0x3a0] sm:$0xff]
      %v294 = vld [vmem:[%s161 + $0x3a8] sm:$0xff]
      %v295 = vld [vmem:[%s161 + $0x3b0] sm:$0xff]
      %v296 = vld [vmem:[%s161 + $0x3b8] sm:$0xff]
      %v297 = vld [vmem:[%s161 + $0x3c0] sm:$0xff]
      %v298 = vld [vmem:[%s161 + $0x3c8] sm:$0xff]
      %v299 = vld [vmem:[%s161 + $0x3d0] sm:$0xff]
      %v300 = vld [vmem:[%s161 + $0x3d8] sm:$0xff]
      %v301 = vld [vmem:[%s161 + $0x3e0] sm:$0xff]
      %v302 = vld [vmem:[%s161 + $0x3e8] sm:$0xff]
      %v303 = vld [vmem:[%s161 + $0x3f0] sm:$0xff]
      %v304 = vld [vmem:[%s161 + $0x3f8] sm:$0xff]
      %v305 = vld [vmem:[%s161 + $0x400] sm:$0xff]
      %v306 = vld [vmem:[%s161 + $0x408] sm:$0xff]
      %v307 = vld [vmem:[%s161 + $0x410] sm:$0xff]
      %v308 = vld [vmem:[%s161 + $0x418] sm:$0xff]
      %v309 = vld [vmem:[%s161 + $0x420] sm:$0xff]
      %v310 = vld [vmem:[%s161 + $0x428] sm:$0xff]
      %v311 = vld [vmem:[%s161 + $0x430] sm:$0xff]
      %v312 = vld [vmem:[%s161 + $0x438] sm:$0xff]
      %v313 = vld [vmem:[%s161 + $0x440] sm:$0xff]
      %v314 = vld [vmem:[%s161 + $0x448] sm:$0xff]
      %v315 = vld [vmem:[%s161 + $0x450] sm:$0xff]
      %v316 = vld [vmem:[%s161 + $0x458] sm:$0xff]
      %v317 = vld [vmem:[%s161 + $0x460] sm:$0xff]
      %v318 = vld [vmem:[%s161 + $0x468] sm:$0xff]
      %v319 = vld [vmem:[%s161 + $0x470] sm:$0xff]
      %v320 = vld [vmem:[%s161 + $0x478] sm:$0xff]
      %v321 = vld [vmem:[%s161 + $0x480] sm:$0xff]
      %v322 = vld [vmem:[%s161 + $0x488] sm:$0xff]
      %v323 = vld [vmem:[%s161 + $0x490] sm:$0xff]
      %v324 = vld [vmem:[%s161 + $0x498] sm:$0xff]
      %v325 = vld [vmem:[%s161 + $0x4a0] sm:$0xff]
      %v326 = vld [vmem:[%s161 + $0x4a8] sm:$0xff]
      %v327 = vld [vmem:[%s161 + $0x4b0] sm:$0xff]
      %v328 = vld [vmem:[%s161 + $0x4b8] sm:$0xff]
      %v329 = vld [vmem:[%s161 + $0x4c0] sm:$0xff]
      %v330 = vld [vmem:[%s161 + $0x4c8] sm:$0xff]
      %v331 = vld [vmem:[%s161 + $0x4d0] sm:$0xff]
      %v332 = vld [vmem:[%s161 + $0x4d8] sm:$0xff]
      %v333 = vld [vmem:[%s161 + $0x4e0] sm:$0xff]
      %v334 = vld [vmem:[%s161 + $0x4e8] sm:$0xff]
      %v335 = vld [vmem:[%s161 + $0x4f0] sm:$0xff]
      %v336 = vld [vmem:[%s161 + $0x4f8] sm:$0xff]
      %v337 = vld [vmem:[%s161 + $0x500] sm:$0xff]
      %v338 = vld [vmem:[%s161 + $0x508] sm:$0xff]
      %v339 = vld [vmem:[%s161 + $0x510] sm:$0xff]
      %v340 = vld [vmem:[%s161 + $0x518] sm:$0xff]
      %v341 = vld [vmem:[%s161 + $0x520] sm:$0xff]
      %v342 = vld [vmem:[%s161 + $0x528] sm:$0xff]
      %v343 = vld [vmem:[%s161 + $0x530] sm:$0xff]
      %v344 = vld [vmem:[%s161 + $0x538] sm:$0xff]
      %v345 = vld [vmem:[%s161 + $0x540] sm:$0xff]
      %v346 = vld [vmem:[%s161 + $0x548] sm:$0xff]
      %v347 = vld [vmem:[%s161 + $0x550] sm:$0xff]
      %v348 = vld [vmem:[%s161 + $0x558] sm:$0xff]
      %v349 = vld [vmem:[%s161 + $0x560] sm:$0xff]
      %v350 = vld [vmem:[%s161 + $0x568] sm:$0xff]
      %v351 = vld [vmem:[%s161 + $0x570] sm:$0xff]
      %v352 = vld [vmem:[%s161 + $0x578] sm:$0xff]
      %v353 = vld [vmem:[%s161 + $0x580] sm:$0xff]
      %v354 = vld [vmem:[%s161 + $0x588] sm:$0xff]
      %v355 = vld [vmem:[%s161 + $0x590] sm:$0xff]
      %v356 = vld [vmem:[%s161 + $0x598] sm:$0xff]
      %v357 = vld [vmem:[%s161 + $0x5a0] sm:$0xff]
      %v358 = vld [vmem:[%s161 + $0x5a8] sm:$0xff]
      %v359 = vld [vmem:[%s161 + $0x5b0] sm:$0xff]
      %v360 = vld [vmem:[%s161 + $0x5b8] sm:$0xff]
      %v361 = vld [vmem:[%s161 + $0x5c0] sm:$0xff]
      %v362 = vld [vmem:[%s161 + $0x5c8] sm:$0xff]
      %v363 = vld [vmem:[%s161 + $0x5d0] sm:$0xff]
      %v364 = vld [vmem:[%s161 + $0x5d8] sm:$0xff]
      %v365 = vld [vmem:[%s161 + $0x5e0] sm:$0xff]
      %v366 = vld [vmem:[%s161 + $0x5e8] sm:$0xff]
      %v367 = vld [vmem:[%s161 + $0x5f0] sm:$0xff]
      %v368 = vld [vmem:[%s161 + $0x5f8] sm:$0xff]
      %v369 = vld [vmem:[%s161 + $0x600] sm:$0xff]
      %v370 = vld [vmem:[%s161 + $0x608] sm:$0xff]
      %v371 = vld [vmem:[%s161 + $0x610] sm:$0xff]
      %v372 = vld [vmem:[%s161 + $0x618] sm:$0xff]
      %v373 = vld [vmem:[%s161 + $0x620] sm:$0xff]
      %v374 = vld [vmem:[%s161 + $0x628] sm:$0xff]
      %v375 = vld [vmem:[%s161 + $0x630] sm:$0xff]
      %v376 = vld [vmem:[%s161 + $0x638] sm:$0xff]
      %v377 = vld [vmem:[%s161 + $0x640] sm:$0xff]
      %v378 = vld [vmem:[%s161 + $0x648] sm:$0xff]
      %v379 = vld [vmem:[%s161 + $0x650] sm:$0xff]
      %v380 = vld [vmem:[%s161 + $0x658] sm:$0xff]
      %v381 = vld [vmem:[%s161 + $0x660] sm:$0xff]
      %v382 = vld [vmem:[%s161 + $0x668] sm:$0xff]
      %v383 = vld [vmem:[%s161 + $0x670] sm:$0xff]
      %v384 = vld [vmem:[%s161 + $0x678] sm:$0xff]
      %v385 = vld [vmem:[%s161 + $0x680] sm:$0xff]
      %v386 = vld [vmem:[%s161 + $0x688] sm:$0xff]
      %v387 = vld [vmem:[%s161 + $0x690] sm:$0xff]
      %v388 = vld [vmem:[%s161 + $0x698] sm:$0xff]
      %v389 = vld [vmem:[%s161 + $0x6a0] sm:$0xff]
      %v390 = vld [vmem:[%s161 + $0x6a8] sm:$0xff]
      %v391 = vld [vmem:[%s161 + $0x6b0] sm:$0xff]
      %v392 = vld [vmem:[%s161 + $0x6b8] sm:$0xff]
      %v393 = vld [vmem:[%s161 + $0x6c0] sm:$0xff]
      %v394 = vld [vmem:[%s161 + $0x6c8] sm:$0xff]
      %v395 = vld [vmem:[%s161 + $0x6d0] sm:$0xff]
      %v396 = vld [vmem:[%s161 + $0x6d8] sm:$0xff]
      %v397 = vld [vmem:[%s161 + $0x6e0] sm:$0xff]
      %v398 = vld [vmem:[%s161 + $0x6e8] sm:$0xff]
      %v399 = vld [vmem:[%s161 + $0x6f0] sm:$0xff]
      %v400 = vld [vmem:[%s161 + $0x6f8] sm:$0xff]
      %v401 = vld [vmem:[%s161 + $0x700] sm:$0xff]
      %v402 = vld [vmem:[%s161 + $0x708] sm:$0xff]
      %v403 = vld [vmem:[%s161 + $0x710] sm:$0xff]
      %v404 = vld [vmem:[%s161 + $0x718] sm:$0xff]
      %v405 = vld [vmem:[%s161 + $0x720] sm:$0xff]
      %v406 = vld [vmem:[%s161 + $0x728] sm:$0xff]
      %v407 = vld [vmem:[%s161 + $0x730] sm:$0xff]
      %v408 = vld [vmem:[%s161 + $0x738] sm:$0xff]
      %v409 = vld [vmem:[%s161 + $0x740] sm:$0xff]
      %v410 = vld [vmem:[%s161 + $0x748] sm:$0xff]
      %v411 = vld [vmem:[%s161 + $0x750] sm:$0xff]
      %v412 = vld [vmem:[%s161 + $0x758] sm:$0xff]
      %v413 = vld [vmem:[%s161 + $0x760] sm:$0xff]
      %v414 = vld [vmem:[%s161 + $0x768] sm:$0xff]
      %v415 = vld [vmem:[%s161 + $0x770] sm:$0xff]
      %v416 = vld [vmem:[%s161 + $0x778] sm:$0xff]
      %v417 = vld [vmem:[%s161 + $0x780] sm:$0xff]
      %v418 = vld [vmem:[%s161 + $0x788] sm:$0xff]
      %v419 = vld [vmem:[%s161 + $0x790] sm:$0xff]
      %v420 = vld [vmem:[%s161 + $0x798] sm:$0xff]
      %v421 = vld [vmem:[%s161 + $0x7a0] sm:$0xff]
      %v422 = vld [vmem:[%s161 + $0x7a8] sm:$0xff]
      %v423 = vld [vmem:[%s161 + $0x7b0] sm:$0xff]
      %v424 = vld [vmem:[%s161 + $0x7b8] sm:$0xff]
      %v425 = vld [vmem:[%s161 + $0x7c0] sm:$0xff]
      %v426 = vld [vmem:[%s161 + $0x7c8] sm:$0xff]
      %v427 = vld [vmem:[%s161 + $0x7d0] sm:$0xff]
      %v428 = vld [vmem:[%s161 + $0x7d8] sm:$0xff]
      %v429 = vld [vmem:[%s161 + $0x7e0] sm:$0xff]
      %v430 = vld [vmem:[%s161 + $0x7e8] sm:$0xff]
      %v431 = vld [vmem:[%s161 + $0x7f0] sm:$0xff]
      %v432 = vld [vmem:[%s161 + $0x7f8] sm:$0xff]
      %v433 = vld [vmem:[%s161 + $0x800] sm:$0xff]
      %v434 = vld [vmem:[%s161 + $0x808] sm:$0xff]
      %v435 = vld [vmem:[%s161 + $0x810] sm:$0xff]
      %v436 = vld [vmem:[%s161 + $0x818] sm:$0xff]
      %v437 = vld [vmem:[%s161 + $0x820] sm:$0xff]
      %v438 = vld [vmem:[%s161 + $0x828] sm:$0xff]
      %v439 = vld [vmem:[%s161 + $0x830] sm:$0xff]
      %v440 = vld [vmem:[%s161 + $0x838] sm:$0xff]
      %v441 = vld [vmem:[%s161 + $0x840] sm:$0xff]
      %v442 = vld [vmem:[%s161 + $0x848] sm:$0xff]
      %v443 = vld [vmem:[%s161 + $0x850] sm:$0xff]
      %v444 = vld [vmem:[%s161 + $0x858] sm:$0xff]
      %v445 = vld [vmem:[%s161 + $0x860] sm:$0xff]
      %v446 = vld [vmem:[%s161 + $0x868] sm:$0xff]
      %v447 = vld [vmem:[%s161 + $0x870] sm:$0xff]
      %v448 = vld [vmem:[%s161 + $0x878] sm:$0xff]
      %v449 = vld [vmem:[%s161 + $0x880] sm:$0xff]
      %v450 = vld [vmem:[%s161 + $0x888] sm:$0xff]
      %v451 = vld [vmem:[%s161 + $0x890] sm:$0xff]
      %v452 = vld [vmem:[%s161 + $0x898] sm:$0xff]
      %v453 = vld [vmem:[%s161 + $0x8a0] sm:$0xff]
      %v454 = vld [vmem:[%s161 + $0x8a8] sm:$0xff]
      %v455 = vld [vmem:[%s161 + $0x8b0] sm:$0xff]
      %v456 = vld [vmem:[%s161 + $0x8b8] sm:$0xff]
      %v457 = vld [vmem:[%s161 + $0x8c0] sm:$0xff]
      %v458 = vld [vmem:[%s161 + $0x8c8] sm:$0xff]
      %v459 = vld [vmem:[%s161 + $0x8d0] sm:$0xff]
      %v460 = vld [vmem:[%s161 + $0x8d8] sm:$0xff]
      %v461 = vld [vmem:[%s161 + $0x8e0] sm:$0xff]
      %v462 = vld [vmem:[%s161 + $0x8e8] sm:$0xff]
      %v463 = vld [vmem:[%s161 + $0x8f0] sm:$0xff]
      %v464 = vld [vmem:[%s161 + $0x8f8] sm:$0xff]
      %v465 = vld [vmem:[%s161 + $0x900] sm:$0xff]
      %v466 = vld [vmem:[%s161 + $0x908] sm:$0xff]
      %v467 = vld [vmem:[%s161 + $0x910] sm:$0xff]
      %v468 = vld [vmem:[%s161 + $0x918] sm:$0xff]
      %v469 = vld [vmem:[%s161 + $0x920] sm:$0xff]
      %v470 = vld [vmem:[%s161 + $0x928] sm:$0xff]
      %v471 = vld [vmem:[%s161 + $0x930] sm:$0xff]
      %v472 = vld [vmem:[%s161 + $0x938] sm:$0xff]
      %v473 = vld [vmem:[%s161 + $0x940] sm:$0xff]
      %v474 = vld [vmem:[%s161 + $0x948] sm:$0xff]
      %v475 = vld [vmem:[%s161 + $0x950] sm:$0xff]
      %v476 = vld [vmem:[%s161 + $0x958] sm:$0xff]
      %v477 = vld [vmem:[%s168] sm:$0xff]
      %v478 = vld [vmem:[%s168 + $0x8] sm:$0xff]
      %v479 = vld [vmem:[%s168 + $0x10] sm:$0xff]
      %v480 = vld [vmem:[%s168 + $0x18] sm:$0xff]
      %v481 = vld [vmem:[%s168 + $0x20] sm:$0xff]
      %v482 = vld [vmem:[%s168 + $0x28] sm:$0xff]
      %v483 = vld [vmem:[%s168 + $0x30] sm:$0xff]
      %v484 = vld [vmem:[%s168 + $0x38] sm:$0xff]
      %v485 = vld [vmem:[%s168 + $0x40] sm:$0xff]
      %v486 = vld [vmem:[%s168 + $0x48] sm:$0xff]
      %v487 = vld [vmem:[%s168 + $0x50] sm:$0xff]
      %v488 = vld [vmem:[%s168 + $0x58] sm:$0xff]
      %v489 = vld [vmem:[%s168 + $0x60] sm:$0xff]
      %v490 = vld [vmem:[%s168 + $0x68] sm:$0xff]
      %v491 = vld [vmem:[%s168 + $0x70] sm:$0xff]
      %v492 = vld [vmem:[%s168 + $0x78] sm:$0xff]
      %v493 = vld [vmem:[%s168 + $0x80] sm:$0xff]
      %v494 = vld [vmem:[%s168 + $0x88] sm:$0xff]
      %v495 = vld [vmem:[%s168 + $0x90] sm:$0xff]
      %v496 = vld [vmem:[%s168 + $0x98] sm:$0xff]
      %v497 = vld [vmem:[%s168 + $0xa0] sm:$0xff]
      %v498 = vld [vmem:[%s168 + $0xa8] sm:$0xff]
      %v499 = vld [vmem:[%s168 + $0xb0] sm:$0xff]
      %v500 = vld [vmem:[%s168 + $0xb8] sm:$0xff]
      %v501 = vld [vmem:[%s168 + $0xc0] sm:$0xff]
      %v502 = vld [vmem:[%s168 + $0xc8] sm:$0xff]
      %v503 = vld [vmem:[%s168 + $0xd0] sm:$0xff]
      %v504 = vld [vmem:[%s168 + $0xd8] sm:$0xff]
      %v505 = vld [vmem:[%s168 + $0xe0] sm:$0xff]
      %v506 = vld [vmem:[%s168 + $0xe8] sm:$0xff]
      %v507 = vld [vmem:[%s168 + $0xf0] sm:$0xff]
      %v508 = vld [vmem:[%s168 + $0xf8] sm:$0xff]
      %v509 = vld [vmem:[%s168 + $0x100] sm:$0xff]
      %v510 = vld [vmem:[%s168 + $0x108] sm:$0xff]
      %v511 = vld [vmem:[%s168 + $0x110] sm:$0xff]
      %v512 = vld [vmem:[%s168 + $0x118] sm:$0xff]
      %v513 = vld [vmem:[%s168 + $0x120] sm:$0xff]
      %v514 = vld [vmem:[%s168 + $0x128] sm:$0xff]
      %v515 = vld [vmem:[%s168 + $0x130] sm:$0xff]
      %v516 = vld [vmem:[%s168 + $0x138] sm:$0xff]
      %v517 = vld [vmem:[%s168 + $0x140] sm:$0xff]
      %v518 = vld [vmem:[%s168 + $0x148] sm:$0xff]
      %v519 = vld [vmem:[%s168 + $0x150] sm:$0xff]
      %v520 = vld [vmem:[%s168 + $0x158] sm:$0xff]
      %v521 = vld [vmem:[%s168 + $0x160] sm:$0xff]
      %v522 = vld [vmem:[%s168 + $0x168] sm:$0xff]
      %v523 = vld [vmem:[%s168 + $0x170] sm:$0xff]
      %v524 = vld [vmem:[%s168 + $0x178] sm:$0xff]
      %v525 = vld [vmem:[%s168 + $0x180] sm:$0xff]
      %v526 = vld [vmem:[%s168 + $0x188] sm:$0xff]
      %v527 = vld [vmem:[%s168 + $0x190] sm:$0xff]
      %v528 = vld [vmem:[%s168 + $0x198] sm:$0xff]
      %v529 = vld [vmem:[%s168 + $0x1a0] sm:$0xff]
      %v530 = vld [vmem:[%s168 + $0x1a8] sm:$0xff]
      %v531 = vld [vmem:[%s168 + $0x1b0] sm:$0xff]
      %v532 = vld [vmem:[%s168 + $0x1b8] sm:$0xff]
      %v533 = vld [vmem:[%s168 + $0x1c0] sm:$0xff]
      %v534 = vld [vmem:[%s168 + $0x1c8] sm:$0xff]
      %v535 = vld [vmem:[%s168 + $0x1d0] sm:$0xff]
      %v536 = vld [vmem:[%s168 + $0x1d8] sm:$0xff]
      %v537 = vld [vmem:[%s168 + $0x1e0] sm:$0xff]
      %v538 = vld [vmem:[%s168 + $0x1e8] sm:$0xff]
      %v539 = vld [vmem:[%s168 + $0x1f0] sm:$0xff]
      %v540 = vld [vmem:[%s168 + $0x1f8] sm:$0xff]
      %v541 = vld [vmem:[%s168 + $0x200] sm:$0xff]
      %v542 = vld [vmem:[%s168 + $0x208] sm:$0xff]
      %v543 = vld [vmem:[%s168 + $0x210] sm:$0xff]
      %v544 = vld [vmem:[%s168 + $0x218] sm:$0xff]
      %v545 = vld [vmem:[%s168 + $0x220] sm:$0xff]
      %v546 = vld [vmem:[%s168 + $0x228] sm:$0xff]
      %v547 = vld [vmem:[%s168 + $0x230] sm:$0xff]
      %v548 = vld [vmem:[%s168 + $0x238] sm:$0xff]
      %v549 = vld [vmem:[%s168 + $0x240] sm:$0xff]
      %v550 = vld [vmem:[%s168 + $0x248] sm:$0xff]
      %v551 = vld [vmem:[%s168 + $0x250] sm:$0xff]
      %v552 = vld [vmem:[%s168 + $0x258] sm:$0xff]
      %v553 = vld [vmem:[%s168 + $0x260] sm:$0xff]
      %v554 = vld [vmem:[%s168 + $0x268] sm:$0xff]
      %v555 = vld [vmem:[%s168 + $0x270] sm:$0xff]
      %v556 = vld [vmem:[%s168 + $0x278] sm:$0xff]
      %v557 = vld [vmem:[%s168 + $0x280] sm:$0xff]
      %v558 = vld [vmem:[%s168 + $0x288] sm:$0xff]
      %v559 = vld [vmem:[%s168 + $0x290] sm:$0xff]
      %v560 = vld [vmem:[%s168 + $0x298] sm:$0xff]
      %v561 = vld [vmem:[%s168 + $0x2a0] sm:$0xff]
      %v562 = vld [vmem:[%s168 + $0x2a8] sm:$0xff]
      %v563 = vld [vmem:[%s168 + $0x2b0] sm:$0xff]
      %v564 = vld [vmem:[%s168 + $0x2b8] sm:$0xff]
      %v565 = vld [vmem:[%s168 + $0x2c0] sm:$0xff]
      %v566 = vld [vmem:[%s168 + $0x2c8] sm:$0xff]
      %v567 = vld [vmem:[%s168 + $0x2d0] sm:$0xff]
      %v568 = vld [vmem:[%s168 + $0x2d8] sm:$0xff]
      %v569 = vld [vmem:[%s168 + $0x2e0] sm:$0xff]
      %v570 = vld [vmem:[%s168 + $0x2e8] sm:$0xff]
      %v571 = vld [vmem:[%s168 + $0x2f0] sm:$0xff]
      %v572 = vld [vmem:[%s168 + $0x2f8] sm:$0xff]
      %v573 = vld [vmem:[%s168 + $0x300] sm:$0xff]
      %v574 = vld [vmem:[%s168 + $0x308] sm:$0xff]
      %v575 = vld [vmem:[%s168 + $0x310] sm:$0xff]
      %v576 = vld [vmem:[%s168 + $0x318] sm:$0xff]
      %v577 = vld [vmem:[%s168 + $0x320] sm:$0xff]
      %v578 = vld [vmem:[%s168 + $0x328] sm:$0xff]
      %v579 = vld [vmem:[%s168 + $0x330] sm:$0xff]
      %v580 = vld [vmem:[%s168 + $0x338] sm:$0xff]
      %v581 = vld [vmem:[%s168 + $0x340] sm:$0xff]
      %v582 = vld [vmem:[%s168 + $0x348] sm:$0xff]
      %v583 = vld [vmem:[%s168 + $0x350] sm:$0xff]
      %v584 = vld [vmem:[%s168 + $0x358] sm:$0xff]
      %v585 = vld [vmem:[%s168 + $0x360] sm:$0xff]
      %v586 = vld [vmem:[%s168 + $0x368] sm:$0xff]
      %v587 = vld [vmem:[%s168 + $0x370] sm:$0xff]
      %v588 = vld [vmem:[%s168 + $0x378] sm:$0xff]
      %v589 = vld [vmem:[%s168 + $0x380] sm:$0xff]
      %v590 = vld [vmem:[%s168 + $0x388] sm:$0xff]
      %v591 = vld [vmem:[%s168 + $0x390] sm:$0xff]
      %v592 = vld [vmem:[%s168 + $0x398] sm:$0xff]
      %v593 = vld [vmem:[%s168 + $0x3a0] sm:$0xff]
      %v594 = vld [vmem:[%s168 + $0x3a8] sm:$0xff]
      %v595 = vld [vmem:[%s168 + $0x3b0] sm:$0xff]
      %v596 = vld [vmem:[%s168 + $0x3b8] sm:$0xff]
      %v597 = vld [vmem:[%s168 + $0x3c0] sm:$0xff]
      %v598 = vld [vmem:[%s168 + $0x3c8] sm:$0xff]
      %v599 = vld [vmem:[%s168 + $0x3d0] sm:$0xff]
      %v600 = vld [vmem:[%s168 + $0x3d8] sm:$0xff]
      %v601 = vld [vmem:[%s168 + $0x3e0] sm:$0xff]
      %v602 = vld [vmem:[%s168 + $0x3e8] sm:$0xff]
      %v603 = vld [vmem:[%s168 + $0x3f0] sm:$0xff]
      %v604 = vld [vmem:[%s168 + $0x3f8] sm:$0xff]
      %v605 = vld [vmem:[%s168 + $0x400] sm:$0xff]
      %v606 = vld [vmem:[%s168 + $0x408] sm:$0xff]
      %v607 = vld [vmem:[%s168 + $0x410] sm:$0xff]
      %v608 = vld [vmem:[%s168 + $0x418] sm:$0xff]
      %v609 = vld [vmem:[%s168 + $0x420] sm:$0xff]
      %v610 = vld [vmem:[%s168 + $0x428] sm:$0xff]
      %v611 = vld [vmem:[%s168 + $0x430] sm:$0xff]
      %v612 = vld [vmem:[%s168 + $0x438] sm:$0xff]
      %v613 = vld [vmem:[%s168 + $0x440] sm:$0xff]
      %v614 = vld [vmem:[%s168 + $0x448] sm:$0xff]
      %v615 = vld [vmem:[%s168 + $0x450] sm:$0xff]
      %v616 = vld [vmem:[%s168 + $0x458] sm:$0xff]
      %v617 = vld [vmem:[%s168 + $0x460] sm:$0xff]
      %v618 = vld [vmem:[%s168 + $0x468] sm:$0xff]
      %v619 = vld [vmem:[%s168 + $0x470] sm:$0xff]
      %v620 = vld [vmem:[%s168 + $0x478] sm:$0xff]
      %v621 = vld [vmem:[%s168 + $0x480] sm:$0xff]
      %v622 = vld [vmem:[%s168 + $0x488] sm:$0xff]
      %v623 = vld [vmem:[%s168 + $0x490] sm:$0xff]
      %v624 = vld [vmem:[%s168 + $0x498] sm:$0xff]
      %v625 = vld [vmem:[%s168 + $0x4a0] sm:$0xff]
      %v626 = vld [vmem:[%s168 + $0x4a8] sm:$0xff]
      %v627 = vld [vmem:[%s168 + $0x4b0] sm:$0xff]
      %v628 = vld [vmem:[%s168 + $0x4b8] sm:$0xff]
      %v629 = vld [vmem:[%s168 + $0x4c0] sm:$0xff]
      %v630 = vld [vmem:[%s168 + $0x4c8] sm:$0xff]
      %v631 = vld [vmem:[%s168 + $0x4d0] sm:$0xff]
      %v632 = vld [vmem:[%s168 + $0x4d8] sm:$0xff]
      %v633 = vld [vmem:[%s168 + $0x4e0] sm:$0xff]
      %v634 = vld [vmem:[%s168 + $0x4e8] sm:$0xff]
      %v635 = vld [vmem:[%s168 + $0x4f0] sm:$0xff]
      %v636 = vld [vmem:[%s168 + $0x4f8] sm:$0xff]
      %v637 = vld [vmem:[%s168 + $0x500] sm:$0xff]
      %v638 = vld [vmem:[%s168 + $0x508] sm:$0xff]
      %v639 = vld [vmem:[%s168 + $0x510] sm:$0xff]
      %v640 = vld [vmem:[%s168 + $0x518] sm:$0xff]
      %v641 = vld [vmem:[%s168 + $0x520] sm:$0xff]
      %v642 = vld [vmem:[%s168 + $0x528] sm:$0xff]
      %v643 = vld [vmem:[%s168 + $0x530] sm:$0xff]
      %v644 = vld [vmem:[%s168 + $0x538] sm:$0xff]
      %v645 = vld [vmem:[%s168 + $0x540] sm:$0xff]
      %v646 = vld [vmem:[%s168 + $0x548] sm:$0xff]
      %v647 = vld [vmem:[%s168 + $0x550] sm:$0xff]
      %v648 = vld [vmem:[%s168 + $0x558] sm:$0xff]
      %v649 = vld [vmem:[%s168 + $0x560] sm:$0xff]
      %v650 = vld [vmem:[%s168 + $0x568] sm:$0xff]
      %v651 = vld [vmem:[%s168 + $0x570] sm:$0xff]
      %v652 = vld [vmem:[%s168 + $0x578] sm:$0xff]
      %v653 = vld [vmem:[%s168 + $0x580] sm:$0xff]
      %v654 = vld [vmem:[%s168 + $0x588] sm:$0xff]
      %v655 = vld [vmem:[%s168 + $0x590] sm:$0xff]
      %v656 = vld [vmem:[%s168 + $0x598] sm:$0xff]
      %v657 = vld [vmem:[%s168 + $0x5a0] sm:$0xff]
      %v658 = vld [vmem:[%s168 + $0x5a8] sm:$0xff]
      %v659 = vld [vmem:[%s168 + $0x5b0] sm:$0xff]
      %v660 = vld [vmem:[%s168 + $0x5b8] sm:$0xff]
      %v661 = vld [vmem:[%s168 + $0x5c0] sm:$0xff]
      %v662 = vld [vmem:[%s168 + $0x5c8] sm:$0xff]
      %v663 = vld [vmem:[%s168 + $0x5d0] sm:$0xff]
      %v664 = vld [vmem:[%s168 + $0x5d8] sm:$0xff]
      %v665 = vld [vmem:[%s168 + $0x5e0] sm:$0xff]
      %v666 = vld [vmem:[%s168 + $0x5e8] sm:$0xff]
      %v667 = vld [vmem:[%s168 + $0x5f0] sm:$0xff]
      %v668 = vld [vmem:[%s168 + $0x5f8] sm:$0xff]
      %v669 = vld [vmem:[%s168 + $0x600] sm:$0xff]
      %v670 = vld [vmem:[%s168 + $0x608] sm:$0xff]
      %v671 = vld [vmem:[%s168 + $0x610] sm:$0xff]
      %v672 = vld [vmem:[%s168 + $0x618] sm:$0xff]
      %v673 = vld [vmem:[%s168 + $0x620] sm:$0xff]
      %v674 = vld [vmem:[%s168 + $0x628] sm:$0xff]
      %v675 = vld [vmem:[%s168 + $0x630] sm:$0xff]
      %v676 = vld [vmem:[%s168 + $0x638] sm:$0xff]
      %v677 = vld [vmem:[%s168 + $0x640] sm:$0xff]
      %v678 = vld [vmem:[%s168 + $0x648] sm:$0xff]
      %v679 = vld [vmem:[%s168 + $0x650] sm:$0xff]
      %v680 = vld [vmem:[%s168 + $0x658] sm:$0xff]
      %v681 = vld [vmem:[%s168 + $0x660] sm:$0xff]
      %v682 = vld [vmem:[%s168 + $0x668] sm:$0xff]
      %v683 = vld [vmem:[%s168 + $0x670] sm:$0xff]
      %v684 = vld [vmem:[%s168 + $0x678] sm:$0xff]
      %v685 = vld [vmem:[%s168 + $0x680] sm:$0xff]
      %v686 = vld [vmem:[%s168 + $0x688] sm:$0xff]
      %v687 = vld [vmem:[%s168 + $0x690] sm:$0xff]
      %v688 = vld [vmem:[%s168 + $0x698] sm:$0xff]
      %v689 = vld [vmem:[%s168 + $0x6a0] sm:$0xff]
      %v690 = vld [vmem:[%s168 + $0x6a8] sm:$0xff]
      %v691 = vld [vmem:[%s168 + $0x6b0] sm:$0xff]
      %v692 = vld [vmem:[%s168 + $0x6b8] sm:$0xff]
      %v693 = vld [vmem:[%s168 + $0x6c0] sm:$0xff]
      %v694 = vld [vmem:[%s168 + $0x6c8] sm:$0xff]
      %v695 = vld [vmem:[%s168 + $0x6d0] sm:$0xff]
      %v696 = vld [vmem:[%s168 + $0x6d8] sm:$0xff]
      %v697 = vld [vmem:[%s168 + $0x6e0] sm:$0xff]
      %v698 = vld [vmem:[%s168 + $0x6e8] sm:$0xff]
      %v699 = vld [vmem:[%s168 + $0x6f0] sm:$0xff]
      %v700 = vld [vmem:[%s168 + $0x6f8] sm:$0xff]
      %v701 = vld [vmem:[%s168 + $0x700] sm:$0xff]
      %v702 = vld [vmem:[%s168 + $0x708] sm:$0xff]
      %v703 = vld [vmem:[%s168 + $0x710] sm:$0xff]
      %v704 = vld [vmem:[%s168 + $0x718] sm:$0xff]
      %v705 = vld [vmem:[%s168 + $0x720] sm:$0xff]
      %v706 = vld [vmem:[%s168 + $0x728] sm:$0xff]
      %v707 = vld [vmem:[%s168 + $0x730] sm:$0xff]
      %v708 = vld [vmem:[%s168 + $0x738] sm:$0xff]
      %v709 = vld [vmem:[%s168 + $0x740] sm:$0xff]
      %v710 = vld [vmem:[%s168 + $0x748] sm:$0xff]
      %v711 = vld [vmem:[%s168 + $0x750] sm:$0xff]
      %v712 = vld [vmem:[%s168 + $0x758] sm:$0xff]
      %v713 = vld [vmem:[%s168 + $0x760] sm:$0xff]
      %v714 = vld [vmem:[%s168 + $0x768] sm:$0xff]
      %v715 = vld [vmem:[%s168 + $0x770] sm:$0xff]
      %v716 = vld [vmem:[%s168 + $0x778] sm:$0xff]
      %v717 = vld [vmem:[%s168 + $0x780] sm:$0xff]
      %v718 = vld [vmem:[%s168 + $0x788] sm:$0xff]
      %v719 = vld [vmem:[%s168 + $0x790] sm:$0xff]
      %v720 = vld [vmem:[%s168 + $0x798] sm:$0xff]
      %v721 = vld [vmem:[%s168 + $0x7a0] sm:$0xff]
      %v722 = vld [vmem:[%s168 + $0x7a8] sm:$0xff]
      %v723 = vld [vmem:[%s168 + $0x7b0] sm:$0xff]
      %v724 = vld [vmem:[%s168 + $0x7b8] sm:$0xff]
      %v725 = vld [vmem:[%s168 + $0x7c0] sm:$0xff]
      %v726 = vld [vmem:[%s168 + $0x7c8] sm:$0xff]
      %v727 = vld [vmem:[%s168 + $0x7d0] sm:$0xff]
      %v728 = vld [vmem:[%s168 + $0x7d8] sm:$0xff]
      %v729 = vld [vmem:[%s168 + $0x7e0] sm:$0xff]
      %v730 = vld [vmem:[%s168 + $0x7e8] sm:$0xff]
      %v731 = vld [vmem:[%s168 + $0x7f0] sm:$0xff]
      %v732 = vld [vmem:[%s168 + $0x7f8] sm:$0xff]
      %v733 = vld [vmem:[%s168 + $0x800] sm:$0xff]
      %v734 = vld [vmem:[%s168 + $0x808] sm:$0xff]
      %v735 = vld [vmem:[%s168 + $0x810] sm:$0xff]
      %v736 = vld [vmem:[%s168 + $0x818] sm:$0xff]
      %v737 = vld [vmem:[%s168 + $0x820] sm:$0xff]
      %v738 = vld [vmem:[%s168 + $0x828] sm:$0xff]
      %v739 = vld [vmem:[%s168 + $0x830] sm:$0xff]
      %v740 = vld [vmem:[%s168 + $0x838] sm:$0xff]
      %v741 = vld [vmem:[%s168 + $0x840] sm:$0xff]
      %v742 = vld [vmem:[%s168 + $0x848] sm:$0xff]
      %v743 = vld [vmem:[%s168 + $0x850] sm:$0xff]
      %v744 = vld [vmem:[%s168 + $0x858] sm:$0xff]
      %v745 = vld [vmem:[%s168 + $0x860] sm:$0xff]
      %v746 = vld [vmem:[%s168 + $0x868] sm:$0xff]
      %v747 = vld [vmem:[%s168 + $0x870] sm:$0xff]
      %v748 = vld [vmem:[%s168 + $0x878] sm:$0xff]
      %v749 = vld [vmem:[%s168 + $0x880] sm:$0xff]
      %v750 = vld [vmem:[%s168 + $0x888] sm:$0xff]
      %v751 = vld [vmem:[%s168 + $0x890] sm:$0xff]
      %v752 = vld [vmem:[%s168 + $0x898] sm:$0xff]
      %v753 = vld [vmem:[%s168 + $0x8a0] sm:$0xff]
      %v754 = vld [vmem:[%s168 + $0x8a8] sm:$0xff]
      %v755 = vld [vmem:[%s168 + $0x8b0] sm:$0xff]
      %v756 = vld [vmem:[%s168 + $0x8b8] sm:$0xff]
      %v757 = vld [vmem:[%s168 + $0x8c0] sm:$0xff]
      %v758 = vld [vmem:[%s168 + $0x8c8] sm:$0xff]
      %v759 = vld [vmem:[%s168 + $0x8d0] sm:$0xff]
      %v760 = vld [vmem:[%s168 + $0x8d8] sm:$0xff]
      %v761 = vld [vmem:[%s168 + $0x8e0] sm:$0xff]
      %v762 = vld [vmem:[%s168 + $0x8e8] sm:$0xff]
      %v763 = vld [vmem:[%s168 + $0x8f0] sm:$0xff]
      %v764 = vld [vmem:[%s168 + $0x8f8] sm:$0xff]
      %v765 = vld [vmem:[%s168 + $0x900] sm:$0xff]
      %v766 = vld [vmem:[%s168 + $0x908] sm:$0xff]
      %v767 = vld [vmem:[%s168 + $0x910] sm:$0xff]
      %v768 = vld [vmem:[%s168 + $0x918] sm:$0xff]
      %v769 = vld [vmem:[%s168 + $0x920] sm:$0xff]
      %v770 = vld [vmem:[%s168 + $0x928] sm:$0xff]
      %v771 = vld [vmem:[%s168 + $0x930] sm:$0xff]
      %v772 = vld [vmem:[%s168 + $0x938] sm:$0xff]
      %v773 = vld [vmem:[%s168 + $0x940] sm:$0xff]
      %v774 = vld [vmem:[%s168 + $0x948] sm:$0xff]
      %v775 = vld [vmem:[%s168 + $0x950] sm:$0xff]
      %v776 = vld [vmem:[%s168 + $0x958] sm:$0xff]
      %v777 = vmul.f32 %v177, %v177
      %v778 = vmul.f32 %v178, %v178
      %v779 = vmul.f32 %v179, %v179
      %v780 = vmul.f32 %v180, %v180
      %v781 = vmul.f32 %v181, %v181
      %v782 = vmul.f32 %v182, %v182
      %v783 = vmul.f32 %v183, %v183
      %v784 = vmul.f32 %v184, %v184
      %v785 = vmul.f32 %v185, %v185
      %v786 = vmul.f32 %v186, %v186
      %v787 = vmul.f32 %v187, %v187
      %v788 = vmul.f32 %v188, %v188
      %v789 = vmul.f32 %v189, %v189
      %v790 = vmul.f32 %v190, %v190
      %v791 = vmul.f32 %v191, %v191
      %v792 = vmul.f32 %v192, %v192
      %v793 = vmul.f32 %v193, %v193
      %v794 = vmul.f32 %v194, %v194
      %v795 = vmul.f32 %v195, %v195
      %v796 = vmul.f32 %v196, %v196
      %v797 = vmul.f32 %v197, %v197
      %v798 = vmul.f32 %v198, %v198
      %v799 = vmul.f32 %v199, %v199
      %v800 = vmul.f32 %v200, %v200
      %v801 = vmul.f32 %v201, %v201
      %v802 = vmul.f32 %v202, %v202
      %v803 = vmul.f32 %v203, %v203
      %v804 = vmul.f32 %v204, %v204
      %v805 = vmul.f32 %v205, %v205
      %v806 = vmul.f32 %v206, %v206
      %v807 = vmul.f32 %v207, %v207
      %v808 = vmul.f32 %v208, %v208
      %v809 = vmul.f32 %v209, %v209
      %v810 = vmul.f32 %v210, %v210
      %v811 = vmul.f32 %v211, %v211
      %v812 = vmul.f32 %v212, %v212
      %v813 = vmul.f32 %v213, %v213
      %v814 = vmul.f32 %v214, %v214
      %v815 = vmul.f32 %v215, %v215
      %v816 = vmul.f32 %v216, %v216
      %v817 = vmul.f32 %v217, %v217
      %v818 = vmul.f32 %v218, %v218
      %v819 = vmul.f32 %v219, %v219
      %v820 = vmul.f32 %v220, %v220
      %v821 = vmul.f32 %v221, %v221
      %v822 = vmul.f32 %v222, %v222
      %v823 = vmul.f32 %v223, %v223
      %v824 = vmul.f32 %v224, %v224
      %v825 = vmul.f32 %v225, %v225
      %v826 = vmul.f32 %v226, %v226
      %v827 = vmul.f32 %v227, %v227
      %v828 = vmul.f32 %v228, %v228
      %v829 = vmul.f32 %v229, %v229
      %v830 = vmul.f32 %v230, %v230
      %v831 = vmul.f32 %v231, %v231
      %v832 = vmul.f32 %v232, %v232
      %v833 = vmul.f32 %v233, %v233
      %v834 = vmul.f32 %v234, %v234
      %v835 = vmul.f32 %v235, %v235
      %v836 = vmul.f32 %v236, %v236
      %v837 = vmul.f32 %v237, %v237
      %v838 = vmul.f32 %v238, %v238
      %v839 = vmul.f32 %v239, %v239
      %v840 = vmul.f32 %v240, %v240
      %v841 = vmul.f32 %v241, %v241
      %v842 = vmul.f32 %v242, %v242
      %v843 = vmul.f32 %v243, %v243
      %v844 = vmul.f32 %v244, %v244
      %v845 = vmul.f32 %v245, %v245
      %v846 = vmul.f32 %v246, %v246
      %v847 = vmul.f32 %v247, %v247
      %v848 = vmul.f32 %v248, %v248
      %v849 = vmul.f32 %v249, %v249
      %v850 = vmul.f32 %v250, %v250
      %v851 = vmul.f32 %v251, %v251
      %v852 = vmul.f32 %v252, %v252
      %v853 = vmul.f32 %v253, %v253
      %v854 = vmul.f32 %v254, %v254
      %v855 = vmul.f32 %v255, %v255
      %v856 = vmul.f32 %v256, %v256
      %v857 = vmul.f32 %v257, %v257
      %v858 = vmul.f32 %v258, %v258
      %v859 = vmul.f32 %v259, %v259
      %v860 = vmul.f32 %v260, %v260
      %v861 = vmul.f32 %v261, %v261
      %v862 = vmul.f32 %v262, %v262
      %v863 = vmul.f32 %v263, %v263
      %v864 = vmul.f32 %v264, %v264
      %v865 = vmul.f32 %v265, %v265
      %v866 = vmul.f32 %v266, %v266
      %v867 = vmul.f32 %v267, %v267
      %v868 = vmul.f32 %v268, %v268
      %v869 = vmul.f32 %v269, %v269
      %v870 = vmul.f32 %v270, %v270
      %v871 = vmul.f32 %v271, %v271
      %v872 = vmul.f32 %v272, %v272
      %v873 = vmul.f32 %v273, %v273
      %v874 = vmul.f32 %v274, %v274
      %v875 = vmul.f32 %v275, %v275
      %v876 = vmul.f32 %v276, %v276
      %v877 = vmul.f32 %v277, %v277
      %v878 = vmul.f32 %v278, %v278
      %v879 = vmul.f32 %v279, %v279
      %v880 = vmul.f32 %v280, %v280
      %v881 = vmul.f32 %v281, %v281
      %v882 = vmul.f32 %v282, %v282
      %v883 = vmul.f32 %v283, %v283
      %v884 = vmul.f32 %v284, %v284
      %v885 = vmul.f32 %v285, %v285
      %v886 = vmul.f32 %v286, %v286
      %v887 = vmul.f32 %v287, %v287
      %v888 = vmul.f32 %v288, %v288
      %v889 = vmul.f32 %v289, %v289
      %v890 = vmul.f32 %v290, %v290
      %v891 = vmul.f32 %v291, %v291
      %v892 = vmul.f32 %v292, %v292
      %v893 = vmul.f32 %v293, %v293
      %v894 = vmul.f32 %v294, %v294
      %v895 = vmul.f32 %v295, %v295
      %v896 = vmul.f32 %v296, %v296
      %v897 = vmul.f32 %v297, %v297
      %v898 = vmul.f32 %v298, %v298
      %v899 = vmul.f32 %v299, %v299
      %v900 = vmul.f32 %v300, %v300
      %v901 = vmul.f32 %v301, %v301
      %v902 = vmul.f32 %v302, %v302
      %v903 = vmul.f32 %v303, %v303
      %v904 = vmul.f32 %v304, %v304
      %v905 = vmul.f32 %v305, %v305
      %v906 = vmul.f32 %v306, %v306
      %v907 = vmul.f32 %v307, %v307
      %v908 = vmul.f32 %v308, %v308
      %v909 = vmul.f32 %v309, %v309
      %v910 = vmul.f32 %v310, %v310
      %v911 = vmul.f32 %v311, %v311
      %v912 = vmul.f32 %v312, %v312
      %v913 = vmul.f32 %v313, %v313
      %v914 = vmul.f32 %v314, %v314
      %v915 = vmul.f32 %v315, %v315
      %v916 = vmul.f32 %v316, %v316
      %v917 = vmul.f32 %v317, %v317
      %v918 = vmul.f32 %v318, %v318
      %v919 = vmul.f32 %v319, %v319
      %v920 = vmul.f32 %v320, %v320
      %v921 = vmul.f32 %v321, %v321
      %v922 = vmul.f32 %v322, %v322
      %v923 = vmul.f32 %v323, %v323
      %v924 = vmul.f32 %v324, %v324
      %v925 = vmul.f32 %v325, %v325
      %v926 = vmul.f32 %v326, %v326
      %v927 = vmul.f32 %v327, %v327
      %v928 = vmul.f32 %v328, %v328
      %v929 = vmul.f32 %v329, %v329
      %v930 = vmul.f32 %v330, %v330
      %v931 = vmul.f32 %v331, %v331
      %v932 = vmul.f32 %v332, %v332
      %v933 = vmul.f32 %v333, %v333
      %v934 = vmul.f32 %v334, %v334
      %v935 = vmul.f32 %v335, %v335
      %v936 = vmul.f32 %v336, %v336
      %v937 = vmul.f32 %v337, %v337
      %v938 = vmul.f32 %v338, %v338
      %v939 = vmul.f32 %v339, %v339
      %v940 = vmul.f32 %v340, %v340
      %v941 = vmul.f32 %v341, %v341
      %v942 = vmul.f32 %v342, %v342
      %v943 = vmul.f32 %v343, %v343
      %v944 = vmul.f32 %v344, %v344
      %v945 = vmul.f32 %v345, %v345
      %v946 = vmul.f32 %v346, %v346
      %v947 = vmul.f32 %v347, %v347
      %v948 = vmul.f32 %v348, %v348
      %v949 = vmul.f32 %v349, %v349
      %v950 = vmul.f32 %v350, %v350
      %v951 = vmul.f32 %v351, %v351
      %v952 = vmul.f32 %v352, %v352
      %v953 = vmul.f32 %v353, %v353
      %v954 = vmul.f32 %v354, %v354
      %v955 = vmul.f32 %v355, %v355
      %v956 = vmul.f32 %v356, %v356
      %v957 = vmul.f32 %v357, %v357
      %v958 = vmul.f32 %v358, %v358
      %v959 = vmul.f32 %v359, %v359
      %v960 = vmul.f32 %v360, %v360
      %v961 = vmul.f32 %v361, %v361
      %v962 = vmul.f32 %v362, %v362
      %v963 = vmul.f32 %v363, %v363
      %v964 = vmul.f32 %v364, %v364
      %v965 = vmul.f32 %v365, %v365
      %v966 = vmul.f32 %v366, %v366
      %v967 = vmul.f32 %v367, %v367
      %v968 = vmul.f32 %v368, %v368
      %v969 = vmul.f32 %v369, %v369
      %v970 = vmul.f32 %v370, %v370
      %v971 = vmul.f32 %v371, %v371
      %v972 = vmul.f32 %v372, %v372
      %v973 = vmul.f32 %v373, %v373
      %v974 = vmul.f32 %v374, %v374
      %v975 = vmul.f32 %v375, %v375
      %v976 = vmul.f32 %v376, %v376
      %v977 = vmul.f32 %v377, %v377
      %v978 = vmul.f32 %v378, %v378
      %v979 = vmul.f32 %v379, %v379
      %v980 = vmul.f32 %v380, %v380
      %v981 = vmul.f32 %v381, %v381
      %v982 = vmul.f32 %v382, %v382
      %v983 = vmul.f32 %v383, %v383
      %v984 = vmul.f32 %v384, %v384
      %v985 = vmul.f32 %v385, %v385
      %v986 = vmul.f32 %v386, %v386
      %v987 = vmul.f32 %v387, %v387
      %v988 = vmul.f32 %v388, %v388
      %v989 = vmul.f32 %v389, %v389
      %v990 = vmul.f32 %v390, %v390
      %v991 = vmul.f32 %v391, %v391
      %v992 = vmul.f32 %v392, %v392
      %v993 = vmul.f32 %v393, %v393
      %v994 = vmul.f32 %v394, %v394
      %v995 = vmul.f32 %v395, %v395
      %v996 = vmul.f32 %v396, %v396
      %v997 = vmul.f32 %v397, %v397
      %v998 = vmul.f32 %v398, %v398
      %v999 = vmul.f32 %v399, %v399
      %v1000 = vmul.f32 %v400, %v400
      %v1001 = vmul.f32 %v401, %v401
      %v1002 = vmul.f32 %v402, %v402
      %v1003 = vmul.f32 %v403, %v403
      %v1004 = vmul.f32 %v404, %v404
      %v1005 = vmul.f32 %v405, %v405
      %v1006 = vmul.f32 %v406, %v406
      %v1007 = vmul.f32 %v407, %v407
      %v1008 = vmul.f32 %v408, %v408
      %v1009 = vmul.f32 %v409, %v409
      %v1010 = vmul.f32 %v410, %v410
      %v1011 = vmul.f32 %v411, %v411
      %v1012 = vmul.f32 %v412, %v412
      %v1013 = vmul.f32 %v413, %v413
      %v1014 = vmul.f32 %v414, %v414
      %v1015 = vmul.f32 %v415, %v415
      %v1016 = vmul.f32 %v416, %v416
      %v1017 = vmul.f32 %v417, %v417
      %v1018 = vmul.f32 %v418, %v418
      %v1019 = vmul.f32 %v419, %v419
      %v1020 = vmul.f32 %v420, %v420
      %v1021 = vmul.f32 %v421, %v421
      %v1022 = vmul.f32 %v422, %v422
      %v1023 = vmul.f32 %v423, %v423
      %v1024 = vmul.f32 %v424, %v424
      %v1025 = vmul.f32 %v425, %v425
      %v1026 = vmul.f32 %v426, %v426
      %v1027 = vmul.f32 %v427, %v427
      %v1028 = vmul.f32 %v428, %v428
      %v1029 = vmul.f32 %v429, %v429
      %v1030 = vmul.f32 %v430, %v430
      %v1031 = vmul.f32 %v431, %v431
      %v1032 = vmul.f32 %v432, %v432
      %v1033 = vmul.f32 %v433, %v433
      %v1034 = vmul.f32 %v434, %v434
      %v1035 = vmul.f32 %v435, %v435
      %v1036 = vmul.f32 %v436, %v436
      %v1037 = vmul.f32 %v437, %v437
      %v1038 = vmul.f32 %v438, %v438
      %v1039 = vmul.f32 %v439, %v439
      %v1040 = vmul.f32 %v440, %v440
      %v1041 = vmul.f32 %v441, %v441
      %v1042 = vmul.f32 %v442, %v442
      %v1043 = vmul.f32 %v443, %v443
      %v1044 = vmul.f32 %v444, %v444
      %v1045 = vmul.f32 %v445, %v445
      %v1046 = vmul.f32 %v446, %v446
      %v1047 = vmul.f32 %v447, %v447
      %v1048 = vmul.f32 %v448, %v448
      %v1049 = vmul.f32 %v449, %v449
      %v1050 = vmul.f32 %v450, %v450
      %v1051 = vmul.f32 %v451, %v451
      %v1052 = vmul.f32 %v452, %v452
      %v1053 = vmul.f32 %v453, %v453
      %v1054 = vmul.f32 %v454, %v454
      %v1055 = vmul.f32 %v455, %v455
      %v1056 = vmul.f32 %v456, %v456
      %v1057 = vmul.f32 %v457, %v457
      %v1058 = vmul.f32 %v458, %v458
      %v1059 = vmul.f32 %v459, %v459
      %v1060 = vmul.f32 %v460, %v460
      %v1061 = vmul.f32 %v461, %v461
      %v1062 = vmul.f32 %v462, %v462
      %v1063 = vmul.f32 %v463, %v463
      %v1064 = vmul.f32 %v464, %v464
      %v1065 = vmul.f32 %v465, %v465
      %v1066 = vmul.f32 %v466, %v466
      %v1067 = vmul.f32 %v467, %v467
      %v1068 = vmul.f32 %v468, %v468
      %v1069 = vmul.f32 %v469, %v469
      %v1070 = vmul.f32 %v470, %v470
      %v1071 = vmul.f32 %v471, %v471
      %v1072 = vmul.f32 %v472, %v472
      %v1073 = vmul.f32 %v473, %v473
      %v1074 = vmul.f32 %v474, %v474
      %v1075 = vmul.f32 %v475, %v475
      %v1076 = vmul.f32 %v476, %v476
      %v1077 = vmul.f32 %v477, %v477
      %v1078 = vmul.f32 %v478, %v478
      %v1079 = vmul.f32 %v479, %v479
      %v1080 = vmul.f32 %v480, %v480
      %v1081 = vmul.f32 %v481, %v481
      %v1082 = vmul.f32 %v482, %v482
      %v1083 = vmul.f32 %v483, %v483
      %v1084 = vmul.f32 %v484, %v484
      %v1085 = vmul.f32 %v485, %v485
      %v1086 = vmul.f32 %v486, %v486
      %v1087 = vmul.f32 %v487, %v487
      %v1088 = vmul.f32 %v488, %v488
      %v1089 = vmul.f32 %v489, %v489
      %v1090 = vmul.f32 %v490, %v490
      %v1091 = vmul.f32 %v491, %v491
      %v1092 = vmul.f32 %v492, %v492
      %v1093 = vmul.f32 %v493, %v493
      %v1094 = vmul.f32 %v494, %v494
      %v1095 = vmul.f32 %v495, %v495
      %v1096 = vmul.f32 %v496, %v496
      %v1097 = vmul.f32 %v497, %v497
      %v1098 = vmul.f32 %v498, %v498
      %v1099 = vmul.f32 %v499, %v499
      %v1100 = vmul.f32 %v500, %v500
      %v1101 = vmul.f32 %v501, %v501
      %v1102 = vmul.f32 %v502, %v502
      %v1103 = vmul.f32 %v503, %v503
      %v1104 = vmul.f32 %v504, %v504
      %v1105 = vmul.f32 %v505, %v505
      %v1106 = vmul.f32 %v506, %v506
      %v1107 = vmul.f32 %v507, %v507
      %v1108 = vmul.f32 %v508, %v508
      %v1109 = vmul.f32 %v509, %v509
      %v1110 = vmul.f32 %v510, %v510
      %v1111 = vmul.f32 %v511, %v511
      %v1112 = vmul.f32 %v512, %v512
      %v1113 = vmul.f32 %v513, %v513
      %v1114 = vmul.f32 %v514, %v514
      %v1115 = vmul.f32 %v515, %v515
      %v1116 = vmul.f32 %v516, %v516
      %v1117 = vmul.f32 %v517, %v517
      %v1118 = vmul.f32 %v518, %v518
      %v1119 = vmul.f32 %v519, %v519
      %v1120 = vmul.f32 %v520, %v520
      %v1121 = vmul.f32 %v521, %v521
      %v1122 = vmul.f32 %v522, %v522
      %v1123 = vmul.f32 %v523, %v523
      %v1124 = vmul.f32 %v524, %v524
      %v1125 = vmul.f32 %v525, %v525
      %v1126 = vmul.f32 %v526, %v526
      %v1127 = vmul.f32 %v527, %v527
      %v1128 = vmul.f32 %v528, %v528
      %v1129 = vmul.f32 %v529, %v529
      %v1130 = vmul.f32 %v530, %v530
      %v1131 = vmul.f32 %v531, %v531
      %v1132 = vmul.f32 %v532, %v532
      %v1133 = vmul.f32 %v533, %v533
      %v1134 = vmul.f32 %v534, %v534
      %v1135 = vmul.f32 %v535, %v535
      %v1136 = vmul.f32 %v536, %v536
      %v1137 = vmul.f32 %v537, %v537
      %v1138 = vmul.f32 %v538, %v538
      %v1139 = vmul.f32 %v539, %v539
      %v1140 = vmul.f32 %v540, %v540
      %v1141 = vmul.f32 %v541, %v541
      %v1142 = vmul.f32 %v542, %v542
      %v1143 = vmul.f32 %v543, %v543
      %v1144 = vmul.f32 %v544, %v544
      %v1145 = vmul.f32 %v545, %v545
      %v1146 = vmul.f32 %v546, %v546
      %v1147 = vmul.f32 %v547, %v547
      %v1148 = vmul.f32 %v548, %v548
      %v1149 = vmul.f32 %v549, %v549
      %v1150 = vmul.f32 %v550, %v550
      %v1151 = vmul.f32 %v551, %v551
      %v1152 = vmul.f32 %v552, %v552
      %v1153 = vmul.f32 %v553, %v553
      %v1154 = vmul.f32 %v554, %v554
      %v1155 = vmul.f32 %v555, %v555
      %v1156 = vmul.f32 %v556, %v556
      %v1157 = vmul.f32 %v557, %v557
      %v1158 = vmul.f32 %v558, %v558
      %v1159 = vmul.f32 %v559, %v559
      %v1160 = vmul.f32 %v560, %v560
      %v1161 = vmul.f32 %v561, %v561
      %v1162 = vmul.f32 %v562, %v562
      %v1163 = vmul.f32 %v563, %v563
      %v1164 = vmul.f32 %v564, %v564
      %v1165 = vmul.f32 %v565, %v565
      %v1166 = vmul.f32 %v566, %v566
      %v1167 = vmul.f32 %v567, %v567
      %v1168 = vmul.f32 %v568, %v568
      %v1169 = vmul.f32 %v569, %v569
      %v1170 = vmul.f32 %v570, %v570
      %v1171 = vmul.f32 %v571, %v571
      %v1172 = vmul.f32 %v572, %v572
      %v1173 = vmul.f32 %v573, %v573
      %v1174 = vmul.f32 %v574, %v574
      %v1175 = vmul.f32 %v575, %v575
      %v1176 = vmul.f32 %v576, %v576
      %v1177 = vmul.f32 %v577, %v577
      %v1178 = vmul.f32 %v578, %v578
      %v1179 = vmul.f32 %v579, %v579
      %v1180 = vmul.f32 %v580, %v580
      %v1181 = vmul.f32 %v581, %v581
      %v1182 = vmul.f32 %v582, %v582
      %v1183 = vmul.f32 %v583, %v583
      %v1184 = vmul.f32 %v584, %v584
      %v1185 = vmul.f32 %v585, %v585
      %v1186 = vmul.f32 %v586, %v586
      %v1187 = vmul.f32 %v587, %v587
      %v1188 = vmul.f32 %v588, %v588
      %v1189 = vmul.f32 %v589, %v589
      %v1190 = vmul.f32 %v590, %v590
      %v1191 = vmul.f32 %v591, %v591
      %v1192 = vmul.f32 %v592, %v592
      %v1193 = vmul.f32 %v593, %v593
      %v1194 = vmul.f32 %v594, %v594
      %v1195 = vmul.f32 %v595, %v595
      %v1196 = vmul.f32 %v596, %v596
      %v1197 = vmul.f32 %v597, %v597
      %v1198 = vmul.f32 %v598, %v598
      %v1199 = vmul.f32 %v599, %v599
      %v1200 = vmul.f32 %v600, %v600
      %v1201 = vmul.f32 %v601, %v601
      %v1202 = vmul.f32 %v602, %v602
      %v1203 = vmul.f32 %v603, %v603
      %v1204 = vmul.f32 %v604, %v604
      %v1205 = vmul.f32 %v605, %v605
      %v1206 = vmul.f32 %v606, %v606
      %v1207 = vmul.f32 %v607, %v607
      %v1208 = vmul.f32 %v608, %v608
      %v1209 = vmul.f32 %v609, %v609
      %v1210 = vmul.f32 %v610, %v610
      %v1211 = vmul.f32 %v611, %v611
      %v1212 = vmul.f32 %v612, %v612
      %v1213 = vmul.f32 %v613, %v613
      %v1214 = vmul.f32 %v614, %v614
      %v1215 = vmul.f32 %v615, %v615
      %v1216 = vmul.f32 %v616, %v616
      %v1217 = vmul.f32 %v617, %v617
      %v1218 = vmul.f32 %v618, %v618
      %v1219 = vmul.f32 %v619, %v619
      %v1220 = vmul.f32 %v620, %v620
      %v1221 = vmul.f32 %v621, %v621
      %v1222 = vmul.f32 %v622, %v622
      %v1223 = vmul.f32 %v623, %v623
      %v1224 = vmul.f32 %v624, %v624
      %v1225 = vmul.f32 %v625, %v625
      %v1226 = vmul.f32 %v626, %v626
      %v1227 = vmul.f32 %v627, %v627
      %v1228 = vmul.f32 %v628, %v628
      %v1229 = vmul.f32 %v629, %v629
      %v1230 = vmul.f32 %v630, %v630
      %v1231 = vmul.f32 %v631, %v631
      %v1232 = vmul.f32 %v632, %v632
      %v1233 = vmul.f32 %v633, %v633
      %v1234 = vmul.f32 %v634, %v634
      %v1235 = vmul.f32 %v635, %v635
      %v1236 = vmul.f32 %v636, %v636
      %v1237 = vmul.f32 %v637, %v637
      %v1238 = vmul.f32 %v638, %v638
      %v1239 = vmul.f32 %v639, %v639
      %v1240 = vmul.f32 %v640, %v640
      %v1241 = vmul.f32 %v641, %v641
      %v1242 = vmul.f32 %v642, %v642
      %v1243 = vmul.f32 %v643, %v643
      %v1244 = vmul.f32 %v644, %v644
      %v1245 = vmul.f32 %v645, %v645
      %v1246 = vmul.f32 %v646, %v646
      %v1247 = vmul.f32 %v647, %v647
      %v1248 = vmul.f32 %v648, %v648
      %v1249 = vmul.f32 %v649, %v649
      %v1250 = vmul.f32 %v650, %v650
      %v1251 = vmul.f32 %v651, %v651
      %v1252 = vmul.f32 %v652, %v652
      %v1253 = vmul.f32 %v653, %v653
      %v1254 = vmul.f32 %v654, %v654
      %v1255 = vmul.f32 %v655, %v655
      %v1256 = vmul.f32 %v656, %v656
      %v1257 = vmul.f32 %v657, %v657
      %v1258 = vmul.f32 %v658, %v658
      %v1259 = vmul.f32 %v659, %v659
      %v1260 = vmul.f32 %v660, %v660
      %v1261 = vmul.f32 %v661, %v661
      %v1262 = vmul.f32 %v662, %v662
      %v1263 = vmul.f32 %v663, %v663
      %v1264 = vmul.f32 %v664, %v664
      %v1265 = vmul.f32 %v665, %v665
      %v1266 = vmul.f32 %v666, %v666
      %v1267 = vmul.f32 %v667, %v667
      %v1268 = vmul.f32 %v668, %v668
      %v1269 = vmul.f32 %v669, %v669
      %v1270 = vmul.f32 %v670, %v670
      %v1271 = vmul.f32 %v671, %v671
      %v1272 = vmul.f32 %v672, %v672
      %v1273 = vmul.f32 %v673, %v673
      %v1274 = vmul.f32 %v674, %v674
      %v1275 = vmul.f32 %v675, %v675
      %v1276 = vmul.f32 %v676, %v676
      %v1277 = vmul.f32 %v677, %v677
      %v1278 = vmul.f32 %v678, %v678
      %v1279 = vmul.f32 %v679, %v679
      %v1280 = vmul.f32 %v680, %v680
      %v1281 = vmul.f32 %v681, %v681
      %v1282 = vmul.f32 %v682, %v682
      %v1283 = vmul.f32 %v683, %v683
      %v1284 = vmul.f32 %v684, %v684
      %v1285 = vmul.f32 %v685, %v685
      %v1286 = vmul.f32 %v686, %v686
      %v1287 = vmul.f32 %v687, %v687
      %v1288 = vmul.f32 %v688, %v688
      %v1289 = vmul.f32 %v689, %v689
      %v1290 = vmul.f32 %v690, %v690
      %v1291 = vmul.f32 %v691, %v691
      %v1292 = vmul.f32 %v692, %v692
      %v1293 = vmul.f32 %v693, %v693
      %v1294 = vmul.f32 %v694, %v694
      %v1295 = vmul.f32 %v695, %v695
      %v1296 = vmul.f32 %v696, %v696
      %v1297 = vmul.f32 %v697, %v697
      %v1298 = vmul.f32 %v698, %v698
      %v1299 = vmul.f32 %v699, %v699
      %v1300 = vmul.f32 %v700, %v700
      %v1301 = vmul.f32 %v701, %v701
      %v1302 = vmul.f32 %v702, %v702
      %v1303 = vmul.f32 %v703, %v703
      %v1304 = vmul.f32 %v704, %v704
      %v1305 = vmul.f32 %v705, %v705
      %v1306 = vmul.f32 %v706, %v706
      %v1307 = vmul.f32 %v707, %v707
      %v1308 = vmul.f32 %v708, %v708
      %v1309 = vmul.f32 %v709, %v709
      %v1310 = vmul.f32 %v710, %v710
      %v1311 = vmul.f32 %v711, %v711
      %v1312 = vmul.f32 %v712, %v712
      %v1313 = vmul.f32 %v713, %v713
      %v1314 = vmul.f32 %v714, %v714
      %v1315 = vmul.f32 %v715, %v715
      %v1316 = vmul.f32 %v716, %v716
      %v1317 = vmul.f32 %v717, %v717
      %v1318 = vmul.f32 %v718, %v718
      %v1319 = vmul.f32 %v719, %v719
      %v1320 = vmul.f32 %v720, %v720
      %v1321 = vmul.f32 %v721, %v721
      %v1322 = vmul.f32 %v722, %v722
      %v1323 = vmul.f32 %v723, %v723
      %v1324 = vmul.f32 %v724, %v724
      %v1325 = vmul.f32 %v725, %v725
      %v1326 = vmul.f32 %v726, %v726
      %v1327 = vmul.f32 %v727, %v727
      %v1328 = vmul.f32 %v728, %v728
      %v1329 = vmul.f32 %v729, %v729
      %v1330 = vmul.f32 %v730, %v730
      %v1331 = vmul.f32 %v731, %v731
      %v1332 = vmul.f32 %v732, %v732
      %v1333 = vmul.f32 %v733, %v733
      %v1334 = vmul.f32 %v734, %v734
      %v1335 = vmul.f32 %v735, %v735
      %v1336 = vmul.f32 %v736, %v736
      %v1337 = vmul.f32 %v737, %v737
      %v1338 = vmul.f32 %v738, %v738
      %v1339 = vmul.f32 %v739, %v739
      %v1340 = vmul.f32 %v740, %v740
      %v1341 = vmul.f32 %v741, %v741
      %v1342 = vmul.f32 %v742, %v742
      %v1343 = vmul.f32 %v743, %v743
      %v1344 = vmul.f32 %v744, %v744
      %v1345 = vmul.f32 %v745, %v745
      %v1346 = vmul.f32 %v746, %v746
      %v1347 = vmul.f32 %v747, %v747
      %v1348 = vmul.f32 %v748, %v748
      %v1349 = vmul.f32 %v749, %v749
      %v1350 = vmul.f32 %v750, %v750
      %v1351 = vmul.f32 %v751, %v751
      %v1352 = vmul.f32 %v752, %v752
      %v1353 = vmul.f32 %v753, %v753
      %v1354 = vmul.f32 %v754, %v754
      %v1355 = vmul.f32 %v755, %v755
      %v1356 = vmul.f32 %v756, %v756
      %v1357 = vmul.f32 %v757, %v757
      %v1358 = vmul.f32 %v758, %v758
      %v1359 = vmul.f32 %v759, %v759
      %v1360 = vmul.f32 %v760, %v760
      %v1361 = vmul.f32 %v761, %v761
      %v1362 = vmul.f32 %v762, %v762
      %v1363 = vmul.f32 %v763, %v763
      %v1364 = vmul.f32 %v764, %v764
      %v1365 = vmul.f32 %v765, %v765
      %v1366 = vmul.f32 %v766, %v766
      %v1367 = vmul.f32 %v767, %v767
      %v1368 = vmul.f32 %v768, %v768
      %v1369 = vmul.f32 %v769, %v769
      %v1370 = vmul.f32 %v770, %v770
      %v1371 = vmul.f32 %v771, %v771
      %v1372 = vmul.f32 %v772, %v772
      %v1373 = vmul.f32 %v773, %v773
      %v1374 = vmul.f32 %v774, %v774
      %v1375 = vmul.f32 %v775, %v775
      %v1376 = vmul.f32 %v776, %v776
      %v1377 = vadd.f32 %v777, %v1077
      %v1378 = vadd.f32 %v778, %v1078
      %v1379 = vadd.f32 %v779, %v1079
      %v1380 = vadd.f32 %v780, %v1080
      %v1381 = vadd.f32 %v781, %v1081
      %v1382 = vadd.f32 %v782, %v1082
      %v1383 = vadd.f32 %v783, %v1083
      %v1384 = vadd.f32 %v784, %v1084
      %v1385 = vadd.f32 %v785, %v1085
      %v1386 = vadd.f32 %v786, %v1086
      %v1387 = vadd.f32 %v787, %v1087
      %v1388 = vadd.f32 %v788, %v1088
      %v1389 = vadd.f32 %v789, %v1089
      %v1390 = vadd.f32 %v790, %v1090
      %v1391 = vadd.f32 %v791, %v1091
      %v1392 = vadd.f32 %v792, %v1092
      %v1393 = vadd.f32 %v793, %v1093
      %v1394 = vadd.f32 %v794, %v1094
      %v1395 = vadd.f32 %v795, %v1095
      %v1396 = vadd.f32 %v796, %v1096
      %v1397 = vadd.f32 %v797, %v1097
      %v1398 = vadd.f32 %v798, %v1098
      %v1399 = vadd.f32 %v799, %v1099
      %v1400 = vadd.f32 %v800, %v1100
      %v1401 = vadd.f32 %v801, %v1101
      %v1402 = vadd.f32 %v802, %v1102
      %v1403 = vadd.f32 %v803, %v1103
      %v1404 = vadd.f32 %v804, %v1104
      %v1405 = vadd.f32 %v805, %v1105
      %v1406 = vadd.f32 %v806, %v1106
      %v1407 = vadd.f32 %v807, %v1107
      %v1408 = vadd.f32 %v808, %v1108
      %v1409 = vadd.f32 %v809, %v1109
      %v1410 = vadd.f32 %v810, %v1110
      %v1411 = vadd.f32 %v811, %v1111
      %v1412 = vadd.f32 %v812, %v1112
      %v1413 = vadd.f32 %v813, %v1113
      %v1414 = vadd.f32 %v814, %v1114
      %v1415 = vadd.f32 %v815, %v1115
      %v1416 = vadd.f32 %v816, %v1116
      %v1417 = vadd.f32 %v817, %v1117
      %v1418 = vadd.f32 %v818, %v1118
      %v1419 = vadd.f32 %v819, %v1119
      %v1420 = vadd.f32 %v820, %v1120
      %v1421 = vadd.f32 %v821, %v1121
      %v1422 = vadd.f32 %v822, %v1122
      %v1423 = vadd.f32 %v823, %v1123
      %v1424 = vadd.f32 %v824, %v1124
      %v1425 = vadd.f32 %v825, %v1125
      %v1426 = vadd.f32 %v826, %v1126
      %v1427 = vadd.f32 %v827, %v1127
      %v1428 = vadd.f32 %v828, %v1128
      %v1429 = vadd.f32 %v829, %v1129
      %v1430 = vadd.f32 %v830, %v1130
      %v1431 = vadd.f32 %v831, %v1131
      %v1432 = vadd.f32 %v832, %v1132
      %v1433 = vadd.f32 %v833, %v1133
      %v1434 = vadd.f32 %v834, %v1134
      %v1435 = vadd.f32 %v835, %v1135
      %v1436 = vadd.f32 %v836, %v1136
      %v1437 = vadd.f32 %v837, %v1137
      %v1438 = vadd.f32 %v838, %v1138
      %v1439 = vadd.f32 %v839, %v1139
      %v1440 = vadd.f32 %v840, %v1140
      %v1441 = vadd.f32 %v841, %v1141
      %v1442 = vadd.f32 %v842, %v1142
      %v1443 = vadd.f32 %v843, %v1143
      %v1444 = vadd.f32 %v844, %v1144
      %v1445 = vadd.f32 %v845, %v1145
      %v1446 = vadd.f32 %v846, %v1146
      %v1447 = vadd.f32 %v847, %v1147
      %v1448 = vadd.f32 %v848, %v1148
      %v1449 = vadd.f32 %v849, %v1149
      %v1450 = vadd.f32 %v850, %v1150
      %v1451 = vadd.f32 %v851, %v1151
      %v1452 = vadd.f32 %v852, %v1152
      %v1453 = vadd.f32 %v853, %v1153
      %v1454 = vadd.f32 %v854, %v1154
      %v1455 = vadd.f32 %v855, %v1155
      %v1456 = vadd.f32 %v856, %v1156
      %v1457 = vadd.f32 %v857, %v1157
      %v1458 = vadd.f32 %v858, %v1158
      %v1459 = vadd.f32 %v859, %v1159
      %v1460 = vadd.f32 %v860, %v1160
      %v1461 = vadd.f32 %v861, %v1161
      %v1462 = vadd.f32 %v862, %v1162
      %v1463 = vadd.f32 %v863, %v1163
      %v1464 = vadd.f32 %v864, %v1164
      %v1465 = vadd.f32 %v865, %v1165
      %v1466 = vadd.f32 %v866, %v1166
      %v1467 = vadd.f32 %v867, %v1167
      %v1468 = vadd.f32 %v868, %v1168
      %v1469 = vadd.f32 %v869, %v1169
      %v1470 = vadd.f32 %v870, %v1170
      %v1471 = vadd.f32 %v871, %v1171
      %v1472 = vadd.f32 %v872, %v1172
      %v1473 = vadd.f32 %v873, %v1173
      %v1474 = vadd.f32 %v874, %v1174
      %v1475 = vadd.f32 %v875, %v1175
      %v1476 = vadd.f32 %v876, %v1176
      %v1477 = vadd.f32 %v877, %v1177
      %v1478 = vadd.f32 %v878, %v1178
      %v1479 = vadd.f32 %v879, %v1179
      %v1480 = vadd.f32 %v880, %v1180
      %v1481 = vadd.f32 %v881, %v1181
      %v1482 = vadd.f32 %v882, %v1182
      %v1483 = vadd.f32 %v883, %v1183
      %v1484 = vadd.f32 %v884, %v1184
      %v1485 = vadd.f32 %v885, %v1185
      %v1486 = vadd.f32 %v886, %v1186
      %v1487 = vadd.f32 %v887, %v1187
      %v1488 = vadd.f32 %v888, %v1188
      %v1489 = vadd.f32 %v889, %v1189
      %v1490 = vadd.f32 %v890, %v1190
      %v1491 = vadd.f32 %v891, %v1191
      %v1492 = vadd.f32 %v892, %v1192
      %v1493 = vadd.f32 %v893, %v1193
      %v1494 = vadd.f32 %v894, %v1194
      %v1495 = vadd.f32 %v895, %v1195
      %v1496 = vadd.f32 %v896, %v1196
      %v1497 = vadd.f32 %v897, %v1197
      %v1498 = vadd.f32 %v898, %v1198
      %v1499 = vadd.f32 %v899, %v1199
      %v1500 = vadd.f32 %v900, %v1200
      %v1501 = vadd.f32 %v901, %v1201
      %v1502 = vadd.f32 %v902, %v1202
      %v1503 = vadd.f32 %v903, %v1203
      %v1504 = vadd.f32 %v904, %v1204
      %v1505 = vadd.f32 %v905, %v1205
      %v1506 = vadd.f32 %v906, %v1206
      %v1507 = vadd.f32 %v907, %v1207
      %v1508 = vadd.f32 %v908, %v1208
      %v1509 = vadd.f32 %v909, %v1209
      %v1510 = vadd.f32 %v910, %v1210
      %v1511 = vadd.f32 %v911, %v1211
      %v1512 = vadd.f32 %v912, %v1212
      %v1513 = vadd.f32 %v913, %v1213
      %v1514 = vadd.f32 %v914, %v1214
      %v1515 = vadd.f32 %v915, %v1215
      %v1516 = vadd.f32 %v916, %v1216
      %v1517 = vadd.f32 %v917, %v1217
      %v1518 = vadd.f32 %v918, %v1218
      %v1519 = vadd.f32 %v919, %v1219
      %v1520 = vadd.f32 %v920, %v1220
      %v1521 = vadd.f32 %v921, %v1221
      %v1522 = vadd.f32 %v922, %v1222
      %v1523 = vadd.f32 %v923, %v1223
      %v1524 = vadd.f32 %v924, %v1224
      %v1525 = vadd.f32 %v925, %v1225
      %v1526 = vadd.f32 %v926, %v1226
      %v1527 = vadd.f32 %v927, %v1227
      %v1528 = vadd.f32 %v928, %v1228
      %v1529 = vadd.f32 %v929, %v1229
      %v1530 = vadd.f32 %v930, %v1230
      %v1531 = vadd.f32 %v931, %v1231
      %v1532 = vadd.f32 %v932, %v1232
      %v1533 = vadd.f32 %v933, %v1233
      %v1534 = vadd.f32 %v934, %v1234
      %v1535 = vadd.f32 %v935, %v1235
      %v1536 = vadd.f32 %v936, %v1236
      %v1537 = vadd.f32 %v937, %v1237
      %v1538 = vadd.f32 %v938, %v1238
      %v1539 = vadd.f32 %v939, %v1239
      %v1540 = vadd.f32 %v940, %v1240
      %v1541 = vadd.f32 %v941, %v1241
      %v1542 = vadd.f32 %v942, %v1242
      %v1543 = vadd.f32 %v943, %v1243
      %v1544 = vadd.f32 %v944, %v1244
      %v1545 = vadd.f32 %v945, %v1245
      %v1546 = vadd.f32 %v946, %v1246
      %v1547 = vadd.f32 %v947, %v1247
      %v1548 = vadd.f32 %v948, %v1248
      %v1549 = vadd.f32 %v949, %v1249
      %v1550 = vadd.f32 %v950, %v1250
      %v1551 = vadd.f32 %v951, %v1251
      %v1552 = vadd.f32 %v952, %v1252
      %v1553 = vadd.f32 %v953, %v1253
      %v1554 = vadd.f32 %v954, %v1254
      %v1555 = vadd.f32 %v955, %v1255
      %v1556 = vadd.f32 %v956, %v1256
      %v1557 = vadd.f32 %v957, %v1257
      %v1558 = vadd.f32 %v958, %v1258
      %v1559 = vadd.f32 %v959, %v1259
      %v1560 = vadd.f32 %v960, %v1260
      %v1561 = vadd.f32 %v961, %v1261
      %v1562 = vadd.f32 %v962, %v1262
      %v1563 = vadd.f32 %v963, %v1263
      %v1564 = vadd.f32 %v964, %v1264
      %v1565 = vadd.f32 %v965, %v1265
      %v1566 = vadd.f32 %v966, %v1266
      %v1567 = vadd.f32 %v967, %v1267
      %v1568 = vadd.f32 %v968, %v1268
      %v1569 = vadd.f32 %v969, %v1269
      %v1570 = vadd.f32 %v970, %v1270
      %v1571 = vadd.f32 %v971, %v1271
      %v1572 = vadd.f32 %v972, %v1272
      %v1573 = vadd.f32 %v973, %v1273
      %v1574 = vadd.f32 %v974, %v1274
      %v1575 = vadd.f32 %v975, %v1275
      %v1576 = vadd.f32 %v976, %v1276
      %v1577 = vadd.f32 %v977, %v1277
      %v1578 = vadd.f32 %v978, %v1278
      %v1579 = vadd.f32 %v979, %v1279
      %v1580 = vadd.f32 %v980, %v1280
      %v1581 = vadd.f32 %v981, %v1281
      %v1582 = vadd.f32 %v982, %v1282
      %v1583 = vadd.f32 %v983, %v1283
      %v1584 = vadd.f32 %v984, %v1284
      %v1585 = vadd.f32 %v985, %v1285
      %v1586 = vadd.f32 %v986, %v1286
      %v1587 = vadd.f32 %v987, %v1287
      %v1588 = vadd.f32 %v988, %v1288
      %v1589 = vadd.f32 %v989, %v1289
      %v1590 = vadd.f32 %v990, %v1290
      %v1591 = vadd.f32 %v991, %v1291
      %v1592 = vadd.f32 %v992, %v1292
      %v1593 = vadd.f32 %v993, %v1293
      %v1594 = vadd.f32 %v994, %v1294
      %v1595 = vadd.f32 %v995, %v1295
      %v1596 = vadd.f32 %v996, %v1296
      %v1597 = vadd.f32 %v997, %v1297
      %v1598 = vadd.f32 %v998, %v1298
      %v1599 = vadd.f32 %v999, %v1299
      %v1600 = vadd.f32 %v1000, %v1300
      %v1601 = vadd.f32 %v1001, %v1301
      %v1602 = vadd.f32 %v1002, %v1302
      %v1603 = vadd.f32 %v1003, %v1303
      %v1604 = vadd.f32 %v1004, %v1304
      %v1605 = vadd.f32 %v1005, %v1305
      %v1606 = vadd.f32 %v1006, %v1306
      %v1607 = vadd.f32 %v1007, %v1307
      %v1608 = vadd.f32 %v1008, %v1308
      %v1609 = vadd.f32 %v1009, %v1309
      %v1610 = vadd.f32 %v1010, %v1310
      %v1611 = vadd.f32 %v1011, %v1311
      %v1612 = vadd.f32 %v1012, %v1312
      %v1613 = vadd.f32 %v1013, %v1313
      %v1614 = vadd.f32 %v1014, %v1314
      %v1615 = vadd.f32 %v1015, %v1315
      %v1616 = vadd.f32 %v1016, %v1316
      %v1617 = vadd.f32 %v1017, %v1317
      %v1618 = vadd.f32 %v1018, %v1318
      %v1619 = vadd.f32 %v1019, %v1319
      %v1620 = vadd.f32 %v1020, %v1320
      %v1621 = vadd.f32 %v1021, %v1321
      %v1622 = vadd.f32 %v1022, %v1322
      %v1623 = vadd.f32 %v1023, %v1323
      %v1624 = vadd.f32 %v1024, %v1324
      %v1625 = vadd.f32 %v1025, %v1325
      %v1626 = vadd.f32 %v1026, %v1326
      %v1627 = vadd.f32 %v1027, %v1327
      %v1628 = vadd.f32 %v1028, %v1328
      %v1629 = vadd.f32 %v1029, %v1329
      %v1630 = vadd.f32 %v1030, %v1330
      %v1631 = vadd.f32 %v1031, %v1331
      %v1632 = vadd.f32 %v1032, %v1332
      %v1633 = vadd.f32 %v1033, %v1333
      %v1634 = vadd.f32 %v1034, %v1334
      %v1635 = vadd.f32 %v1035, %v1335
      %v1636 = vadd.f32 %v1036, %v1336
      %v1637 = vadd.f32 %v1037, %v1337
      %v1638 = vadd.f32 %v1038, %v1338
      %v1639 = vadd.f32 %v1039, %v1339
      %v1640 = vadd.f32 %v1040, %v1340
      %v1641 = vadd.f32 %v1041, %v1341
      %v1642 = vadd.f32 %v1042, %v1342
      %v1643 = vadd.f32 %v1043, %v1343
      %v1644 = vadd.f32 %v1044, %v1344
      %v1645 = vadd.f32 %v1045, %v1345
      %v1646 = vadd.f32 %v1046, %v1346
      %v1647 = vadd.f32 %v1047, %v1347
      %v1648 = vadd.f32 %v1048, %v1348
      %v1649 = vadd.f32 %v1049, %v1349
      %v1650 = vadd.f32 %v1050, %v1350
      %v1651 = vadd.f32 %v1051, %v1351
      %v1652 = vadd.f32 %v1052, %v1352
      %v1653 = vadd.f32 %v1053, %v1353
      %v1654 = vadd.f32 %v1054, %v1354
      %v1655 = vadd.f32 %v1055, %v1355
      %v1656 = vadd.f32 %v1056, %v1356
      %v1657 = vadd.f32 %v1057, %v1357
      %v1658 = vadd.f32 %v1058, %v1358
      %v1659 = vadd.f32 %v1059, %v1359
      %v1660 = vadd.f32 %v1060, %v1360
      %v1661 = vadd.f32 %v1061, %v1361
      %v1662 = vadd.f32 %v1062, %v1362
      %v1663 = vadd.f32 %v1063, %v1363
      %v1664 = vadd.f32 %v1064, %v1364
      %v1665 = vadd.f32 %v1065, %v1365
      %v1666 = vadd.f32 %v1066, %v1366
      %v1667 = vadd.f32 %v1067, %v1367
      %v1668 = vadd.f32 %v1068, %v1368
      %v1669 = vadd.f32 %v1069, %v1369
      %v1670 = vadd.f32 %v1070, %v1370
      %v1671 = vadd.f32 %v1071, %v1371
      %v1672 = vadd.f32 %v1072, %v1372
      %v1673 = vadd.f32 %v1073, %v1373
      %v1674 = vadd.f32 %v1074, %v1374
      %v1675 = vadd.f32 %v1075, %v1375
      %v1676 = vadd.f32 %v1076, %v1376
      %v1677 = vrsqrt.pop %v1377
      %v1678 = vmul.f32 %v1377, %v1677
      %vm1679 = vcmp.eq.f32.partialorder %v1377, inf
      %v1680 = vsel %vm1679, %v1377, %v1678
      %vm1681 = vcmp.eq.f32.partialorder %v1377, 0.0
      %v1682 = vand.u32 %v1377, 2147483648
      %v1683 = vsel %vm1681, %v1682, %v1680
      %v1684 = vrsqrt.pop %v1378
      %v1685 = vmul.f32 %v1378, %v1684
      %vm1686 = vcmp.eq.f32.partialorder %v1378, inf
      %v1687 = vsel %vm1686, %v1378, %v1685
      %vm1688 = vcmp.eq.f32.partialorder %v1378, 0.0
      %v1689 = vand.u32 %v1378, 2147483648
      %v1690 = vsel %vm1688, %v1689, %v1687
      %v1691 = vrsqrt.pop %v1379
      %v1692 = vmul.f32 %v1379, %v1691
      %vm1693 = vcmp.eq.f32.partialorder %v1379, inf
      %v1694 = vsel %vm1693, %v1379, %v1692
      %vm1695 = vcmp.eq.f32.partialorder %v1379, 0.0
      %v1696 = vand.u32 %v1379, 2147483648
      %v1697 = vsel %vm1695, %v1696, %v1694
      %v1698 = vrsqrt.pop %v1380
      %v1699 = vmul.f32 %v1380, %v1698
      %vm1700 = vcmp.eq.f32.partialorder %v1380, inf
      %v1701 = vsel %vm1700, %v1380, %v1699
      %vm1702 = vcmp.eq.f32.partialorder %v1380, 0.0
      %v1703 = vand.u32 %v1380, 2147483648
      %v1704 = vsel %vm1702, %v1703, %v1701
      %v1705 = vrsqrt.pop %v1381
      %v1706 = vmul.f32 %v1381, %v1705
      %vm1707 = vcmp.eq.f32.partialorder %v1381, inf
      %v1708 = vsel %vm1707, %v1381, %v1706
      %vm1709 = vcmp.eq.f32.partialorder %v1381, 0.0
      %v1710 = vand.u32 %v1381, 2147483648
      %v1711 = vsel %vm1709, %v1710, %v1708
      %v1712 = vrsqrt.pop %v1382
      %v1713 = vmul.f32 %v1382, %v1712
      %vm1714 = vcmp.eq.f32.partialorder %v1382, inf
      %v1715 = vsel %vm1714, %v1382, %v1713
      %vm1716 = vcmp.eq.f32.partialorder %v1382, 0.0
      %v1717 = vand.u32 %v1382, 2147483648
      %v1718 = vsel %vm1716, %v1717, %v1715
      %v1719 = vrsqrt.pop %v1383
      %v1720 = vmul.f32 %v1383, %v1719
      %vm1721 = vcmp.eq.f32.partialorder %v1383, inf
      %v1722 = vsel %vm1721, %v1383, %v1720
      %vm1723 = vcmp.eq.f32.partialorder %v1383, 0.0
      %v1724 = vand.u32 %v1383, 2147483648
      %v1725 = vsel %vm1723, %v1724, %v1722
      %v1726 = vrsqrt.pop %v1384
      %v1727 = vmul.f32 %v1384, %v1726
      %vm1728 = vcmp.eq.f32.partialorder %v1384, inf
      %v1729 = vsel %vm1728, %v1384, %v1727
      %vm1730 = vcmp.eq.f32.partialorder %v1384, 0.0
      %v1731 = vand.u32 %v1384, 2147483648
      %v1732 = vsel %vm1730, %v1731, %v1729
      %v1733 = vrsqrt.pop %v1385
      %v1734 = vmul.f32 %v1385, %v1733
      %vm1735 = vcmp.eq.f32.partialorder %v1385, inf
      %v1736 = vsel %vm1735, %v1385, %v1734
      %vm1737 = vcmp.eq.f32.partialorder %v1385, 0.0
      %v1738 = vand.u32 %v1385, 2147483648
      %v1739 = vsel %vm1737, %v1738, %v1736
      %v1740 = vrsqrt.pop %v1386
      %v1741 = vmul.f32 %v1386, %v1740
      %vm1742 = vcmp.eq.f32.partialorder %v1386, inf
      %v1743 = vsel %vm1742, %v1386, %v1741
      %vm1744 = vcmp.eq.f32.partialorder %v1386, 0.0
      %v1745 = vand.u32 %v1386, 2147483648
      %v1746 = vsel %vm1744, %v1745, %v1743
      %v1747 = vrsqrt.pop %v1387
      %v1748 = vmul.f32 %v1387, %v1747
      %vm1749 = vcmp.eq.f32.partialorder %v1387, inf
      %v1750 = vsel %vm1749, %v1387, %v1748
      %vm1751 = vcmp.eq.f32.partialorder %v1387, 0.0
      %v1752 = vand.u32 %v1387, 2147483648
      %v1753 = vsel %vm1751, %v1752, %v1750
      %v1754 = vrsqrt.pop %v1388
      %v1755 = vmul.f32 %v1388, %v1754
      %vm1756 = vcmp.eq.f32.partialorder %v1388, inf
      %v1757 = vsel %vm1756, %v1388, %v1755
      %vm1758 = vcmp.eq.f32.partialorder %v1388, 0.0
      %v1759 = vand.u32 %v1388, 2147483648
      %v1760 = vsel %vm1758, %v1759, %v1757
      %v1761 = vrsqrt.pop %v1389
      %v1762 = vmul.f32 %v1389, %v1761
      %vm1763 = vcmp.eq.f32.partialorder %v1389, inf
      %v1764 = vsel %vm1763, %v1389, %v1762
      %vm1765 = vcmp.eq.f32.partialorder %v1389, 0.0
      %v1766 = vand.u32 %v1389, 2147483648
      %v1767 = vsel %vm1765, %v1766, %v1764
      %v1768 = vrsqrt.pop %v1390
      %v1769 = vmul.f32 %v1390, %v1768
      %vm1770 = vcmp.eq.f32.partialorder %v1390, inf
      %v1771 = vsel %vm1770, %v1390, %v1769
      %vm1772 = vcmp.eq.f32.partialorder %v1390, 0.0
      %v1773 = vand.u32 %v1390, 2147483648
      %v1774 = vsel %vm1772, %v1773, %v1771
      %v1775 = vrsqrt.pop %v1391
      %v1776 = vmul.f32 %v1391, %v1775
      %vm1777 = vcmp.eq.f32.partialorder %v1391, inf
      %v1778 = vsel %vm1777, %v1391, %v1776
      %vm1779 = vcmp.eq.f32.partialorder %v1391, 0.0
      %v1780 = vand.u32 %v1391, 2147483648
      %v1781 = vsel %vm1779, %v1780, %v1778
      %v1782 = vrsqrt.pop %v1392
      %v1783 = vmul.f32 %v1392, %v1782
      %vm1784 = vcmp.eq.f32.partialorder %v1392, inf
      %v1785 = vsel %vm1784, %v1392, %v1783
      %vm1786 = vcmp.eq.f32.partialorder %v1392, 0.0
      %v1787 = vand.u32 %v1392, 2147483648
      %v1788 = vsel %vm1786, %v1787, %v1785
      %v1789 = vrsqrt.pop %v1393
      %v1790 = vmul.f32 %v1393, %v1789
      %vm1791 = vcmp.eq.f32.partialorder %v1393, inf
      %v1792 = vsel %vm1791, %v1393, %v1790
      %vm1793 = vcmp.eq.f32.partialorder %v1393, 0.0
      %v1794 = vand.u32 %v1393, 2147483648
      %v1795 = vsel %vm1793, %v1794, %v1792
      %v1796 = vrsqrt.pop %v1394
      %v1797 = vmul.f32 %v1394, %v1796
      %vm1798 = vcmp.eq.f32.partialorder %v1394, inf
      %v1799 = vsel %vm1798, %v1394, %v1797
      %vm1800 = vcmp.eq.f32.partialorder %v1394, 0.0
      %v1801 = vand.u32 %v1394, 2147483648
      %v1802 = vsel %vm1800, %v1801, %v1799
      %v1803 = vrsqrt.pop %v1395
      %v1804 = vmul.f32 %v1395, %v1803
      %vm1805 = vcmp.eq.f32.partialorder %v1395, inf
      %v1806 = vsel %vm1805, %v1395, %v1804
      %vm1807 = vcmp.eq.f32.partialorder %v1395, 0.0
      %v1808 = vand.u32 %v1395, 2147483648
      %v1809 = vsel %vm1807, %v1808, %v1806
      %v1810 = vrsqrt.pop %v1396
      %v1811 = vmul.f32 %v1396, %v1810
      %vm1812 = vcmp.eq.f32.partialorder %v1396, inf
      %v1813 = vsel %vm1812, %v1396, %v1811
      %vm1814 = vcmp.eq.f32.partialorder %v1396, 0.0
      %v1815 = vand.u32 %v1396, 2147483648
      %v1816 = vsel %vm1814, %v1815, %v1813
      %v1817 = vrsqrt.pop %v1397
      %v1818 = vmul.f32 %v1397, %v1817
      %vm1819 = vcmp.eq.f32.partialorder %v1397, inf
      %v1820 = vsel %vm1819, %v1397, %v1818
      %vm1821 = vcmp.eq.f32.partialorder %v1397, 0.0
      %v1822 = vand.u32 %v1397, 2147483648
      %v1823 = vsel %vm1821, %v1822, %v1820
      %v1824 = vrsqrt.pop %v1398
      %v1825 = vmul.f32 %v1398, %v1824
      %vm1826 = vcmp.eq.f32.partialorder %v1398, inf
      %v1827 = vsel %vm1826, %v1398, %v1825
      %vm1828 = vcmp.eq.f32.partialorder %v1398, 0.0
      %v1829 = vand.u32 %v1398, 2147483648
      %v1830 = vsel %vm1828, %v1829, %v1827
      %v1831 = vrsqrt.pop %v1399
      %v1832 = vmul.f32 %v1399, %v1831
      %vm1833 = vcmp.eq.f32.partialorder %v1399, inf
      %v1834 = vsel %vm1833, %v1399, %v1832
      %vm1835 = vcmp.eq.f32.partialorder %v1399, 0.0
      %v1836 = vand.u32 %v1399, 2147483648
      %v1837 = vsel %vm1835, %v1836, %v1834
      %v1838 = vrsqrt.pop %v1400
      %v1839 = vmul.f32 %v1400, %v1838
      %vm1840 = vcmp.eq.f32.partialorder %v1400, inf
      %v1841 = vsel %vm1840, %v1400, %v1839
      %vm1842 = vcmp.eq.f32.partialorder %v1400, 0.0
      %v1843 = vand.u32 %v1400, 2147483648
      %v1844 = vsel %vm1842, %v1843, %v1841
      %v1845 = vrsqrt.pop %v1401
      %v1846 = vmul.f32 %v1401, %v1845
      %vm1847 = vcmp.eq.f32.partialorder %v1401, inf
      %v1848 = vsel %vm1847, %v1401, %v1846
      %vm1849 = vcmp.eq.f32.partialorder %v1401, 0.0
      %v1850 = vand.u32 %v1401, 2147483648
      %v1851 = vsel %vm1849, %v1850, %v1848
      %v1852 = vrsqrt.pop %v1402
      %v1853 = vmul.f32 %v1402, %v1852
      %vm1854 = vcmp.eq.f32.partialorder %v1402, inf
      %v1855 = vsel %vm1854, %v1402, %v1853
      %vm1856 = vcmp.eq.f32.partialorder %v1402, 0.0
      %v1857 = vand.u32 %v1402, 2147483648
      %v1858 = vsel %vm1856, %v1857, %v1855
      %v1859 = vrsqrt.pop %v1403
      %v1860 = vmul.f32 %v1403, %v1859
      %vm1861 = vcmp.eq.f32.partialorder %v1403, inf
      %v1862 = vsel %vm1861, %v1403, %v1860
      %vm1863 = vcmp.eq.f32.partialorder %v1403, 0.0
      %v1864 = vand.u32 %v1403, 2147483648
      %v1865 = vsel %vm1863, %v1864, %v1862
      %v1866 = vrsqrt.pop %v1404
      %v1867 = vmul.f32 %v1404, %v1866
      %vm1868 = vcmp.eq.f32.partialorder %v1404, inf
      %v1869 = vsel %vm1868, %v1404, %v1867
      %vm1870 = vcmp.eq.f32.partialorder %v1404, 0.0
      %v1871 = vand.u32 %v1404, 2147483648
      %v1872 = vsel %vm1870, %v1871, %v1869
      %v1873 = vrsqrt.pop %v1405
      %v1874 = vmul.f32 %v1405, %v1873
      %vm1875 = vcmp.eq.f32.partialorder %v1405, inf
      %v1876 = vsel %vm1875, %v1405, %v1874
      %vm1877 = vcmp.eq.f32.partialorder %v1405, 0.0
      %v1878 = vand.u32 %v1405, 2147483648
      %v1879 = vsel %vm1877, %v1878, %v1876
      %v1880 = vrsqrt.pop %v1406
      %v1881 = vmul.f32 %v1406, %v1880
      %vm1882 = vcmp.eq.f32.partialorder %v1406, inf
      %v1883 = vsel %vm1882, %v1406, %v1881
      %vm1884 = vcmp.eq.f32.partialorder %v1406, 0.0
      %v1885 = vand.u32 %v1406, 2147483648
      %v1886 = vsel %vm1884, %v1885, %v1883
      %v1887 = vrsqrt.pop %v1407
      %v1888 = vmul.f32 %v1407, %v1887
      %vm1889 = vcmp.eq.f32.partialorder %v1407, inf
      %v1890 = vsel %vm1889, %v1407, %v1888
      %vm1891 = vcmp.eq.f32.partialorder %v1407, 0.0
      %v1892 = vand.u32 %v1407, 2147483648
      %v1893 = vsel %vm1891, %v1892, %v1890
      %v1894 = vrsqrt.pop %v1408
      %v1895 = vmul.f32 %v1408, %v1894
      %vm1896 = vcmp.eq.f32.partialorder %v1408, inf
      %v1897 = vsel %vm1896, %v1408, %v1895
      %vm1898 = vcmp.eq.f32.partialorder %v1408, 0.0
      %v1899 = vand.u32 %v1408, 2147483648
      %v1900 = vsel %vm1898, %v1899, %v1897
      %v1901 = vrsqrt.pop %v1409
      %v1902 = vmul.f32 %v1409, %v1901
      %vm1903 = vcmp.eq.f32.partialorder %v1409, inf
      %v1904 = vsel %vm1903, %v1409, %v1902
      %vm1905 = vcmp.eq.f32.partialorder %v1409, 0.0
      %v1906 = vand.u32 %v1409, 2147483648
      %v1907 = vsel %vm1905, %v1906, %v1904
      %v1908 = vrsqrt.pop %v1410
      %v1909 = vmul.f32 %v1410, %v1908
      %vm1910 = vcmp.eq.f32.partialorder %v1410, inf
      %v1911 = vsel %vm1910, %v1410, %v1909
      %vm1912 = vcmp.eq.f32.partialorder %v1410, 0.0
      %v1913 = vand.u32 %v1410, 2147483648
      %v1914 = vsel %vm1912, %v1913, %v1911
      %v1915 = vrsqrt.pop %v1411
      %v1916 = vmul.f32 %v1411, %v1915
      %vm1917 = vcmp.eq.f32.partialorder %v1411, inf
      %v1918 = vsel %vm1917, %v1411, %v1916
      %vm1919 = vcmp.eq.f32.partialorder %v1411, 0.0
      %v1920 = vand.u32 %v1411, 2147483648
      %v1921 = vsel %vm1919, %v1920, %v1918
      %v1922 = vrsqrt.pop %v1412
      %v1923 = vmul.f32 %v1412, %v1922
      %vm1924 = vcmp.eq.f32.partialorder %v1412, inf
      %v1925 = vsel %vm1924, %v1412, %v1923
      %vm1926 = vcmp.eq.f32.partialorder %v1412, 0.0
      %v1927 = vand.u32 %v1412, 2147483648
      %v1928 = vsel %vm1926, %v1927, %v1925
      %v1929 = vrsqrt.pop %v1413
      %v1930 = vmul.f32 %v1413, %v1929
      %vm1931 = vcmp.eq.f32.partialorder %v1413, inf
      %v1932 = vsel %vm1931, %v1413, %v1930
      %vm1933 = vcmp.eq.f32.partialorder %v1413, 0.0
      %v1934 = vand.u32 %v1413, 2147483648
      %v1935 = vsel %vm1933, %v1934, %v1932
      %v1936 = vrsqrt.pop %v1414
      %v1937 = vmul.f32 %v1414, %v1936
      %vm1938 = vcmp.eq.f32.partialorder %v1414, inf
      %v1939 = vsel %vm1938, %v1414, %v1937
      %vm1940 = vcmp.eq.f32.partialorder %v1414, 0.0
      %v1941 = vand.u32 %v1414, 2147483648
      %v1942 = vsel %vm1940, %v1941, %v1939
      %v1943 = vrsqrt.pop %v1415
      %v1944 = vmul.f32 %v1415, %v1943
      %vm1945 = vcmp.eq.f32.partialorder %v1415, inf
      %v1946 = vsel %vm1945, %v1415, %v1944
      %vm1947 = vcmp.eq.f32.partialorder %v1415, 0.0
      %v1948 = vand.u32 %v1415, 2147483648
      %v1949 = vsel %vm1947, %v1948, %v1946
      %v1950 = vrsqrt.pop %v1416
      %v1951 = vmul.f32 %v1416, %v1950
      %vm1952 = vcmp.eq.f32.partialorder %v1416, inf
      %v1953 = vsel %vm1952, %v1416, %v1951
      %vm1954 = vcmp.eq.f32.partialorder %v1416, 0.0
      %v1955 = vand.u32 %v1416, 2147483648
      %v1956 = vsel %vm1954, %v1955, %v1953
      %v1957 = vrsqrt.pop %v1417
      %v1958 = vmul.f32 %v1417, %v1957
      %vm1959 = vcmp.eq.f32.partialorder %v1417, inf
      %v1960 = vsel %vm1959, %v1417, %v1958
      %vm1961 = vcmp.eq.f32.partialorder %v1417, 0.0
      %v1962 = vand.u32 %v1417, 2147483648
      %v1963 = vsel %vm1961, %v1962, %v1960
      %v1964 = vrsqrt.pop %v1418
      %v1965 = vmul.f32 %v1418, %v1964
      %vm1966 = vcmp.eq.f32.partialorder %v1418, inf
      %v1967 = vsel %vm1966, %v1418, %v1965
      %vm1968 = vcmp.eq.f32.partialorder %v1418, 0.0
      %v1969 = vand.u32 %v1418, 2147483648
      %v1970 = vsel %vm1968, %v1969, %v1967
      %v1971 = vrsqrt.pop %v1419
      %v1972 = vmul.f32 %v1419, %v1971
      %vm1973 = vcmp.eq.f32.partialorder %v1419, inf
      %v1974 = vsel %vm1973, %v1419, %v1972
      %vm1975 = vcmp.eq.f32.partialorder %v1419, 0.0
      %v1976 = vand.u32 %v1419, 2147483648
      %v1977 = vsel %vm1975, %v1976, %v1974
      %v1978 = vrsqrt.pop %v1420
      %v1979 = vmul.f32 %v1420, %v1978
      %vm1980 = vcmp.eq.f32.partialorder %v1420, inf
      %v1981 = vsel %vm1980, %v1420, %v1979
      %vm1982 = vcmp.eq.f32.partialorder %v1420, 0.0
      %v1983 = vand.u32 %v1420, 2147483648
      %v1984 = vsel %vm1982, %v1983, %v1981
      %v1985 = vrsqrt.pop %v1421
      %v1986 = vmul.f32 %v1421, %v1985
      %vm1987 = vcmp.eq.f32.partialorder %v1421, inf
      %v1988 = vsel %vm1987, %v1421, %v1986
      %vm1989 = vcmp.eq.f32.partialorder %v1421, 0.0
      %v1990 = vand.u32 %v1421, 2147483648
      %v1991 = vsel %vm1989, %v1990, %v1988
      %v1992 = vrsqrt.pop %v1422
      %v1993 = vmul.f32 %v1422, %v1992
      %vm1994 = vcmp.eq.f32.partialorder %v1422, inf
      %v1995 = vsel %vm1994, %v1422, %v1993
      %vm1996 = vcmp.eq.f32.partialorder %v1422, 0.0
      %v1997 = vand.u32 %v1422, 2147483648
      %v1998 = vsel %vm1996, %v1997, %v1995
      %v1999 = vrsqrt.pop %v1423
      %v2000 = vmul.f32 %v1423, %v1999
      %vm2001 = vcmp.eq.f32.partialorder %v1423, inf
      %v2002 = vsel %vm2001, %v1423, %v2000
      %vm2003 = vcmp.eq.f32.partialorder %v1423, 0.0
      %v2004 = vand.u32 %v1423, 2147483648
      %v2005 = vsel %vm2003, %v2004, %v2002
      %v2006 = vrsqrt.pop %v1424
      %v2007 = vmul.f32 %v1424, %v2006
      %vm2008 = vcmp.eq.f32.partialorder %v1424, inf
      %v2009 = vsel %vm2008, %v1424, %v2007
      %vm2010 = vcmp.eq.f32.partialorder %v1424, 0.0
      %v2011 = vand.u32 %v1424, 2147483648
      %v2012 = vsel %vm2010, %v2011, %v2009
      %v2013 = vrsqrt.pop %v1425
      %v2014 = vmul.f32 %v1425, %v2013
      %vm2015 = vcmp.eq.f32.partialorder %v1425, inf
      %v2016 = vsel %vm2015, %v1425, %v2014
      %vm2017 = vcmp.eq.f32.partialorder %v1425, 0.0
      %v2018 = vand.u32 %v1425, 2147483648
      %v2019 = vsel %vm2017, %v2018, %v2016
      %v2020 = vrsqrt.pop %v1426
      %v2021 = vmul.f32 %v1426, %v2020
      %vm2022 = vcmp.eq.f32.partialorder %v1426, inf
      %v2023 = vsel %vm2022, %v1426, %v2021
      %vm2024 = vcmp.eq.f32.partialorder %v1426, 0.0
      %v2025 = vand.u32 %v1426, 2147483648
      %v2026 = vsel %vm2024, %v2025, %v2023
      %v2027 = vrsqrt.pop %v1427
      %v2028 = vmul.f32 %v1427, %v2027
      %vm2029 = vcmp.eq.f32.partialorder %v1427, inf
      %v2030 = vsel %vm2029, %v1427, %v2028
      %vm2031 = vcmp.eq.f32.partialorder %v1427, 0.0
      %v2032 = vand.u32 %v1427, 2147483648
      %v2033 = vsel %vm2031, %v2032, %v2030
      %v2034 = vrsqrt.pop %v1428
      %v2035 = vmul.f32 %v1428, %v2034
      %vm2036 = vcmp.eq.f32.partialorder %v1428, inf
      %v2037 = vsel %vm2036, %v1428, %v2035
      %vm2038 = vcmp.eq.f32.partialorder %v1428, 0.0
      %v2039 = vand.u32 %v1428, 2147483648
      %v2040 = vsel %vm2038, %v2039, %v2037
      %v2041 = vrsqrt.pop %v1429
      %v2042 = vmul.f32 %v1429, %v2041
      %vm2043 = vcmp.eq.f32.partialorder %v1429, inf
      %v2044 = vsel %vm2043, %v1429, %v2042
      %vm2045 = vcmp.eq.f32.partialorder %v1429, 0.0
      %v2046 = vand.u32 %v1429, 2147483648
      %v2047 = vsel %vm2045, %v2046, %v2044
      %v2048 = vrsqrt.pop %v1430
      %v2049 = vmul.f32 %v1430, %v2048
      %vm2050 = vcmp.eq.f32.partialorder %v1430, inf
      %v2051 = vsel %vm2050, %v1430, %v2049
      %vm2052 = vcmp.eq.f32.partialorder %v1430, 0.0
      %v2053 = vand.u32 %v1430, 2147483648
      %v2054 = vsel %vm2052, %v2053, %v2051
      %v2055 = vrsqrt.pop %v1431
      %v2056 = vmul.f32 %v1431, %v2055
      %vm2057 = vcmp.eq.f32.partialorder %v1431, inf
      %v2058 = vsel %vm2057, %v1431, %v2056
      %vm2059 = vcmp.eq.f32.partialorder %v1431, 0.0
      %v2060 = vand.u32 %v1431, 2147483648
      %v2061 = vsel %vm2059, %v2060, %v2058
      %v2062 = vrsqrt.pop %v1432
      %v2063 = vmul.f32 %v1432, %v2062
      %vm2064 = vcmp.eq.f32.partialorder %v1432, inf
      %v2065 = vsel %vm2064, %v1432, %v2063
      %vm2066 = vcmp.eq.f32.partialorder %v1432, 0.0
      %v2067 = vand.u32 %v1432, 2147483648
      %v2068 = vsel %vm2066, %v2067, %v2065
      %v2069 = vrsqrt.pop %v1433
      %v2070 = vmul.f32 %v1433, %v2069
      %vm2071 = vcmp.eq.f32.partialorder %v1433, inf
      %v2072 = vsel %vm2071, %v1433, %v2070
      %vm2073 = vcmp.eq.f32.partialorder %v1433, 0.0
      %v2074 = vand.u32 %v1433, 2147483648
      %v2075 = vsel %vm2073, %v2074, %v2072
      %v2076 = vrsqrt.pop %v1434
      %v2077 = vmul.f32 %v1434, %v2076
      %vm2078 = vcmp.eq.f32.partialorder %v1434, inf
      %v2079 = vsel %vm2078, %v1434, %v2077
      %vm2080 = vcmp.eq.f32.partialorder %v1434, 0.0
      %v2081 = vand.u32 %v1434, 2147483648
      %v2082 = vsel %vm2080, %v2081, %v2079
      %v2083 = vrsqrt.pop %v1435
      %v2084 = vmul.f32 %v1435, %v2083
      %vm2085 = vcmp.eq.f32.partialorder %v1435, inf
      %v2086 = vsel %vm2085, %v1435, %v2084
      %vm2087 = vcmp.eq.f32.partialorder %v1435, 0.0
      %v2088 = vand.u32 %v1435, 2147483648
      %v2089 = vsel %vm2087, %v2088, %v2086
      %v2090 = vrsqrt.pop %v1436
      %v2091 = vmul.f32 %v1436, %v2090
      %vm2092 = vcmp.eq.f32.partialorder %v1436, inf
      %v2093 = vsel %vm2092, %v1436, %v2091
      %vm2094 = vcmp.eq.f32.partialorder %v1436, 0.0
      %v2095 = vand.u32 %v1436, 2147483648
      %v2096 = vsel %vm2094, %v2095, %v2093
      %v2097 = vrsqrt.pop %v1437
      %v2098 = vmul.f32 %v1437, %v2097
      %vm2099 = vcmp.eq.f32.partialorder %v1437, inf
      %v2100 = vsel %vm2099, %v1437, %v2098
      %vm2101 = vcmp.eq.f32.partialorder %v1437, 0.0
      %v2102 = vand.u32 %v1437, 2147483648
      %v2103 = vsel %vm2101, %v2102, %v2100
      %v2104 = vrsqrt.pop %v1438
      %v2105 = vmul.f32 %v1438, %v2104
      %vm2106 = vcmp.eq.f32.partialorder %v1438, inf
      %v2107 = vsel %vm2106, %v1438, %v2105
      %vm2108 = vcmp.eq.f32.partialorder %v1438, 0.0
      %v2109 = vand.u32 %v1438, 2147483648
      %v2110 = vsel %vm2108, %v2109, %v2107
      %v2111 = vrsqrt.pop %v1439
      %v2112 = vmul.f32 %v1439, %v2111
      %vm2113 = vcmp.eq.f32.partialorder %v1439, inf
      %v2114 = vsel %vm2113, %v1439, %v2112
      %vm2115 = vcmp.eq.f32.partialorder %v1439, 0.0
      %v2116 = vand.u32 %v1439, 2147483648
      %v2117 = vsel %vm2115, %v2116, %v2114
      %v2118 = vrsqrt.pop %v1440
      %v2119 = vmul.f32 %v1440, %v2118
      %vm2120 = vcmp.eq.f32.partialorder %v1440, inf
      %v2121 = vsel %vm2120, %v1440, %v2119
      %vm2122 = vcmp.eq.f32.partialorder %v1440, 0.0
      %v2123 = vand.u32 %v1440, 2147483648
      %v2124 = vsel %vm2122, %v2123, %v2121
      %v2125 = vrsqrt.pop %v1441
      %v2126 = vmul.f32 %v1441, %v2125
      %vm2127 = vcmp.eq.f32.partialorder %v1441, inf
      %v2128 = vsel %vm2127, %v1441, %v2126
      %vm2129 = vcmp.eq.f32.partialorder %v1441, 0.0
      %v2130 = vand.u32 %v1441, 2147483648
      %v2131 = vsel %vm2129, %v2130, %v2128
      %v2132 = vrsqrt.pop %v1442
      %v2133 = vmul.f32 %v1442, %v2132
      %vm2134 = vcmp.eq.f32.partialorder %v1442, inf
      %v2135 = vsel %vm2134, %v1442, %v2133
      %vm2136 = vcmp.eq.f32.partialorder %v1442, 0.0
      %v2137 = vand.u32 %v1442, 2147483648
      %v2138 = vsel %vm2136, %v2137, %v2135
      %v2139 = vrsqrt.pop %v1443
      %v2140 = vmul.f32 %v1443, %v2139
      %vm2141 = vcmp.eq.f32.partialorder %v1443, inf
      %v2142 = vsel %vm2141, %v1443, %v2140
      %vm2143 = vcmp.eq.f32.partialorder %v1443, 0.0
      %v2144 = vand.u32 %v1443, 2147483648
      %v2145 = vsel %vm2143, %v2144, %v2142
      %v2146 = vrsqrt.pop %v1444
      %v2147 = vmul.f32 %v1444, %v2146
      %vm2148 = vcmp.eq.f32.partialorder %v1444, inf
      %v2149 = vsel %vm2148, %v1444, %v2147
      %vm2150 = vcmp.eq.f32.partialorder %v1444, 0.0
      %v2151 = vand.u32 %v1444, 2147483648
      %v2152 = vsel %vm2150, %v2151, %v2149
      %v2153 = vrsqrt.pop %v1445
      %v2154 = vmul.f32 %v1445, %v2153
      %vm2155 = vcmp.eq.f32.partialorder %v1445, inf
      %v2156 = vsel %vm2155, %v1445, %v2154
      %vm2157 = vcmp.eq.f32.partialorder %v1445, 0.0
      %v2158 = vand.u32 %v1445, 2147483648
      %v2159 = vsel %vm2157, %v2158, %v2156
      %v2160 = vrsqrt.pop %v1446
      %v2161 = vmul.f32 %v1446, %v2160
      %vm2162 = vcmp.eq.f32.partialorder %v1446, inf
      %v2163 = vsel %vm2162, %v1446, %v2161
      %vm2164 = vcmp.eq.f32.partialorder %v1446, 0.0
      %v2165 = vand.u32 %v1446, 2147483648
      %v2166 = vsel %vm2164, %v2165, %v2163
      %v2167 = vrsqrt.pop %v1447
      %v2168 = vmul.f32 %v1447, %v2167
      %vm2169 = vcmp.eq.f32.partialorder %v1447, inf
      %v2170 = vsel %vm2169, %v1447, %v2168
      %vm2171 = vcmp.eq.f32.partialorder %v1447, 0.0
      %v2172 = vand.u32 %v1447, 2147483648
      %v2173 = vsel %vm2171, %v2172, %v2170
      %v2174 = vrsqrt.pop %v1448
      %v2175 = vmul.f32 %v1448, %v2174
      %vm2176 = vcmp.eq.f32.partialorder %v1448, inf
      %v2177 = vsel %vm2176, %v1448, %v2175
      %vm2178 = vcmp.eq.f32.partialorder %v1448, 0.0
      %v2179 = vand.u32 %v1448, 2147483648
      %v2180 = vsel %vm2178, %v2179, %v2177
      %v2181 = vrsqrt.pop %v1449
      %v2182 = vmul.f32 %v1449, %v2181
      %vm2183 = vcmp.eq.f32.partialorder %v1449, inf
      %v2184 = vsel %vm2183, %v1449, %v2182
      %vm2185 = vcmp.eq.f32.partialorder %v1449, 0.0
      %v2186 = vand.u32 %v1449, 2147483648
      %v2187 = vsel %vm2185, %v2186, %v2184
      %v2188 = vrsqrt.pop %v1450
      %v2189 = vmul.f32 %v1450, %v2188
      %vm2190 = vcmp.eq.f32.partialorder %v1450, inf
      %v2191 = vsel %vm2190, %v1450, %v2189
      %vm2192 = vcmp.eq.f32.partialorder %v1450, 0.0
      %v2193 = vand.u32 %v1450, 2147483648
      %v2194 = vsel %vm2192, %v2193, %v2191
      %v2195 = vrsqrt.pop %v1451
      %v2196 = vmul.f32 %v1451, %v2195
      %vm2197 = vcmp.eq.f32.partialorder %v1451, inf
      %v2198 = vsel %vm2197, %v1451, %v2196
      %vm2199 = vcmp.eq.f32.partialorder %v1451, 0.0
      %v2200 = vand.u32 %v1451, 2147483648
      %v2201 = vsel %vm2199, %v2200, %v2198
      %v2202 = vrsqrt.pop %v1452
      %v2203 = vmul.f32 %v1452, %v2202
      %vm2204 = vcmp.eq.f32.partialorder %v1452, inf
      %v2205 = vsel %vm2204, %v1452, %v2203
      %vm2206 = vcmp.eq.f32.partialorder %v1452, 0.0
      %v2207 = vand.u32 %v1452, 2147483648
      %v2208 = vsel %vm2206, %v2207, %v2205
      %v2209 = vrsqrt.pop %v1453
      %v2210 = vmul.f32 %v1453, %v2209
      %vm2211 = vcmp.eq.f32.partialorder %v1453, inf
      %v2212 = vsel %vm2211, %v1453, %v2210
      %vm2213 = vcmp.eq.f32.partialorder %v1453, 0.0
      %v2214 = vand.u32 %v1453, 2147483648
      %v2215 = vsel %vm2213, %v2214, %v2212
      %v2216 = vrsqrt.pop %v1454
      %v2217 = vmul.f32 %v1454, %v2216
      %vm2218 = vcmp.eq.f32.partialorder %v1454, inf
      %v2219 = vsel %vm2218, %v1454, %v2217
      %vm2220 = vcmp.eq.f32.partialorder %v1454, 0.0
      %v2221 = vand.u32 %v1454, 2147483648
      %v2222 = vsel %vm2220, %v2221, %v2219
      %v2223 = vrsqrt.pop %v1455
      %v2224 = vmul.f32 %v1455, %v2223
      %vm2225 = vcmp.eq.f32.partialorder %v1455, inf
      %v2226 = vsel %vm2225, %v1455, %v2224
      %vm2227 = vcmp.eq.f32.partialorder %v1455, 0.0
      %v2228 = vand.u32 %v1455, 2147483648
      %v2229 = vsel %vm2227, %v2228, %v2226
      %v2230 = vrsqrt.pop %v1456
      %v2231 = vmul.f32 %v1456, %v2230
      %vm2232 = vcmp.eq.f32.partialorder %v1456, inf
      %v2233 = vsel %vm2232, %v1456, %v2231
      %vm2234 = vcmp.eq.f32.partialorder %v1456, 0.0
      %v2235 = vand.u32 %v1456, 2147483648
      %v2236 = vsel %vm2234, %v2235, %v2233
      %v2237 = vrsqrt.pop %v1457
      %v2238 = vmul.f32 %v1457, %v2237
      %vm2239 = vcmp.eq.f32.partialorder %v1457, inf
      %v2240 = vsel %vm2239, %v1457, %v2238
      %vm2241 = vcmp.eq.f32.partialorder %v1457, 0.0
      %v2242 = vand.u32 %v1457, 2147483648
      %v2243 = vsel %vm2241, %v2242, %v2240
      %v2244 = vrsqrt.pop %v1458
      %v2245 = vmul.f32 %v1458, %v2244
      %vm2246 = vcmp.eq.f32.partialorder %v1458, inf
      %v2247 = vsel %vm2246, %v1458, %v2245
      %vm2248 = vcmp.eq.f32.partialorder %v1458, 0.0
      %v2249 = vand.u32 %v1458, 2147483648
      %v2250 = vsel %vm2248, %v2249, %v2247
      %v2251 = vrsqrt.pop %v1459
      %v2252 = vmul.f32 %v1459, %v2251
      %vm2253 = vcmp.eq.f32.partialorder %v1459, inf
      %v2254 = vsel %vm2253, %v1459, %v2252
      %vm2255 = vcmp.eq.f32.partialorder %v1459, 0.0
      %v2256 = vand.u32 %v1459, 2147483648
      %v2257 = vsel %vm2255, %v2256, %v2254
      %v2258 = vrsqrt.pop %v1460
      %v2259 = vmul.f32 %v1460, %v2258
      %vm2260 = vcmp.eq.f32.partialorder %v1460, inf
      %v2261 = vsel %vm2260, %v1460, %v2259
      %vm2262 = vcmp.eq.f32.partialorder %v1460, 0.0
      %v2263 = vand.u32 %v1460, 2147483648
      %v2264 = vsel %vm2262, %v2263, %v2261
      %v2265 = vrsqrt.pop %v1461
      %v2266 = vmul.f32 %v1461, %v2265
      %vm2267 = vcmp.eq.f32.partialorder %v1461, inf
      %v2268 = vsel %vm2267, %v1461, %v2266
      %vm2269 = vcmp.eq.f32.partialorder %v1461, 0.0
      %v2270 = vand.u32 %v1461, 2147483648
      %v2271 = vsel %vm2269, %v2270, %v2268
      %v2272 = vrsqrt.pop %v1462
      %v2273 = vmul.f32 %v1462, %v2272
      %vm2274 = vcmp.eq.f32.partialorder %v1462, inf
      %v2275 = vsel %vm2274, %v1462, %v2273
      %vm2276 = vcmp.eq.f32.partialorder %v1462, 0.0
      %v2277 = vand.u32 %v1462, 2147483648
      %v2278 = vsel %vm2276, %v2277, %v2275
      %v2279 = vrsqrt.pop %v1463
      %v2280 = vmul.f32 %v1463, %v2279
      %vm2281 = vcmp.eq.f32.partialorder %v1463, inf
      %v2282 = vsel %vm2281, %v1463, %v2280
      %vm2283 = vcmp.eq.f32.partialorder %v1463, 0.0
      %v2284 = vand.u32 %v1463, 2147483648
      %v2285 = vsel %vm2283, %v2284, %v2282
      %v2286 = vrsqrt.pop %v1464
      %v2287 = vmul.f32 %v1464, %v2286
      %vm2288 = vcmp.eq.f32.partialorder %v1464, inf
      %v2289 = vsel %vm2288, %v1464, %v2287
      %vm2290 = vcmp.eq.f32.partialorder %v1464, 0.0
      %v2291 = vand.u32 %v1464, 2147483648
      %v2292 = vsel %vm2290, %v2291, %v2289
      %v2293 = vrsqrt.pop %v1465
      %v2294 = vmul.f32 %v1465, %v2293
      %vm2295 = vcmp.eq.f32.partialorder %v1465, inf
      %v2296 = vsel %vm2295, %v1465, %v2294
      %vm2297 = vcmp.eq.f32.partialorder %v1465, 0.0
      %v2298 = vand.u32 %v1465, 2147483648
      %v2299 = vsel %vm2297, %v2298, %v2296
      %v2300 = vrsqrt.pop %v1466
      %v2301 = vmul.f32 %v1466, %v2300
      %vm2302 = vcmp.eq.f32.partialorder %v1466, inf
      %v2303 = vsel %vm2302, %v1466, %v2301
      %vm2304 = vcmp.eq.f32.partialorder %v1466, 0.0
      %v2305 = vand.u32 %v1466, 2147483648
      %v2306 = vsel %vm2304, %v2305, %v2303
      %v2307 = vrsqrt.pop %v1467
      %v2308 = vmul.f32 %v1467, %v2307
      %vm2309 = vcmp.eq.f32.partialorder %v1467, inf
      %v2310 = vsel %vm2309, %v1467, %v2308
      %vm2311 = vcmp.eq.f32.partialorder %v1467, 0.0
      %v2312 = vand.u32 %v1467, 2147483648
      %v2313 = vsel %vm2311, %v2312, %v2310
      %v2314 = vrsqrt.pop %v1468
      %v2315 = vmul.f32 %v1468, %v2314
      %vm2316 = vcmp.eq.f32.partialorder %v1468, inf
      %v2317 = vsel %vm2316, %v1468, %v2315
      %vm2318 = vcmp.eq.f32.partialorder %v1468, 0.0
      %v2319 = vand.u32 %v1468, 2147483648
      %v2320 = vsel %vm2318, %v2319, %v2317
      %v2321 = vrsqrt.pop %v1469
      %v2322 = vmul.f32 %v1469, %v2321
      %vm2323 = vcmp.eq.f32.partialorder %v1469, inf
      %v2324 = vsel %vm2323, %v1469, %v2322
      %vm2325 = vcmp.eq.f32.partialorder %v1469, 0.0
      %v2326 = vand.u32 %v1469, 2147483648
      %v2327 = vsel %vm2325, %v2326, %v2324
      %v2328 = vrsqrt.pop %v1470
      %v2329 = vmul.f32 %v1470, %v2328
      %vm2330 = vcmp.eq.f32.partialorder %v1470, inf
      %v2331 = vsel %vm2330, %v1470, %v2329
      %vm2332 = vcmp.eq.f32.partialorder %v1470, 0.0
      %v2333 = vand.u32 %v1470, 2147483648
      %v2334 = vsel %vm2332, %v2333, %v2331
      %v2335 = vrsqrt.pop %v1471
      %v2336 = vmul.f32 %v1471, %v2335
      %vm2337 = vcmp.eq.f32.partialorder %v1471, inf
      %v2338 = vsel %vm2337, %v1471, %v2336
      %vm2339 = vcmp.eq.f32.partialorder %v1471, 0.0
      %v2340 = vand.u32 %v1471, 2147483648
      %v2341 = vsel %vm2339, %v2340, %v2338
      %v2342 = vrsqrt.pop %v1472
      %v2343 = vmul.f32 %v1472, %v2342
      %vm2344 = vcmp.eq.f32.partialorder %v1472, inf
      %v2345 = vsel %vm2344, %v1472, %v2343
      %vm2346 = vcmp.eq.f32.partialorder %v1472, 0.0
      %v2347 = vand.u32 %v1472, 2147483648
      %v2348 = vsel %vm2346, %v2347, %v2345
      %v2349 = vrsqrt.pop %v1473
      %v2350 = vmul.f32 %v1473, %v2349
      %vm2351 = vcmp.eq.f32.partialorder %v1473, inf
      %v2352 = vsel %vm2351, %v1473, %v2350
      %vm2353 = vcmp.eq.f32.partialorder %v1473, 0.0
      %v2354 = vand.u32 %v1473, 2147483648
      %v2355 = vsel %vm2353, %v2354, %v2352
      %v2356 = vrsqrt.pop %v1474
      %v2357 = vmul.f32 %v1474, %v2356
      %vm2358 = vcmp.eq.f32.partialorder %v1474, inf
      %v2359 = vsel %vm2358, %v1474, %v2357
      %vm2360 = vcmp.eq.f32.partialorder %v1474, 0.0
      %v2361 = vand.u32 %v1474, 2147483648
      %v2362 = vsel %vm2360, %v2361, %v2359
      %v2363 = vrsqrt.pop %v1475
      %v2364 = vmul.f32 %v1475, %v2363
      %vm2365 = vcmp.eq.f32.partialorder %v1475, inf
      %v2366 = vsel %vm2365, %v1475, %v2364
      %vm2367 = vcmp.eq.f32.partialorder %v1475, 0.0
      %v2368 = vand.u32 %v1475, 2147483648
      %v2369 = vsel %vm2367, %v2368, %v2366
      %v2370 = vrsqrt.pop %v1476
      %v2371 = vmul.f32 %v1476, %v2370
      %vm2372 = vcmp.eq.f32.partialorder %v1476, inf
      %v2373 = vsel %vm2372, %v1476, %v2371
      %vm2374 = vcmp.eq.f32.partialorder %v1476, 0.0
      %v2375 = vand.u32 %v1476, 2147483648
      %v2376 = vsel %vm2374, %v2375, %v2373
      %v2377 = vrsqrt.pop %v1477
      %v2378 = vmul.f32 %v1477, %v2377
      %vm2379 = vcmp.eq.f32.partialorder %v1477, inf
      %v2380 = vsel %vm2379, %v1477, %v2378
      %vm2381 = vcmp.eq.f32.partialorder %v1477, 0.0
      %v2382 = vand.u32 %v1477, 2147483648
      %v2383 = vsel %vm2381, %v2382, %v2380
      %v2384 = vrsqrt.pop %v1478
      %v2385 = vmul.f32 %v1478, %v2384
      %vm2386 = vcmp.eq.f32.partialorder %v1478, inf
      %v2387 = vsel %vm2386, %v1478, %v2385
      %vm2388 = vcmp.eq.f32.partialorder %v1478, 0.0
      %v2389 = vand.u32 %v1478, 2147483648
      %v2390 = vsel %vm2388, %v2389, %v2387
      %v2391 = vrsqrt.pop %v1479
      %v2392 = vmul.f32 %v1479, %v2391
      %vm2393 = vcmp.eq.f32.partialorder %v1479, inf
      %v2394 = vsel %vm2393, %v1479, %v2392
      %vm2395 = vcmp.eq.f32.partialorder %v1479, 0.0
      %v2396 = vand.u32 %v1479, 2147483648
      %v2397 = vsel %vm2395, %v2396, %v2394
      %v2398 = vrsqrt.pop %v1480
      %v2399 = vmul.f32 %v1480, %v2398
      %vm2400 = vcmp.eq.f32.partialorder %v1480, inf
      %v2401 = vsel %vm2400, %v1480, %v2399
      %vm2402 = vcmp.eq.f32.partialorder %v1480, 0.0
      %v2403 = vand.u32 %v1480, 2147483648
      %v2404 = vsel %vm2402, %v2403, %v2401
      %v2405 = vrsqrt.pop %v1481
      %v2406 = vmul.f32 %v1481, %v2405
      %vm2407 = vcmp.eq.f32.partialorder %v1481, inf
      %v2408 = vsel %vm2407, %v1481, %v2406
      %vm2409 = vcmp.eq.f32.partialorder %v1481, 0.0
      %v2410 = vand.u32 %v1481, 2147483648
      %v2411 = vsel %vm2409, %v2410, %v2408
      %v2412 = vrsqrt.pop %v1482
      %v2413 = vmul.f32 %v1482, %v2412
      %vm2414 = vcmp.eq.f32.partialorder %v1482, inf
      %v2415 = vsel %vm2414, %v1482, %v2413
      %vm2416 = vcmp.eq.f32.partialorder %v1482, 0.0
      %v2417 = vand.u32 %v1482, 2147483648
      %v2418 = vsel %vm2416, %v2417, %v2415
      %v2419 = vrsqrt.pop %v1483
      %v2420 = vmul.f32 %v1483, %v2419
      %vm2421 = vcmp.eq.f32.partialorder %v1483, inf
      %v2422 = vsel %vm2421, %v1483, %v2420
      %vm2423 = vcmp.eq.f32.partialorder %v1483, 0.0
      %v2424 = vand.u32 %v1483, 2147483648
      %v2425 = vsel %vm2423, %v2424, %v2422
      %v2426 = vrsqrt.pop %v1484
      %v2427 = vmul.f32 %v1484, %v2426
      %vm2428 = vcmp.eq.f32.partialorder %v1484, inf
      %v2429 = vsel %vm2428, %v1484, %v2427
      %vm2430 = vcmp.eq.f32.partialorder %v1484, 0.0
      %v2431 = vand.u32 %v1484, 2147483648
      %v2432 = vsel %vm2430, %v2431, %v2429
      %v2433 = vrsqrt.pop %v1485
      %v2434 = vmul.f32 %v1485, %v2433
      %vm2435 = vcmp.eq.f32.partialorder %v1485, inf
      %v2436 = vsel %vm2435, %v1485, %v2434
      %vm2437 = vcmp.eq.f32.partialorder %v1485, 0.0
      %v2438 = vand.u32 %v1485, 2147483648
      %v2439 = vsel %vm2437, %v2438, %v2436
      %v2440 = vrsqrt.pop %v1486
      %v2441 = vmul.f32 %v1486, %v2440
      %vm2442 = vcmp.eq.f32.partialorder %v1486, inf
      %v2443 = vsel %vm2442, %v1486, %v2441
      %vm2444 = vcmp.eq.f32.partialorder %v1486, 0.0
      %v2445 = vand.u32 %v1486, 2147483648
      %v2446 = vsel %vm2444, %v2445, %v2443
      %v2447 = vrsqrt.pop %v1487
      %v2448 = vmul.f32 %v1487, %v2447
      %vm2449 = vcmp.eq.f32.partialorder %v1487, inf
      %v2450 = vsel %vm2449, %v1487, %v2448
      %vm2451 = vcmp.eq.f32.partialorder %v1487, 0.0
      %v2452 = vand.u32 %v1487, 2147483648
      %v2453 = vsel %vm2451, %v2452, %v2450
      %v2454 = vrsqrt.pop %v1488
      %v2455 = vmul.f32 %v1488, %v2454
      %vm2456 = vcmp.eq.f32.partialorder %v1488, inf
      %v2457 = vsel %vm2456, %v1488, %v2455
      %vm2458 = vcmp.eq.f32.partialorder %v1488, 0.0
      %v2459 = vand.u32 %v1488, 2147483648
      %v2460 = vsel %vm2458, %v2459, %v2457
      %v2461 = vrsqrt.pop %v1489
      %v2462 = vmul.f32 %v1489, %v2461
      %vm2463 = vcmp.eq.f32.partialorder %v1489, inf
      %v2464 = vsel %vm2463, %v1489, %v2462
      %vm2465 = vcmp.eq.f32.partialorder %v1489, 0.0
      %v2466 = vand.u32 %v1489, 2147483648
      %v2467 = vsel %vm2465, %v2466, %v2464
      %v2468 = vrsqrt.pop %v1490
      %v2469 = vmul.f32 %v1490, %v2468
      %vm2470 = vcmp.eq.f32.partialorder %v1490, inf
      %v2471 = vsel %vm2470, %v1490, %v2469
      %vm2472 = vcmp.eq.f32.partialorder %v1490, 0.0
      %v2473 = vand.u32 %v1490, 2147483648
      %v2474 = vsel %vm2472, %v2473, %v2471
      %v2475 = vrsqrt.pop %v1491
      %v2476 = vmul.f32 %v1491, %v2475
      %vm2477 = vcmp.eq.f32.partialorder %v1491, inf
      %v2478 = vsel %vm2477, %v1491, %v2476
      %vm2479 = vcmp.eq.f32.partialorder %v1491, 0.0
      %v2480 = vand.u32 %v1491, 2147483648
      %v2481 = vsel %vm2479, %v2480, %v2478
      %v2482 = vrsqrt.pop %v1492
      %v2483 = vmul.f32 %v1492, %v2482
      %vm2484 = vcmp.eq.f32.partialorder %v1492, inf
      %v2485 = vsel %vm2484, %v1492, %v2483
      %vm2486 = vcmp.eq.f32.partialorder %v1492, 0.0
      %v2487 = vand.u32 %v1492, 2147483648
      %v2488 = vsel %vm2486, %v2487, %v2485
      %v2489 = vrsqrt.pop %v1493
      %v2490 = vmul.f32 %v1493, %v2489
      %vm2491 = vcmp.eq.f32.partialorder %v1493, inf
      %v2492 = vsel %vm2491, %v1493, %v2490
      %vm2493 = vcmp.eq.f32.partialorder %v1493, 0.0
      %v2494 = vand.u32 %v1493, 2147483648
      %v2495 = vsel %vm2493, %v2494, %v2492
      %v2496 = vrsqrt.pop %v1494
      %v2497 = vmul.f32 %v1494, %v2496
      %vm2498 = vcmp.eq.f32.partialorder %v1494, inf
      %v2499 = vsel %vm2498, %v1494, %v2497
      %vm2500 = vcmp.eq.f32.partialorder %v1494, 0.0
      %v2501 = vand.u32 %v1494, 2147483648
      %v2502 = vsel %vm2500, %v2501, %v2499
      %v2503 = vrsqrt.pop %v1495
      %v2504 = vmul.f32 %v1495, %v2503
      %vm2505 = vcmp.eq.f32.partialorder %v1495, inf
      %v2506 = vsel %vm2505, %v1495, %v2504
      %vm2507 = vcmp.eq.f32.partialorder %v1495, 0.0
      %v2508 = vand.u32 %v1495, 2147483648
      %v2509 = vsel %vm2507, %v2508, %v2506
      %v2510 = vrsqrt.pop %v1496
      %v2511 = vmul.f32 %v1496, %v2510
      %vm2512 = vcmp.eq.f32.partialorder %v1496, inf
      %v2513 = vsel %vm2512, %v1496, %v2511
      %vm2514 = vcmp.eq.f32.partialorder %v1496, 0.0
      %v2515 = vand.u32 %v1496, 2147483648
      %v2516 = vsel %vm2514, %v2515, %v2513
      %v2517 = vrsqrt.pop %v1497
      %v2518 = vmul.f32 %v1497, %v2517
      %vm2519 = vcmp.eq.f32.partialorder %v1497, inf
      %v2520 = vsel %vm2519, %v1497, %v2518
      %vm2521 = vcmp.eq.f32.partialorder %v1497, 0.0
      %v2522 = vand.u32 %v1497, 2147483648
      %v2523 = vsel %vm2521, %v2522, %v2520
      %v2524 = vrsqrt.pop %v1498
      %v2525 = vmul.f32 %v1498, %v2524
      %vm2526 = vcmp.eq.f32.partialorder %v1498, inf
      %v2527 = vsel %vm2526, %v1498, %v2525
      %vm2528 = vcmp.eq.f32.partialorder %v1498, 0.0
      %v2529 = vand.u32 %v1498, 2147483648
      %v2530 = vsel %vm2528, %v2529, %v2527
      %v2531 = vrsqrt.pop %v1499
      %v2532 = vmul.f32 %v1499, %v2531
      %vm2533 = vcmp.eq.f32.partialorder %v1499, inf
      %v2534 = vsel %vm2533, %v1499, %v2532
      %vm2535 = vcmp.eq.f32.partialorder %v1499, 0.0
      %v2536 = vand.u32 %v1499, 2147483648
      %v2537 = vsel %vm2535, %v2536, %v2534
      %v2538 = vrsqrt.pop %v1500
      %v2539 = vmul.f32 %v1500, %v2538
      %vm2540 = vcmp.eq.f32.partialorder %v1500, inf
      %v2541 = vsel %vm2540, %v1500, %v2539
      %vm2542 = vcmp.eq.f32.partialorder %v1500, 0.0
      %v2543 = vand.u32 %v1500, 2147483648
      %v2544 = vsel %vm2542, %v2543, %v2541
      %v2545 = vrsqrt.pop %v1501
      %v2546 = vmul.f32 %v1501, %v2545
      %vm2547 = vcmp.eq.f32.partialorder %v1501, inf
      %v2548 = vsel %vm2547, %v1501, %v2546
      %vm2549 = vcmp.eq.f32.partialorder %v1501, 0.0
      %v2550 = vand.u32 %v1501, 2147483648
      %v2551 = vsel %vm2549, %v2550, %v2548
      %v2552 = vrsqrt.pop %v1502
      %v2553 = vmul.f32 %v1502, %v2552
      %vm2554 = vcmp.eq.f32.partialorder %v1502, inf
      %v2555 = vsel %vm2554, %v1502, %v2553
      %vm2556 = vcmp.eq.f32.partialorder %v1502, 0.0
      %v2557 = vand.u32 %v1502, 2147483648
      %v2558 = vsel %vm2556, %v2557, %v2555
      %v2559 = vrsqrt.pop %v1503
      %v2560 = vmul.f32 %v1503, %v2559
      %vm2561 = vcmp.eq.f32.partialorder %v1503, inf
      %v2562 = vsel %vm2561, %v1503, %v2560
      %vm2563 = vcmp.eq.f32.partialorder %v1503, 0.0
      %v2564 = vand.u32 %v1503, 2147483648
      %v2565 = vsel %vm2563, %v2564, %v2562
      %v2566 = vrsqrt.pop %v1504
      %v2567 = vmul.f32 %v1504, %v2566
      %vm2568 = vcmp.eq.f32.partialorder %v1504, inf
      %v2569 = vsel %vm2568, %v1504, %v2567
      %vm2570 = vcmp.eq.f32.partialorder %v1504, 0.0
      %v2571 = vand.u32 %v1504, 2147483648
      %v2572 = vsel %vm2570, %v2571, %v2569
      %v2573 = vrsqrt.pop %v1505
      %v2574 = vmul.f32 %v1505, %v2573
      %vm2575 = vcmp.eq.f32.partialorder %v1505, inf
      %v2576 = vsel %vm2575, %v1505, %v2574
      %vm2577 = vcmp.eq.f32.partialorder %v1505, 0.0
      %v2578 = vand.u32 %v1505, 2147483648
      %v2579 = vsel %vm2577, %v2578, %v2576
      %v2580 = vrsqrt.pop %v1506
      %v2581 = vmul.f32 %v1506, %v2580
      %vm2582 = vcmp.eq.f32.partialorder %v1506, inf
      %v2583 = vsel %vm2582, %v1506, %v2581
      %vm2584 = vcmp.eq.f32.partialorder %v1506, 0.0
      %v2585 = vand.u32 %v1506, 2147483648
      %v2586 = vsel %vm2584, %v2585, %v2583
      %v2587 = vrsqrt.pop %v1507
      %v2588 = vmul.f32 %v1507, %v2587
      %vm2589 = vcmp.eq.f32.partialorder %v1507, inf
      %v2590 = vsel %vm2589, %v1507, %v2588
      %vm2591 = vcmp.eq.f32.partialorder %v1507, 0.0
      %v2592 = vand.u32 %v1507, 2147483648
      %v2593 = vsel %vm2591, %v2592, %v2590
      %v2594 = vrsqrt.pop %v1508
      %v2595 = vmul.f32 %v1508, %v2594
      %vm2596 = vcmp.eq.f32.partialorder %v1508, inf
      %v2597 = vsel %vm2596, %v1508, %v2595
      %vm2598 = vcmp.eq.f32.partialorder %v1508, 0.0
      %v2599 = vand.u32 %v1508, 2147483648
      %v2600 = vsel %vm2598, %v2599, %v2597
      %v2601 = vrsqrt.pop %v1509
      %v2602 = vmul.f32 %v1509, %v2601
      %vm2603 = vcmp.eq.f32.partialorder %v1509, inf
      %v2604 = vsel %vm2603, %v1509, %v2602
      %vm2605 = vcmp.eq.f32.partialorder %v1509, 0.0
      %v2606 = vand.u32 %v1509, 2147483648
      %v2607 = vsel %vm2605, %v2606, %v2604
      %v2608 = vrsqrt.pop %v1510
      %v2609 = vmul.f32 %v1510, %v2608
      %vm2610 = vcmp.eq.f32.partialorder %v1510, inf
      %v2611 = vsel %vm2610, %v1510, %v2609
      %vm2612 = vcmp.eq.f32.partialorder %v1510, 0.0
      %v2613 = vand.u32 %v1510, 2147483648
      %v2614 = vsel %vm2612, %v2613, %v2611
      %v2615 = vrsqrt.pop %v1511
      %v2616 = vmul.f32 %v1511, %v2615
      %vm2617 = vcmp.eq.f32.partialorder %v1511, inf
      %v2618 = vsel %vm2617, %v1511, %v2616
      %vm2619 = vcmp.eq.f32.partialorder %v1511, 0.0
      %v2620 = vand.u32 %v1511, 2147483648
      %v2621 = vsel %vm2619, %v2620, %v2618
      %v2622 = vrsqrt.pop %v1512
      %v2623 = vmul.f32 %v1512, %v2622
      %vm2624 = vcmp.eq.f32.partialorder %v1512, inf
      %v2625 = vsel %vm2624, %v1512, %v2623
      %vm2626 = vcmp.eq.f32.partialorder %v1512, 0.0
      %v2627 = vand.u32 %v1512, 2147483648
      %v2628 = vsel %vm2626, %v2627, %v2625
      %v2629 = vrsqrt.pop %v1513
      %v2630 = vmul.f32 %v1513, %v2629
      %vm2631 = vcmp.eq.f32.partialorder %v1513, inf
      %v2632 = vsel %vm2631, %v1513, %v2630
      %vm2633 = vcmp.eq.f32.partialorder %v1513, 0.0
      %v2634 = vand.u32 %v1513, 2147483648
      %v2635 = vsel %vm2633, %v2634, %v2632
      %v2636 = vrsqrt.pop %v1514
      %v2637 = vmul.f32 %v1514, %v2636
      %vm2638 = vcmp.eq.f32.partialorder %v1514, inf
      %v2639 = vsel %vm2638, %v1514, %v2637
      %vm2640 = vcmp.eq.f32.partialorder %v1514, 0.0
      %v2641 = vand.u32 %v1514, 2147483648
      %v2642 = vsel %vm2640, %v2641, %v2639
      %v2643 = vrsqrt.pop %v1515
      %v2644 = vmul.f32 %v1515, %v2643
      %vm2645 = vcmp.eq.f32.partialorder %v1515, inf
      %v2646 = vsel %vm2645, %v1515, %v2644
      %vm2647 = vcmp.eq.f32.partialorder %v1515, 0.0
      %v2648 = vand.u32 %v1515, 2147483648
      %v2649 = vsel %vm2647, %v2648, %v2646
      %v2650 = vrsqrt.pop %v1516
      %v2651 = vmul.f32 %v1516, %v2650
      %vm2652 = vcmp.eq.f32.partialorder %v1516, inf
      %v2653 = vsel %vm2652, %v1516, %v2651
      %vm2654 = vcmp.eq.f32.partialorder %v1516, 0.0
      %v2655 = vand.u32 %v1516, 2147483648
      %v2656 = vsel %vm2654, %v2655, %v2653
      %v2657 = vrsqrt.pop %v1517
      %v2658 = vmul.f32 %v1517, %v2657
      %vm2659 = vcmp.eq.f32.partialorder %v1517, inf
      %v2660 = vsel %vm2659, %v1517, %v2658
      %vm2661 = vcmp.eq.f32.partialorder %v1517, 0.0
      %v2662 = vand.u32 %v1517, 2147483648
      %v2663 = vsel %vm2661, %v2662, %v2660
      %v2664 = vrsqrt.pop %v1518
      %v2665 = vmul.f32 %v1518, %v2664
      %vm2666 = vcmp.eq.f32.partialorder %v1518, inf
      %v2667 = vsel %vm2666, %v1518, %v2665
      %vm2668 = vcmp.eq.f32.partialorder %v1518, 0.0
      %v2669 = vand.u32 %v1518, 2147483648
      %v2670 = vsel %vm2668, %v2669, %v2667
      %v2671 = vrsqrt.pop %v1519
      %v2672 = vmul.f32 %v1519, %v2671
      %vm2673 = vcmp.eq.f32.partialorder %v1519, inf
      %v2674 = vsel %vm2673, %v1519, %v2672
      %vm2675 = vcmp.eq.f32.partialorder %v1519, 0.0
      %v2676 = vand.u32 %v1519, 2147483648
      %v2677 = vsel %vm2675, %v2676, %v2674
      %v2678 = vrsqrt.pop %v1520
      %v2679 = vmul.f32 %v1520, %v2678
      %vm2680 = vcmp.eq.f32.partialorder %v1520, inf
      %v2681 = vsel %vm2680, %v1520, %v2679
      %vm2682 = vcmp.eq.f32.partialorder %v1520, 0.0
      %v2683 = vand.u32 %v1520, 2147483648
      %v2684 = vsel %vm2682, %v2683, %v2681
      %v2685 = vrsqrt.pop %v1521
      %v2686 = vmul.f32 %v1521, %v2685
      %vm2687 = vcmp.eq.f32.partialorder %v1521, inf
      %v2688 = vsel %vm2687, %v1521, %v2686
      %vm2689 = vcmp.eq.f32.partialorder %v1521, 0.0
      %v2690 = vand.u32 %v1521, 2147483648
      %v2691 = vsel %vm2689, %v2690, %v2688
      %v2692 = vrsqrt.pop %v1522
      %v2693 = vmul.f32 %v1522, %v2692
      %vm2694 = vcmp.eq.f32.partialorder %v1522, inf
      %v2695 = vsel %vm2694, %v1522, %v2693
      %vm2696 = vcmp.eq.f32.partialorder %v1522, 0.0
      %v2697 = vand.u32 %v1522, 2147483648
      %v2698 = vsel %vm2696, %v2697, %v2695
      %v2699 = vrsqrt.pop %v1523
      %v2700 = vmul.f32 %v1523, %v2699
      %vm2701 = vcmp.eq.f32.partialorder %v1523, inf
      %v2702 = vsel %vm2701, %v1523, %v2700
      %vm2703 = vcmp.eq.f32.partialorder %v1523, 0.0
      %v2704 = vand.u32 %v1523, 2147483648
      %v2705 = vsel %vm2703, %v2704, %v2702
      %v2706 = vrsqrt.pop %v1524
      %v2707 = vmul.f32 %v1524, %v2706
      %vm2708 = vcmp.eq.f32.partialorder %v1524, inf
      %v2709 = vsel %vm2708, %v1524, %v2707
      %vm2710 = vcmp.eq.f32.partialorder %v1524, 0.0
      %v2711 = vand.u32 %v1524, 2147483648
      %v2712 = vsel %vm2710, %v2711, %v2709
      %v2713 = vrsqrt.pop %v1525
      %v2714 = vmul.f32 %v1525, %v2713
      %vm2715 = vcmp.eq.f32.partialorder %v1525, inf
      %v2716 = vsel %vm2715, %v1525, %v2714
      %vm2717 = vcmp.eq.f32.partialorder %v1525, 0.0
      %v2718 = vand.u32 %v1525, 2147483648
      %v2719 = vsel %vm2717, %v2718, %v2716
      %v2720 = vrsqrt.pop %v1526
      %v2721 = vmul.f32 %v1526, %v2720
      %vm2722 = vcmp.eq.f32.partialorder %v1526, inf
      %v2723 = vsel %vm2722, %v1526, %v2721
      %vm2724 = vcmp.eq.f32.partialorder %v1526, 0.0
      %v2725 = vand.u32 %v1526, 2147483648
      %v2726 = vsel %vm2724, %v2725, %v2723
      %v2727 = vrsqrt.pop %v1527
      %v2728 = vmul.f32 %v1527, %v2727
      %vm2729 = vcmp.eq.f32.partialorder %v1527, inf
      %v2730 = vsel %vm2729, %v1527, %v2728
      %vm2731 = vcmp.eq.f32.partialorder %v1527, 0.0
      %v2732 = vand.u32 %v1527, 2147483648
      %v2733 = vsel %vm2731, %v2732, %v2730
      %v2734 = vrsqrt.pop %v1528
      %v2735 = vmul.f32 %v1528, %v2734
      %vm2736 = vcmp.eq.f32.partialorder %v1528, inf
      %v2737 = vsel %vm2736, %v1528, %v2735
      %vm2738 = vcmp.eq.f32.partialorder %v1528, 0.0
      %v2739 = vand.u32 %v1528, 2147483648
      %v2740 = vsel %vm2738, %v2739, %v2737
      %v2741 = vrsqrt.pop %v1529
      %v2742 = vmul.f32 %v1529, %v2741
      %vm2743 = vcmp.eq.f32.partialorder %v1529, inf
      %v2744 = vsel %vm2743, %v1529, %v2742
      %vm2745 = vcmp.eq.f32.partialorder %v1529, 0.0
      %v2746 = vand.u32 %v1529, 2147483648
      %v2747 = vsel %vm2745, %v2746, %v2744
      %v2748 = vrsqrt.pop %v1530
      %v2749 = vmul.f32 %v1530, %v2748
      %vm2750 = vcmp.eq.f32.partialorder %v1530, inf
      %v2751 = vsel %vm2750, %v1530, %v2749
      %vm2752 = vcmp.eq.f32.partialorder %v1530, 0.0
      %v2753 = vand.u32 %v1530, 2147483648
      %v2754 = vsel %vm2752, %v2753, %v2751
      %v2755 = vrsqrt.pop %v1531
      %v2756 = vmul.f32 %v1531, %v2755
      %vm2757 = vcmp.eq.f32.partialorder %v1531, inf
      %v2758 = vsel %vm2757, %v1531, %v2756
      %vm2759 = vcmp.eq.f32.partialorder %v1531, 0.0
      %v2760 = vand.u32 %v1531, 2147483648
      %v2761 = vsel %vm2759, %v2760, %v2758
      %v2762 = vrsqrt.pop %v1532
      %v2763 = vmul.f32 %v1532, %v2762
      %vm2764 = vcmp.eq.f32.partialorder %v1532, inf
      %v2765 = vsel %vm2764, %v1532, %v2763
      %vm2766 = vcmp.eq.f32.partialorder %v1532, 0.0
      %v2767 = vand.u32 %v1532, 2147483648
      %v2768 = vsel %vm2766, %v2767, %v2765
      %v2769 = vrsqrt.pop %v1533
      %v2770 = vmul.f32 %v1533, %v2769
      %vm2771 = vcmp.eq.f32.partialorder %v1533, inf
      %v2772 = vsel %vm2771, %v1533, %v2770
      %vm2773 = vcmp.eq.f32.partialorder %v1533, 0.0
      %v2774 = vand.u32 %v1533, 2147483648
      %v2775 = vsel %vm2773, %v2774, %v2772
      %v2776 = vrsqrt.pop %v1534
      %v2777 = vmul.f32 %v1534, %v2776
      %vm2778 = vcmp.eq.f32.partialorder %v1534, inf
      %v2779 = vsel %vm2778, %v1534, %v2777
      %vm2780 = vcmp.eq.f32.partialorder %v1534, 0.0
      %v2781 = vand.u32 %v1534, 2147483648
      %v2782 = vsel %vm2780, %v2781, %v2779
      %v2783 = vrsqrt.pop %v1535
      %v2784 = vmul.f32 %v1535, %v2783
      %vm2785 = vcmp.eq.f32.partialorder %v1535, inf
      %v2786 = vsel %vm2785, %v1535, %v2784
      %vm2787 = vcmp.eq.f32.partialorder %v1535, 0.0
      %v2788 = vand.u32 %v1535, 2147483648
      %v2789 = vsel %vm2787, %v2788, %v2786
      %v2790 = vrsqrt.pop %v1536
      %v2791 = vmul.f32 %v1536, %v2790
      %vm2792 = vcmp.eq.f32.partialorder %v1536, inf
      %v2793 = vsel %vm2792, %v1536, %v2791
      %vm2794 = vcmp.eq.f32.partialorder %v1536, 0.0
      %v2795 = vand.u32 %v1536, 2147483648
      %v2796 = vsel %vm2794, %v2795, %v2793
      %v2797 = vrsqrt.pop %v1537
      %v2798 = vmul.f32 %v1537, %v2797
      %vm2799 = vcmp.eq.f32.partialorder %v1537, inf
      %v2800 = vsel %vm2799, %v1537, %v2798
      %vm2801 = vcmp.eq.f32.partialorder %v1537, 0.0
      %v2802 = vand.u32 %v1537, 2147483648
      %v2803 = vsel %vm2801, %v2802, %v2800
      %v2804 = vrsqrt.pop %v1538
      %v2805 = vmul.f32 %v1538, %v2804
      %vm2806 = vcmp.eq.f32.partialorder %v1538, inf
      %v2807 = vsel %vm2806, %v1538, %v2805
      %vm2808 = vcmp.eq.f32.partialorder %v1538, 0.0
      %v2809 = vand.u32 %v1538, 2147483648
      %v2810 = vsel %vm2808, %v2809, %v2807
      %v2811 = vrsqrt.pop %v1539
      %v2812 = vmul.f32 %v1539, %v2811
      %vm2813 = vcmp.eq.f32.partialorder %v1539, inf
      %v2814 = vsel %vm2813, %v1539, %v2812
      %vm2815 = vcmp.eq.f32.partialorder %v1539, 0.0
      %v2816 = vand.u32 %v1539, 2147483648
      %v2817 = vsel %vm2815, %v2816, %v2814
      %v2818 = vrsqrt.pop %v1540
      %v2819 = vmul.f32 %v1540, %v2818
      %vm2820 = vcmp.eq.f32.partialorder %v1540, inf
      %v2821 = vsel %vm2820, %v1540, %v2819
      %vm2822 = vcmp.eq.f32.partialorder %v1540, 0.0
      %v2823 = vand.u32 %v1540, 2147483648
      %v2824 = vsel %vm2822, %v2823, %v2821
      %v2825 = vrsqrt.pop %v1541
      %v2826 = vmul.f32 %v1541, %v2825
      %vm2827 = vcmp.eq.f32.partialorder %v1541, inf
      %v2828 = vsel %vm2827, %v1541, %v2826
      %vm2829 = vcmp.eq.f32.partialorder %v1541, 0.0
      %v2830 = vand.u32 %v1541, 2147483648
      %v2831 = vsel %vm2829, %v2830, %v2828
      %v2832 = vrsqrt.pop %v1542
      %v2833 = vmul.f32 %v1542, %v2832
      %vm2834 = vcmp.eq.f32.partialorder %v1542, inf
      %v2835 = vsel %vm2834, %v1542, %v2833
      %vm2836 = vcmp.eq.f32.partialorder %v1542, 0.0
      %v2837 = vand.u32 %v1542, 2147483648
      %v2838 = vsel %vm2836, %v2837, %v2835
      %v2839 = vrsqrt.pop %v1543
      %v2840 = vmul.f32 %v1543, %v2839
      %vm2841 = vcmp.eq.f32.partialorder %v1543, inf
      %v2842 = vsel %vm2841, %v1543, %v2840
      %vm2843 = vcmp.eq.f32.partialorder %v1543, 0.0
      %v2844 = vand.u32 %v1543, 2147483648
      %v2845 = vsel %vm2843, %v2844, %v2842
      %v2846 = vrsqrt.pop %v1544
      %v2847 = vmul.f32 %v1544, %v2846
      %vm2848 = vcmp.eq.f32.partialorder %v1544, inf
      %v2849 = vsel %vm2848, %v1544, %v2847
      %vm2850 = vcmp.eq.f32.partialorder %v1544, 0.0
      %v2851 = vand.u32 %v1544, 2147483648
      %v2852 = vsel %vm2850, %v2851, %v2849
      %v2853 = vrsqrt.pop %v1545
      %v2854 = vmul.f32 %v1545, %v2853
      %vm2855 = vcmp.eq.f32.partialorder %v1545, inf
      %v2856 = vsel %vm2855, %v1545, %v2854
      %vm2857 = vcmp.eq.f32.partialorder %v1545, 0.0
      %v2858 = vand.u32 %v1545, 2147483648
      %v2859 = vsel %vm2857, %v2858, %v2856
      %v2860 = vrsqrt.pop %v1546
      %v2861 = vmul.f32 %v1546, %v2860
      %vm2862 = vcmp.eq.f32.partialorder %v1546, inf
      %v2863 = vsel %vm2862, %v1546, %v2861
      %vm2864 = vcmp.eq.f32.partialorder %v1546, 0.0
      %v2865 = vand.u32 %v1546, 2147483648
      %v2866 = vsel %vm2864, %v2865, %v2863
      %v2867 = vrsqrt.pop %v1547
      %v2868 = vmul.f32 %v1547, %v2867
      %vm2869 = vcmp.eq.f32.partialorder %v1547, inf
      %v2870 = vsel %vm2869, %v1547, %v2868
      %vm2871 = vcmp.eq.f32.partialorder %v1547, 0.0
      %v2872 = vand.u32 %v1547, 2147483648
      %v2873 = vsel %vm2871, %v2872, %v2870
      %v2874 = vrsqrt.pop %v1548
      %v2875 = vmul.f32 %v1548, %v2874
      %vm2876 = vcmp.eq.f32.partialorder %v1548, inf
      %v2877 = vsel %vm2876, %v1548, %v2875
      %vm2878 = vcmp.eq.f32.partialorder %v1548, 0.0
      %v2879 = vand.u32 %v1548, 2147483648
      %v2880 = vsel %vm2878, %v2879, %v2877
      %v2881 = vrsqrt.pop %v1549
      %v2882 = vmul.f32 %v1549, %v2881
      %vm2883 = vcmp.eq.f32.partialorder %v1549, inf
      %v2884 = vsel %vm2883, %v1549, %v2882
      %vm2885 = vcmp.eq.f32.partialorder %v1549, 0.0
      %v2886 = vand.u32 %v1549, 2147483648
      %v2887 = vsel %vm2885, %v2886, %v2884
      %v2888 = vrsqrt.pop %v1550
      %v2889 = vmul.f32 %v1550, %v2888
      %vm2890 = vcmp.eq.f32.partialorder %v1550, inf
      %v2891 = vsel %vm2890, %v1550, %v2889
      %vm2892 = vcmp.eq.f32.partialorder %v1550, 0.0
      %v2893 = vand.u32 %v1550, 2147483648
      %v2894 = vsel %vm2892, %v2893, %v2891
      %v2895 = vrsqrt.pop %v1551
      %v2896 = vmul.f32 %v1551, %v2895
      %vm2897 = vcmp.eq.f32.partialorder %v1551, inf
      %v2898 = vsel %vm2897, %v1551, %v2896
      %vm2899 = vcmp.eq.f32.partialorder %v1551, 0.0
      %v2900 = vand.u32 %v1551, 2147483648
      %v2901 = vsel %vm2899, %v2900, %v2898
      %v2902 = vrsqrt.pop %v1552
      %v2903 = vmul.f32 %v1552, %v2902
      %vm2904 = vcmp.eq.f32.partialorder %v1552, inf
      %v2905 = vsel %vm2904, %v1552, %v2903
      %vm2906 = vcmp.eq.f32.partialorder %v1552, 0.0
      %v2907 = vand.u32 %v1552, 2147483648
      %v2908 = vsel %vm2906, %v2907, %v2905
      %v2909 = vrsqrt.pop %v1553
      %v2910 = vmul.f32 %v1553, %v2909
      %vm2911 = vcmp.eq.f32.partialorder %v1553, inf
      %v2912 = vsel %vm2911, %v1553, %v2910
      %vm2913 = vcmp.eq.f32.partialorder %v1553, 0.0
      %v2914 = vand.u32 %v1553, 2147483648
      %v2915 = vsel %vm2913, %v2914, %v2912
      %v2916 = vrsqrt.pop %v1554
      %v2917 = vmul.f32 %v1554, %v2916
      %vm2918 = vcmp.eq.f32.partialorder %v1554, inf
      %v2919 = vsel %vm2918, %v1554, %v2917
      %vm2920 = vcmp.eq.f32.partialorder %v1554, 0.0
      %v2921 = vand.u32 %v1554, 2147483648
      %v2922 = vsel %vm2920, %v2921, %v2919
      %v2923 = vrsqrt.pop %v1555
      %v2924 = vmul.f32 %v1555, %v2923
      %vm2925 = vcmp.eq.f32.partialorder %v1555, inf
      %v2926 = vsel %vm2925, %v1555, %v2924
      %vm2927 = vcmp.eq.f32.partialorder %v1555, 0.0
      %v2928 = vand.u32 %v1555, 2147483648
      %v2929 = vsel %vm2927, %v2928, %v2926
      %v2930 = vrsqrt.pop %v1556
      %v2931 = vmul.f32 %v1556, %v2930
      %vm2932 = vcmp.eq.f32.partialorder %v1556, inf
      %v2933 = vsel %vm2932, %v1556, %v2931
      %vm2934 = vcmp.eq.f32.partialorder %v1556, 0.0
      %v2935 = vand.u32 %v1556, 2147483648
      %v2936 = vsel %vm2934, %v2935, %v2933
      %v2937 = vrsqrt.pop %v1557
      %v2938 = vmul.f32 %v1557, %v2937
      %vm2939 = vcmp.eq.f32.partialorder %v1557, inf
      %v2940 = vsel %vm2939, %v1557, %v2938
      %vm2941 = vcmp.eq.f32.partialorder %v1557, 0.0
      %v2942 = vand.u32 %v1557, 2147483648
      %v2943 = vsel %vm2941, %v2942, %v2940
      %v2944 = vrsqrt.pop %v1558
      %v2945 = vmul.f32 %v1558, %v2944
      %vm2946 = vcmp.eq.f32.partialorder %v1558, inf
      %v2947 = vsel %vm2946, %v1558, %v2945
      %vm2948 = vcmp.eq.f32.partialorder %v1558, 0.0
      %v2949 = vand.u32 %v1558, 2147483648
      %v2950 = vsel %vm2948, %v2949, %v2947
      %v2951 = vrsqrt.pop %v1559
      %v2952 = vmul.f32 %v1559, %v2951
      %vm2953 = vcmp.eq.f32.partialorder %v1559, inf
      %v2954 = vsel %vm2953, %v1559, %v2952
      %vm2955 = vcmp.eq.f32.partialorder %v1559, 0.0
      %v2956 = vand.u32 %v1559, 2147483648
      %v2957 = vsel %vm2955, %v2956, %v2954
      %v2958 = vrsqrt.pop %v1560
      %v2959 = vmul.f32 %v1560, %v2958
      %vm2960 = vcmp.eq.f32.partialorder %v1560, inf
      %v2961 = vsel %vm2960, %v1560, %v2959
      %vm2962 = vcmp.eq.f32.partialorder %v1560, 0.0
      %v2963 = vand.u32 %v1560, 2147483648
      %v2964 = vsel %vm2962, %v2963, %v2961
      %v2965 = vrsqrt.pop %v1561
      %v2966 = vmul.f32 %v1561, %v2965
      %vm2967 = vcmp.eq.f32.partialorder %v1561, inf
      %v2968 = vsel %vm2967, %v1561, %v2966
      %vm2969 = vcmp.eq.f32.partialorder %v1561, 0.0
      %v2970 = vand.u32 %v1561, 2147483648
      %v2971 = vsel %vm2969, %v2970, %v2968
      %v2972 = vrsqrt.pop %v1562
      %v2973 = vmul.f32 %v1562, %v2972
      %vm2974 = vcmp.eq.f32.partialorder %v1562, inf
      %v2975 = vsel %vm2974, %v1562, %v2973
      %vm2976 = vcmp.eq.f32.partialorder %v1562, 0.0
      %v2977 = vand.u32 %v1562, 2147483648
      %v2978 = vsel %vm2976, %v2977, %v2975
      %v2979 = vrsqrt.pop %v1563
      %v2980 = vmul.f32 %v1563, %v2979
      %vm2981 = vcmp.eq.f32.partialorder %v1563, inf
      %v2982 = vsel %vm2981, %v1563, %v2980
      %vm2983 = vcmp.eq.f32.partialorder %v1563, 0.0
      %v2984 = vand.u32 %v1563, 2147483648
      %v2985 = vsel %vm2983, %v2984, %v2982
      %v2986 = vrsqrt.pop %v1564
      %v2987 = vmul.f32 %v1564, %v2986
      %vm2988 = vcmp.eq.f32.partialorder %v1564, inf
      %v2989 = vsel %vm2988, %v1564, %v2987
      %vm2990 = vcmp.eq.f32.partialorder %v1564, 0.0
      %v2991 = vand.u32 %v1564, 2147483648
      %v2992 = vsel %vm2990, %v2991, %v2989
      %v2993 = vrsqrt.pop %v1565
      %v2994 = vmul.f32 %v1565, %v2993
      %vm2995 = vcmp.eq.f32.partialorder %v1565, inf
      %v2996 = vsel %vm2995, %v1565, %v2994
      %vm2997 = vcmp.eq.f32.partialorder %v1565, 0.0
      %v2998 = vand.u32 %v1565, 2147483648
      %v2999 = vsel %vm2997, %v2998, %v2996
      %v3000 = vrsqrt.pop %v1566
      %v3001 = vmul.f32 %v1566, %v3000
      %vm3002 = vcmp.eq.f32.partialorder %v1566, inf
      %v3003 = vsel %vm3002, %v1566, %v3001
      %vm3004 = vcmp.eq.f32.partialorder %v1566, 0.0
      %v3005 = vand.u32 %v1566, 2147483648
      %v3006 = vsel %vm3004, %v3005, %v3003
      %v3007 = vrsqrt.pop %v1567
      %v3008 = vmul.f32 %v1567, %v3007
      %vm3009 = vcmp.eq.f32.partialorder %v1567, inf
      %v3010 = vsel %vm3009, %v1567, %v3008
      %vm3011 = vcmp.eq.f32.partialorder %v1567, 0.0
      %v3012 = vand.u32 %v1567, 2147483648
      %v3013 = vsel %vm3011, %v3012, %v3010
      %v3014 = vrsqrt.pop %v1568
      %v3015 = vmul.f32 %v1568, %v3014
      %vm3016 = vcmp.eq.f32.partialorder %v1568, inf
      %v3017 = vsel %vm3016, %v1568, %v3015
      %vm3018 = vcmp.eq.f32.partialorder %v1568, 0.0
      %v3019 = vand.u32 %v1568, 2147483648
      %v3020 = vsel %vm3018, %v3019, %v3017
      %v3021 = vrsqrt.pop %v1569
      %v3022 = vmul.f32 %v1569, %v3021
      %vm3023 = vcmp.eq.f32.partialorder %v1569, inf
      %v3024 = vsel %vm3023, %v1569, %v3022
      %vm3025 = vcmp.eq.f32.partialorder %v1569, 0.0
      %v3026 = vand.u32 %v1569, 2147483648
      %v3027 = vsel %vm3025, %v3026, %v3024
      %v3028 = vrsqrt.pop %v1570
      %v3029 = vmul.f32 %v1570, %v3028
      %vm3030 = vcmp.eq.f32.partialorder %v1570, inf
      %v3031 = vsel %vm3030, %v1570, %v3029
      %vm3032 = vcmp.eq.f32.partialorder %v1570, 0.0
      %v3033 = vand.u32 %v1570, 2147483648
      %v3034 = vsel %vm3032, %v3033, %v3031
      %v3035 = vrsqrt.pop %v1571
      %v3036 = vmul.f32 %v1571, %v3035
      %vm3037 = vcmp.eq.f32.partialorder %v1571, inf
      %v3038 = vsel %vm3037, %v1571, %v3036
      %vm3039 = vcmp.eq.f32.partialorder %v1571, 0.0
      %v3040 = vand.u32 %v1571, 2147483648
      %v3041 = vsel %vm3039, %v3040, %v3038
      %v3042 = vrsqrt.pop %v1572
      %v3043 = vmul.f32 %v1572, %v3042
      %vm3044 = vcmp.eq.f32.partialorder %v1572, inf
      %v3045 = vsel %vm3044, %v1572, %v3043
      %vm3046 = vcmp.eq.f32.partialorder %v1572, 0.0
      %v3047 = vand.u32 %v1572, 2147483648
      %v3048 = vsel %vm3046, %v3047, %v3045
      %v3049 = vrsqrt.pop %v1573
      %v3050 = vmul.f32 %v1573, %v3049
      %vm3051 = vcmp.eq.f32.partialorder %v1573, inf
      %v3052 = vsel %vm3051, %v1573, %v3050
      %vm3053 = vcmp.eq.f32.partialorder %v1573, 0.0
      %v3054 = vand.u32 %v1573, 2147483648
      %v3055 = vsel %vm3053, %v3054, %v3052
      %v3056 = vrsqrt.pop %v1574
      %v3057 = vmul.f32 %v1574, %v3056
      %vm3058 = vcmp.eq.f32.partialorder %v1574, inf
      %v3059 = vsel %vm3058, %v1574, %v3057
      %vm3060 = vcmp.eq.f32.partialorder %v1574, 0.0
      %v3061 = vand.u32 %v1574, 2147483648
      %v3062 = vsel %vm3060, %v3061, %v3059
      %v3063 = vrsqrt.pop %v1575
      %v3064 = vmul.f32 %v1575, %v3063
      %vm3065 = vcmp.eq.f32.partialorder %v1575, inf
      %v3066 = vsel %vm3065, %v1575, %v3064
      %vm3067 = vcmp.eq.f32.partialorder %v1575, 0.0
      %v3068 = vand.u32 %v1575, 2147483648
      %v3069 = vsel %vm3067, %v3068, %v3066
      %v3070 = vrsqrt.pop %v1576
      %v3071 = vmul.f32 %v1576, %v3070
      %vm3072 = vcmp.eq.f32.partialorder %v1576, inf
      %v3073 = vsel %vm3072, %v1576, %v3071
      %vm3074 = vcmp.eq.f32.partialorder %v1576, 0.0
      %v3075 = vand.u32 %v1576, 2147483648
      %v3076 = vsel %vm3074, %v3075, %v3073
      %v3077 = vrsqrt.pop %v1577
      %v3078 = vmul.f32 %v1577, %v3077
      %vm3079 = vcmp.eq.f32.partialorder %v1577, inf
      %v3080 = vsel %vm3079, %v1577, %v3078
      %vm3081 = vcmp.eq.f32.partialorder %v1577, 0.0
      %v3082 = vand.u32 %v1577, 2147483648
      %v3083 = vsel %vm3081, %v3082, %v3080
      %v3084 = vrsqrt.pop %v1578
      %v3085 = vmul.f32 %v1578, %v3084
      %vm3086 = vcmp.eq.f32.partialorder %v1578, inf
      %v3087 = vsel %vm3086, %v1578, %v3085
      %vm3088 = vcmp.eq.f32.partialorder %v1578, 0.0
      %v3089 = vand.u32 %v1578, 2147483648
      %v3090 = vsel %vm3088, %v3089, %v3087
      %v3091 = vrsqrt.pop %v1579
      %v3092 = vmul.f32 %v1579, %v3091
      %vm3093 = vcmp.eq.f32.partialorder %v1579, inf
      %v3094 = vsel %vm3093, %v1579, %v3092
      %vm3095 = vcmp.eq.f32.partialorder %v1579, 0.0
      %v3096 = vand.u32 %v1579, 2147483648
      %v3097 = vsel %vm3095, %v3096, %v3094
      %v3098 = vrsqrt.pop %v1580
      %v3099 = vmul.f32 %v1580, %v3098
      %vm3100 = vcmp.eq.f32.partialorder %v1580, inf
      %v3101 = vsel %vm3100, %v1580, %v3099
      %vm3102 = vcmp.eq.f32.partialorder %v1580, 0.0
      %v3103 = vand.u32 %v1580, 2147483648
      %v3104 = vsel %vm3102, %v3103, %v3101
      %v3105 = vrsqrt.pop %v1581
      %v3106 = vmul.f32 %v1581, %v3105
      %vm3107 = vcmp.eq.f32.partialorder %v1581, inf
      %v3108 = vsel %vm3107, %v1581, %v3106
      %vm3109 = vcmp.eq.f32.partialorder %v1581, 0.0
      %v3110 = vand.u32 %v1581, 2147483648
      %v3111 = vsel %vm3109, %v3110, %v3108
      %v3112 = vrsqrt.pop %v1582
      %v3113 = vmul.f32 %v1582, %v3112
      %vm3114 = vcmp.eq.f32.partialorder %v1582, inf
      %v3115 = vsel %vm3114, %v1582, %v3113
      %vm3116 = vcmp.eq.f32.partialorder %v1582, 0.0
      %v3117 = vand.u32 %v1582, 2147483648
      %v3118 = vsel %vm3116, %v3117, %v3115
      %v3119 = vrsqrt.pop %v1583
      %v3120 = vmul.f32 %v1583, %v3119
      %vm3121 = vcmp.eq.f32.partialorder %v1583, inf
      %v3122 = vsel %vm3121, %v1583, %v3120
      %vm3123 = vcmp.eq.f32.partialorder %v1583, 0.0
      %v3124 = vand.u32 %v1583, 2147483648
      %v3125 = vsel %vm3123, %v3124, %v3122
      %v3126 = vrsqrt.pop %v1584
      %v3127 = vmul.f32 %v1584, %v3126
      %vm3128 = vcmp.eq.f32.partialorder %v1584, inf
      %v3129 = vsel %vm3128, %v1584, %v3127
      %vm3130 = vcmp.eq.f32.partialorder %v1584, 0.0
      %v3131 = vand.u32 %v1584, 2147483648
      %v3132 = vsel %vm3130, %v3131, %v3129
      %v3133 = vrsqrt.pop %v1585
      %v3134 = vmul.f32 %v1585, %v3133
      %vm3135 = vcmp.eq.f32.partialorder %v1585, inf
      %v3136 = vsel %vm3135, %v1585, %v3134
      %vm3137 = vcmp.eq.f32.partialorder %v1585, 0.0
      %v3138 = vand.u32 %v1585, 2147483648
      %v3139 = vsel %vm3137, %v3138, %v3136
      %v3140 = vrsqrt.pop %v1586
      %v3141 = vmul.f32 %v1586, %v3140
      %vm3142 = vcmp.eq.f32.partialorder %v1586, inf
      %v3143 = vsel %vm3142, %v1586, %v3141
      %vm3144 = vcmp.eq.f32.partialorder %v1586, 0.0
      %v3145 = vand.u32 %v1586, 2147483648
      %v3146 = vsel %vm3144, %v3145, %v3143
      %v3147 = vrsqrt.pop %v1587
      %v3148 = vmul.f32 %v1587, %v3147
      %vm3149 = vcmp.eq.f32.partialorder %v1587, inf
      %v3150 = vsel %vm3149, %v1587, %v3148
      %vm3151 = vcmp.eq.f32.partialorder %v1587, 0.0
      %v3152 = vand.u32 %v1587, 2147483648
      %v3153 = vsel %vm3151, %v3152, %v3150
      %v3154 = vrsqrt.pop %v1588
      %v3155 = vmul.f32 %v1588, %v3154
      %vm3156 = vcmp.eq.f32.partialorder %v1588, inf
      %v3157 = vsel %vm3156, %v1588, %v3155
      %vm3158 = vcmp.eq.f32.partialorder %v1588, 0.0
      %v3159 = vand.u32 %v1588, 2147483648
      %v3160 = vsel %vm3158, %v3159, %v3157
      %v3161 = vrsqrt.pop %v1589
      %v3162 = vmul.f32 %v1589, %v3161
      %vm3163 = vcmp.eq.f32.partialorder %v1589, inf
      %v3164 = vsel %vm3163, %v1589, %v3162
      %vm3165 = vcmp.eq.f32.partialorder %v1589, 0.0
      %v3166 = vand.u32 %v1589, 2147483648
      %v3167 = vsel %vm3165, %v3166, %v3164
      %v3168 = vrsqrt.pop %v1590
      %v3169 = vmul.f32 %v1590, %v3168
      %vm3170 = vcmp.eq.f32.partialorder %v1590, inf
      %v3171 = vsel %vm3170, %v1590, %v3169
      %vm3172 = vcmp.eq.f32.partialorder %v1590, 0.0
      %v3173 = vand.u32 %v1590, 2147483648
      %v3174 = vsel %vm3172, %v3173, %v3171
      %v3175 = vrsqrt.pop %v1591
      %v3176 = vmul.f32 %v1591, %v3175
      %vm3177 = vcmp.eq.f32.partialorder %v1591, inf
      %v3178 = vsel %vm3177, %v1591, %v3176
      %vm3179 = vcmp.eq.f32.partialorder %v1591, 0.0
      %v3180 = vand.u32 %v1591, 2147483648
      %v3181 = vsel %vm3179, %v3180, %v3178
      %v3182 = vrsqrt.pop %v1592
      %v3183 = vmul.f32 %v1592, %v3182
      %vm3184 = vcmp.eq.f32.partialorder %v1592, inf
      %v3185 = vsel %vm3184, %v1592, %v3183
      %vm3186 = vcmp.eq.f32.partialorder %v1592, 0.0
      %v3187 = vand.u32 %v1592, 2147483648
      %v3188 = vsel %vm3186, %v3187, %v3185
      %v3189 = vrsqrt.pop %v1593
      %v3190 = vmul.f32 %v1593, %v3189
      %vm3191 = vcmp.eq.f32.partialorder %v1593, inf
      %v3192 = vsel %vm3191, %v1593, %v3190
      %vm3193 = vcmp.eq.f32.partialorder %v1593, 0.0
      %v3194 = vand.u32 %v1593, 2147483648
      %v3195 = vsel %vm3193, %v3194, %v3192
      %v3196 = vrsqrt.pop %v1594
      %v3197 = vmul.f32 %v1594, %v3196
      %vm3198 = vcmp.eq.f32.partialorder %v1594, inf
      %v3199 = vsel %vm3198, %v1594, %v3197
      %vm3200 = vcmp.eq.f32.partialorder %v1594, 0.0
      %v3201 = vand.u32 %v1594, 2147483648
      %v3202 = vsel %vm3200, %v3201, %v3199
      %v3203 = vrsqrt.pop %v1595
      %v3204 = vmul.f32 %v1595, %v3203
      %vm3205 = vcmp.eq.f32.partialorder %v1595, inf
      %v3206 = vsel %vm3205, %v1595, %v3204
      %vm3207 = vcmp.eq.f32.partialorder %v1595, 0.0
      %v3208 = vand.u32 %v1595, 2147483648
      %v3209 = vsel %vm3207, %v3208, %v3206
      %v3210 = vrsqrt.pop %v1596
      %v3211 = vmul.f32 %v1596, %v3210
      %vm3212 = vcmp.eq.f32.partialorder %v1596, inf
      %v3213 = vsel %vm3212, %v1596, %v3211
      %vm3214 = vcmp.eq.f32.partialorder %v1596, 0.0
      %v3215 = vand.u32 %v1596, 2147483648
      %v3216 = vsel %vm3214, %v3215, %v3213
      %v3217 = vrsqrt.pop %v1597
      %v3218 = vmul.f32 %v1597, %v3217
      %vm3219 = vcmp.eq.f32.partialorder %v1597, inf
      %v3220 = vsel %vm3219, %v1597, %v3218
      %vm3221 = vcmp.eq.f32.partialorder %v1597, 0.0
      %v3222 = vand.u32 %v1597, 2147483648
      %v3223 = vsel %vm3221, %v3222, %v3220
      %v3224 = vrsqrt.pop %v1598
      %v3225 = vmul.f32 %v1598, %v3224
      %vm3226 = vcmp.eq.f32.partialorder %v1598, inf
      %v3227 = vsel %vm3226, %v1598, %v3225
      %vm3228 = vcmp.eq.f32.partialorder %v1598, 0.0
      %v3229 = vand.u32 %v1598, 2147483648
      %v3230 = vsel %vm3228, %v3229, %v3227
      %v3231 = vrsqrt.pop %v1599
      %v3232 = vmul.f32 %v1599, %v3231
      %vm3233 = vcmp.eq.f32.partialorder %v1599, inf
      %v3234 = vsel %vm3233, %v1599, %v3232
      %vm3235 = vcmp.eq.f32.partialorder %v1599, 0.0
      %v3236 = vand.u32 %v1599, 2147483648
      %v3237 = vsel %vm3235, %v3236, %v3234
      %v3238 = vrsqrt.pop %v1600
      %v3239 = vmul.f32 %v1600, %v3238
      %vm3240 = vcmp.eq.f32.partialorder %v1600, inf
      %v3241 = vsel %vm3240, %v1600, %v3239
      %vm3242 = vcmp.eq.f32.partialorder %v1600, 0.0
      %v3243 = vand.u32 %v1600, 2147483648
      %v3244 = vsel %vm3242, %v3243, %v3241
      %v3245 = vrsqrt.pop %v1601
      %v3246 = vmul.f32 %v1601, %v3245
      %vm3247 = vcmp.eq.f32.partialorder %v1601, inf
      %v3248 = vsel %vm3247, %v1601, %v3246
      %vm3249 = vcmp.eq.f32.partialorder %v1601, 0.0
      %v3250 = vand.u32 %v1601, 2147483648
      %v3251 = vsel %vm3249, %v3250, %v3248
      %v3252 = vrsqrt.pop %v1602
      %v3253 = vmul.f32 %v1602, %v3252
      %vm3254 = vcmp.eq.f32.partialorder %v1602, inf
      %v3255 = vsel %vm3254, %v1602, %v3253
      %vm3256 = vcmp.eq.f32.partialorder %v1602, 0.0
      %v3257 = vand.u32 %v1602, 2147483648
      %v3258 = vsel %vm3256, %v3257, %v3255
      %v3259 = vrsqrt.pop %v1603
      %v3260 = vmul.f32 %v1603, %v3259
      %vm3261 = vcmp.eq.f32.partialorder %v1603, inf
      %v3262 = vsel %vm3261, %v1603, %v3260
      %vm3263 = vcmp.eq.f32.partialorder %v1603, 0.0
      %v3264 = vand.u32 %v1603, 2147483648
      %v3265 = vsel %vm3263, %v3264, %v3262
      %v3266 = vrsqrt.pop %v1604
      %v3267 = vmul.f32 %v1604, %v3266
      %vm3268 = vcmp.eq.f32.partialorder %v1604, inf
      %v3269 = vsel %vm3268, %v1604, %v3267
      %vm3270 = vcmp.eq.f32.partialorder %v1604, 0.0
      %v3271 = vand.u32 %v1604, 2147483648
      %v3272 = vsel %vm3270, %v3271, %v3269
      %v3273 = vrsqrt.pop %v1605
      %v3274 = vmul.f32 %v1605, %v3273
      %vm3275 = vcmp.eq.f32.partialorder %v1605, inf
      %v3276 = vsel %vm3275, %v1605, %v3274
      %vm3277 = vcmp.eq.f32.partialorder %v1605, 0.0
      %v3278 = vand.u32 %v1605, 2147483648
      %v3279 = vsel %vm3277, %v3278, %v3276
      %v3280 = vrsqrt.pop %v1606
      %v3281 = vmul.f32 %v1606, %v3280
      %vm3282 = vcmp.eq.f32.partialorder %v1606, inf
      %v3283 = vsel %vm3282, %v1606, %v3281
      %vm3284 = vcmp.eq.f32.partialorder %v1606, 0.0
      %v3285 = vand.u32 %v1606, 2147483648
      %v3286 = vsel %vm3284, %v3285, %v3283
      %v3287 = vrsqrt.pop %v1607
      %v3288 = vmul.f32 %v1607, %v3287
      %vm3289 = vcmp.eq.f32.partialorder %v1607, inf
      %v3290 = vsel %vm3289, %v1607, %v3288
      %vm3291 = vcmp.eq.f32.partialorder %v1607, 0.0
      %v3292 = vand.u32 %v1607, 2147483648
      %v3293 = vsel %vm3291, %v3292, %v3290
      %v3294 = vrsqrt.pop %v1608
      %v3295 = vmul.f32 %v1608, %v3294
      %vm3296 = vcmp.eq.f32.partialorder %v1608, inf
      %v3297 = vsel %vm3296, %v1608, %v3295
      %vm3298 = vcmp.eq.f32.partialorder %v1608, 0.0
      %v3299 = vand.u32 %v1608, 2147483648
      %v3300 = vsel %vm3298, %v3299, %v3297
      %v3301 = vrsqrt.pop %v1609
      %v3302 = vmul.f32 %v1609, %v3301
      %vm3303 = vcmp.eq.f32.partialorder %v1609, inf
      %v3304 = vsel %vm3303, %v1609, %v3302
      %vm3305 = vcmp.eq.f32.partialorder %v1609, 0.0
      %v3306 = vand.u32 %v1609, 2147483648
      %v3307 = vsel %vm3305, %v3306, %v3304
      %v3308 = vrsqrt.pop %v1610
      %v3309 = vmul.f32 %v1610, %v3308
      %vm3310 = vcmp.eq.f32.partialorder %v1610, inf
      %v3311 = vsel %vm3310, %v1610, %v3309
      %vm3312 = vcmp.eq.f32.partialorder %v1610, 0.0
      %v3313 = vand.u32 %v1610, 2147483648
      %v3314 = vsel %vm3312, %v3313, %v3311
      %v3315 = vrsqrt.pop %v1611
      %v3316 = vmul.f32 %v1611, %v3315
      %vm3317 = vcmp.eq.f32.partialorder %v1611, inf
      %v3318 = vsel %vm3317, %v1611, %v3316
      %vm3319 = vcmp.eq.f32.partialorder %v1611, 0.0
      %v3320 = vand.u32 %v1611, 2147483648
      %v3321 = vsel %vm3319, %v3320, %v3318
      %v3322 = vrsqrt.pop %v1612
      %v3323 = vmul.f32 %v1612, %v3322
      %vm3324 = vcmp.eq.f32.partialorder %v1612, inf
      %v3325 = vsel %vm3324, %v1612, %v3323
      %vm3326 = vcmp.eq.f32.partialorder %v1612, 0.0
      %v3327 = vand.u32 %v1612, 2147483648
      %v3328 = vsel %vm3326, %v3327, %v3325
      %v3329 = vrsqrt.pop %v1613
      %v3330 = vmul.f32 %v1613, %v3329
      %vm3331 = vcmp.eq.f32.partialorder %v1613, inf
      %v3332 = vsel %vm3331, %v1613, %v3330
      %vm3333 = vcmp.eq.f32.partialorder %v1613, 0.0
      %v3334 = vand.u32 %v1613, 2147483648
      %v3335 = vsel %vm3333, %v3334, %v3332
      %v3336 = vrsqrt.pop %v1614
      %v3337 = vmul.f32 %v1614, %v3336
      %vm3338 = vcmp.eq.f32.partialorder %v1614, inf
      %v3339 = vsel %vm3338, %v1614, %v3337
      %vm3340 = vcmp.eq.f32.partialorder %v1614, 0.0
      %v3341 = vand.u32 %v1614, 2147483648
      %v3342 = vsel %vm3340, %v3341, %v3339
      %v3343 = vrsqrt.pop %v1615
      %v3344 = vmul.f32 %v1615, %v3343
      %vm3345 = vcmp.eq.f32.partialorder %v1615, inf
      %v3346 = vsel %vm3345, %v1615, %v3344
      %vm3347 = vcmp.eq.f32.partialorder %v1615, 0.0
      %v3348 = vand.u32 %v1615, 2147483648
      %v3349 = vsel %vm3347, %v3348, %v3346
      %v3350 = vrsqrt.pop %v1616
      %v3351 = vmul.f32 %v1616, %v3350
      %vm3352 = vcmp.eq.f32.partialorder %v1616, inf
      %v3353 = vsel %vm3352, %v1616, %v3351
      %vm3354 = vcmp.eq.f32.partialorder %v1616, 0.0
      %v3355 = vand.u32 %v1616, 2147483648
      %v3356 = vsel %vm3354, %v3355, %v3353
      %v3357 = vrsqrt.pop %v1617
      %v3358 = vmul.f32 %v1617, %v3357
      %vm3359 = vcmp.eq.f32.partialorder %v1617, inf
      %v3360 = vsel %vm3359, %v1617, %v3358
      %vm3361 = vcmp.eq.f32.partialorder %v1617, 0.0
      %v3362 = vand.u32 %v1617, 2147483648
      %v3363 = vsel %vm3361, %v3362, %v3360
      %v3364 = vrsqrt.pop %v1618
      %v3365 = vmul.f32 %v1618, %v3364
      %vm3366 = vcmp.eq.f32.partialorder %v1618, inf
      %v3367 = vsel %vm3366, %v1618, %v3365
      %vm3368 = vcmp.eq.f32.partialorder %v1618, 0.0
      %v3369 = vand.u32 %v1618, 2147483648
      %v3370 = vsel %vm3368, %v3369, %v3367
      %v3371 = vrsqrt.pop %v1619
      %v3372 = vmul.f32 %v1619, %v3371
      %vm3373 = vcmp.eq.f32.partialorder %v1619, inf
      %v3374 = vsel %vm3373, %v1619, %v3372
      %vm3375 = vcmp.eq.f32.partialorder %v1619, 0.0
      %v3376 = vand.u32 %v1619, 2147483648
      %v3377 = vsel %vm3375, %v3376, %v3374
      %v3378 = vrsqrt.pop %v1620
      %v3379 = vmul.f32 %v1620, %v3378
      %vm3380 = vcmp.eq.f32.partialorder %v1620, inf
      %v3381 = vsel %vm3380, %v1620, %v3379
      %vm3382 = vcmp.eq.f32.partialorder %v1620, 0.0
      %v3383 = vand.u32 %v1620, 2147483648
      %v3384 = vsel %vm3382, %v3383, %v3381
      %v3385 = vrsqrt.pop %v1621
      %v3386 = vmul.f32 %v1621, %v3385
      %vm3387 = vcmp.eq.f32.partialorder %v1621, inf
      %v3388 = vsel %vm3387, %v1621, %v3386
      %vm3389 = vcmp.eq.f32.partialorder %v1621, 0.0
      %v3390 = vand.u32 %v1621, 2147483648
      %v3391 = vsel %vm3389, %v3390, %v3388
      %v3392 = vrsqrt.pop %v1622
      %v3393 = vmul.f32 %v1622, %v3392
      %vm3394 = vcmp.eq.f32.partialorder %v1622, inf
      %v3395 = vsel %vm3394, %v1622, %v3393
      %vm3396 = vcmp.eq.f32.partialorder %v1622, 0.0
      %v3397 = vand.u32 %v1622, 2147483648
      %v3398 = vsel %vm3396, %v3397, %v3395
      %v3399 = vrsqrt.pop %v1623
      %v3400 = vmul.f32 %v1623, %v3399
      %vm3401 = vcmp.eq.f32.partialorder %v1623, inf
      %v3402 = vsel %vm3401, %v1623, %v3400
      %vm3403 = vcmp.eq.f32.partialorder %v1623, 0.0
      %v3404 = vand.u32 %v1623, 2147483648
      %v3405 = vsel %vm3403, %v3404, %v3402
      %v3406 = vrsqrt.pop %v1624
      %v3407 = vmul.f32 %v1624, %v3406
      %vm3408 = vcmp.eq.f32.partialorder %v1624, inf
      %v3409 = vsel %vm3408, %v1624, %v3407
      %vm3410 = vcmp.eq.f32.partialorder %v1624, 0.0
      %v3411 = vand.u32 %v1624, 2147483648
      %v3412 = vsel %vm3410, %v3411, %v3409
      %v3413 = vrsqrt.pop %v1625
      %v3414 = vmul.f32 %v1625, %v3413
      %vm3415 = vcmp.eq.f32.partialorder %v1625, inf
      %v3416 = vsel %vm3415, %v1625, %v3414
      %vm3417 = vcmp.eq.f32.partialorder %v1625, 0.0
      %v3418 = vand.u32 %v1625, 2147483648
      %v3419 = vsel %vm3417, %v3418, %v3416
      %v3420 = vrsqrt.pop %v1626
      %v3421 = vmul.f32 %v1626, %v3420
      %vm3422 = vcmp.eq.f32.partialorder %v1626, inf
      %v3423 = vsel %vm3422, %v1626, %v3421
      %vm3424 = vcmp.eq.f32.partialorder %v1626, 0.0
      %v3425 = vand.u32 %v1626, 2147483648
      %v3426 = vsel %vm3424, %v3425, %v3423
      %v3427 = vrsqrt.pop %v1627
      %v3428 = vmul.f32 %v1627, %v3427
      %vm3429 = vcmp.eq.f32.partialorder %v1627, inf
      %v3430 = vsel %vm3429, %v1627, %v3428
      %vm3431 = vcmp.eq.f32.partialorder %v1627, 0.0
      %v3432 = vand.u32 %v1627, 2147483648
      %v3433 = vsel %vm3431, %v3432, %v3430
      %v3434 = vrsqrt.pop %v1628
      %v3435 = vmul.f32 %v1628, %v3434
      %vm3436 = vcmp.eq.f32.partialorder %v1628, inf
      %v3437 = vsel %vm3436, %v1628, %v3435
      %vm3438 = vcmp.eq.f32.partialorder %v1628, 0.0
      %v3439 = vand.u32 %v1628, 2147483648
      %v3440 = vsel %vm3438, %v3439, %v3437
      %v3441 = vrsqrt.pop %v1629
      %v3442 = vmul.f32 %v1629, %v3441
      %vm3443 = vcmp.eq.f32.partialorder %v1629, inf
      %v3444 = vsel %vm3443, %v1629, %v3442
      %vm3445 = vcmp.eq.f32.partialorder %v1629, 0.0
      %v3446 = vand.u32 %v1629, 2147483648
      %v3447 = vsel %vm3445, %v3446, %v3444
      %v3448 = vrsqrt.pop %v1630
      %v3449 = vmul.f32 %v1630, %v3448
      %vm3450 = vcmp.eq.f32.partialorder %v1630, inf
      %v3451 = vsel %vm3450, %v1630, %v3449
      %vm3452 = vcmp.eq.f32.partialorder %v1630, 0.0
      %v3453 = vand.u32 %v1630, 2147483648
      %v3454 = vsel %vm3452, %v3453, %v3451
      %v3455 = vrsqrt.pop %v1631
      %v3456 = vmul.f32 %v1631, %v3455
      %vm3457 = vcmp.eq.f32.partialorder %v1631, inf
      %v3458 = vsel %vm3457, %v1631, %v3456
      %vm3459 = vcmp.eq.f32.partialorder %v1631, 0.0
      %v3460 = vand.u32 %v1631, 2147483648
      %v3461 = vsel %vm3459, %v3460, %v3458
      %v3462 = vrsqrt.pop %v1632
      %v3463 = vmul.f32 %v1632, %v3462
      %vm3464 = vcmp.eq.f32.partialorder %v1632, inf
      %v3465 = vsel %vm3464, %v1632, %v3463
      %vm3466 = vcmp.eq.f32.partialorder %v1632, 0.0
      %v3467 = vand.u32 %v1632, 2147483648
      %v3468 = vsel %vm3466, %v3467, %v3465
      %v3469 = vrsqrt.pop %v1633
      %v3470 = vmul.f32 %v1633, %v3469
      %vm3471 = vcmp.eq.f32.partialorder %v1633, inf
      %v3472 = vsel %vm3471, %v1633, %v3470
      %vm3473 = vcmp.eq.f32.partialorder %v1633, 0.0
      %v3474 = vand.u32 %v1633, 2147483648
      %v3475 = vsel %vm3473, %v3474, %v3472
      %v3476 = vrsqrt.pop %v1634
      %v3477 = vmul.f32 %v1634, %v3476
      %vm3478 = vcmp.eq.f32.partialorder %v1634, inf
      %v3479 = vsel %vm3478, %v1634, %v3477
      %vm3480 = vcmp.eq.f32.partialorder %v1634, 0.0
      %v3481 = vand.u32 %v1634, 2147483648
      %v3482 = vsel %vm3480, %v3481, %v3479
      %v3483 = vrsqrt.pop %v1635
      %v3484 = vmul.f32 %v1635, %v3483
      %vm3485 = vcmp.eq.f32.partialorder %v1635, inf
      %v3486 = vsel %vm3485, %v1635, %v3484
      %vm3487 = vcmp.eq.f32.partialorder %v1635, 0.0
      %v3488 = vand.u32 %v1635, 2147483648
      %v3489 = vsel %vm3487, %v3488, %v3486
      %v3490 = vrsqrt.pop %v1636
      %v3491 = vmul.f32 %v1636, %v3490
      %vm3492 = vcmp.eq.f32.partialorder %v1636, inf
      %v3493 = vsel %vm3492, %v1636, %v3491
      %vm3494 = vcmp.eq.f32.partialorder %v1636, 0.0
      %v3495 = vand.u32 %v1636, 2147483648
      %v3496 = vsel %vm3494, %v3495, %v3493
      %v3497 = vrsqrt.pop %v1637
      %v3498 = vmul.f32 %v1637, %v3497
      %vm3499 = vcmp.eq.f32.partialorder %v1637, inf
      %v3500 = vsel %vm3499, %v1637, %v3498
      %vm3501 = vcmp.eq.f32.partialorder %v1637, 0.0
      %v3502 = vand.u32 %v1637, 2147483648
      %v3503 = vsel %vm3501, %v3502, %v3500
      %v3504 = vrsqrt.pop %v1638
      %v3505 = vmul.f32 %v1638, %v3504
      %vm3506 = vcmp.eq.f32.partialorder %v1638, inf
      %v3507 = vsel %vm3506, %v1638, %v3505
      %vm3508 = vcmp.eq.f32.partialorder %v1638, 0.0
      %v3509 = vand.u32 %v1638, 2147483648
      %v3510 = vsel %vm3508, %v3509, %v3507
      %v3511 = vrsqrt.pop %v1639
      %v3512 = vmul.f32 %v1639, %v3511
      %vm3513 = vcmp.eq.f32.partialorder %v1639, inf
      %v3514 = vsel %vm3513, %v1639, %v3512
      %vm3515 = vcmp.eq.f32.partialorder %v1639, 0.0
      %v3516 = vand.u32 %v1639, 2147483648
      %v3517 = vsel %vm3515, %v3516, %v3514
      %v3518 = vrsqrt.pop %v1640
      %v3519 = vmul.f32 %v1640, %v3518
      %vm3520 = vcmp.eq.f32.partialorder %v1640, inf
      %v3521 = vsel %vm3520, %v1640, %v3519
      %vm3522 = vcmp.eq.f32.partialorder %v1640, 0.0
      %v3523 = vand.u32 %v1640, 2147483648
      %v3524 = vsel %vm3522, %v3523, %v3521
      %v3525 = vrsqrt.pop %v1641
      %v3526 = vmul.f32 %v1641, %v3525
      %vm3527 = vcmp.eq.f32.partialorder %v1641, inf
      %v3528 = vsel %vm3527, %v1641, %v3526
      %vm3529 = vcmp.eq.f32.partialorder %v1641, 0.0
      %v3530 = vand.u32 %v1641, 2147483648
      %v3531 = vsel %vm3529, %v3530, %v3528
      %v3532 = vrsqrt.pop %v1642
      %v3533 = vmul.f32 %v1642, %v3532
      %vm3534 = vcmp.eq.f32.partialorder %v1642, inf
      %v3535 = vsel %vm3534, %v1642, %v3533
      %vm3536 = vcmp.eq.f32.partialorder %v1642, 0.0
      %v3537 = vand.u32 %v1642, 2147483648
      %v3538 = vsel %vm3536, %v3537, %v3535
      %v3539 = vrsqrt.pop %v1643
      %v3540 = vmul.f32 %v1643, %v3539
      %vm3541 = vcmp.eq.f32.partialorder %v1643, inf
      %v3542 = vsel %vm3541, %v1643, %v3540
      %vm3543 = vcmp.eq.f32.partialorder %v1643, 0.0
      %v3544 = vand.u32 %v1643, 2147483648
      %v3545 = vsel %vm3543, %v3544, %v3542
      %v3546 = vrsqrt.pop %v1644
      %v3547 = vmul.f32 %v1644, %v3546
      %vm3548 = vcmp.eq.f32.partialorder %v1644, inf
      %v3549 = vsel %vm3548, %v1644, %v3547
      %vm3550 = vcmp.eq.f32.partialorder %v1644, 0.0
      %v3551 = vand.u32 %v1644, 2147483648
      %v3552 = vsel %vm3550, %v3551, %v3549
      %v3553 = vrsqrt.pop %v1645
      %v3554 = vmul.f32 %v1645, %v3553
      %vm3555 = vcmp.eq.f32.partialorder %v1645, inf
      %v3556 = vsel %vm3555, %v1645, %v3554
      %vm3557 = vcmp.eq.f32.partialorder %v1645, 0.0
      %v3558 = vand.u32 %v1645, 2147483648
      %v3559 = vsel %vm3557, %v3558, %v3556
      %v3560 = vrsqrt.pop %v1646
      %v3561 = vmul.f32 %v1646, %v3560
      %vm3562 = vcmp.eq.f32.partialorder %v1646, inf
      %v3563 = vsel %vm3562, %v1646, %v3561
      %vm3564 = vcmp.eq.f32.partialorder %v1646, 0.0
      %v3565 = vand.u32 %v1646, 2147483648
      %v3566 = vsel %vm3564, %v3565, %v3563
      %v3567 = vrsqrt.pop %v1647
      %v3568 = vmul.f32 %v1647, %v3567
      %vm3569 = vcmp.eq.f32.partialorder %v1647, inf
      %v3570 = vsel %vm3569, %v1647, %v3568
      %vm3571 = vcmp.eq.f32.partialorder %v1647, 0.0
      %v3572 = vand.u32 %v1647, 2147483648
      %v3573 = vsel %vm3571, %v3572, %v3570
      %v3574 = vrsqrt.pop %v1648
      %v3575 = vmul.f32 %v1648, %v3574
      %vm3576 = vcmp.eq.f32.partialorder %v1648, inf
      %v3577 = vsel %vm3576, %v1648, %v3575
      %vm3578 = vcmp.eq.f32.partialorder %v1648, 0.0
      %v3579 = vand.u32 %v1648, 2147483648
      %v3580 = vsel %vm3578, %v3579, %v3577
      %v3581 = vrsqrt.pop %v1649
      %v3582 = vmul.f32 %v1649, %v3581
      %vm3583 = vcmp.eq.f32.partialorder %v1649, inf
      %v3584 = vsel %vm3583, %v1649, %v3582
      %vm3585 = vcmp.eq.f32.partialorder %v1649, 0.0
      %v3586 = vand.u32 %v1649, 2147483648
      %v3587 = vsel %vm3585, %v3586, %v3584
      %v3588 = vrsqrt.pop %v1650
      %v3589 = vmul.f32 %v1650, %v3588
      %vm3590 = vcmp.eq.f32.partialorder %v1650, inf
      %v3591 = vsel %vm3590, %v1650, %v3589
      %vm3592 = vcmp.eq.f32.partialorder %v1650, 0.0
      %v3593 = vand.u32 %v1650, 2147483648
      %v3594 = vsel %vm3592, %v3593, %v3591
      %v3595 = vrsqrt.pop %v1651
      %v3596 = vmul.f32 %v1651, %v3595
      %vm3597 = vcmp.eq.f32.partialorder %v1651, inf
      %v3598 = vsel %vm3597, %v1651, %v3596
      %vm3599 = vcmp.eq.f32.partialorder %v1651, 0.0
      %v3600 = vand.u32 %v1651, 2147483648
      %v3601 = vsel %vm3599, %v3600, %v3598
      %v3602 = vrsqrt.pop %v1652
      %v3603 = vmul.f32 %v1652, %v3602
      %vm3604 = vcmp.eq.f32.partialorder %v1652, inf
      %v3605 = vsel %vm3604, %v1652, %v3603
      %vm3606 = vcmp.eq.f32.partialorder %v1652, 0.0
      %v3607 = vand.u32 %v1652, 2147483648
      %v3608 = vsel %vm3606, %v3607, %v3605
      %v3609 = vrsqrt.pop %v1653
      %v3610 = vmul.f32 %v1653, %v3609
      %vm3611 = vcmp.eq.f32.partialorder %v1653, inf
      %v3612 = vsel %vm3611, %v1653, %v3610
      %vm3613 = vcmp.eq.f32.partialorder %v1653, 0.0
      %v3614 = vand.u32 %v1653, 2147483648
      %v3615 = vsel %vm3613, %v3614, %v3612
      %v3616 = vrsqrt.pop %v1654
      %v3617 = vmul.f32 %v1654, %v3616
      %vm3618 = vcmp.eq.f32.partialorder %v1654, inf
      %v3619 = vsel %vm3618, %v1654, %v3617
      %vm3620 = vcmp.eq.f32.partialorder %v1654, 0.0
      %v3621 = vand.u32 %v1654, 2147483648
      %v3622 = vsel %vm3620, %v3621, %v3619
      %v3623 = vrsqrt.pop %v1655
      %v3624 = vmul.f32 %v1655, %v3623
      %vm3625 = vcmp.eq.f32.partialorder %v1655, inf
      %v3626 = vsel %vm3625, %v1655, %v3624
      %vm3627 = vcmp.eq.f32.partialorder %v1655, 0.0
      %v3628 = vand.u32 %v1655, 2147483648
      %v3629 = vsel %vm3627, %v3628, %v3626
      %v3630 = vrsqrt.pop %v1656
      %v3631 = vmul.f32 %v1656, %v3630
      %vm3632 = vcmp.eq.f32.partialorder %v1656, inf
      %v3633 = vsel %vm3632, %v1656, %v3631
      %vm3634 = vcmp.eq.f32.partialorder %v1656, 0.0
      %v3635 = vand.u32 %v1656, 2147483648
      %v3636 = vsel %vm3634, %v3635, %v3633
      %v3637 = vrsqrt.pop %v1657
      %v3638 = vmul.f32 %v1657, %v3637
      %vm3639 = vcmp.eq.f32.partialorder %v1657, inf
      %v3640 = vsel %vm3639, %v1657, %v3638
      %vm3641 = vcmp.eq.f32.partialorder %v1657, 0.0
      %v3642 = vand.u32 %v1657, 2147483648
      %v3643 = vsel %vm3641, %v3642, %v3640
      %v3644 = vrsqrt.pop %v1658
      %v3645 = vmul.f32 %v1658, %v3644
      %vm3646 = vcmp.eq.f32.partialorder %v1658, inf
      %v3647 = vsel %vm3646, %v1658, %v3645
      %vm3648 = vcmp.eq.f32.partialorder %v1658, 0.0
      %v3649 = vand.u32 %v1658, 2147483648
      %v3650 = vsel %vm3648, %v3649, %v3647
      %v3651 = vrsqrt.pop %v1659
      %v3652 = vmul.f32 %v1659, %v3651
      %vm3653 = vcmp.eq.f32.partialorder %v1659, inf
      %v3654 = vsel %vm3653, %v1659, %v3652
      %vm3655 = vcmp.eq.f32.partialorder %v1659, 0.0
      %v3656 = vand.u32 %v1659, 2147483648
      %v3657 = vsel %vm3655, %v3656, %v3654
      %v3658 = vrsqrt.pop %v1660
      %v3659 = vmul.f32 %v1660, %v3658
      %vm3660 = vcmp.eq.f32.partialorder %v1660, inf
      %v3661 = vsel %vm3660, %v1660, %v3659
      %vm3662 = vcmp.eq.f32.partialorder %v1660, 0.0
      %v3663 = vand.u32 %v1660, 2147483648
      %v3664 = vsel %vm3662, %v3663, %v3661
      %v3665 = vrsqrt.pop %v1661
      %v3666 = vmul.f32 %v1661, %v3665
      %vm3667 = vcmp.eq.f32.partialorder %v1661, inf
      %v3668 = vsel %vm3667, %v1661, %v3666
      %vm3669 = vcmp.eq.f32.partialorder %v1661, 0.0
      %v3670 = vand.u32 %v1661, 2147483648
      %v3671 = vsel %vm3669, %v3670, %v3668
      %v3672 = vrsqrt.pop %v1662
      %v3673 = vmul.f32 %v1662, %v3672
      %vm3674 = vcmp.eq.f32.partialorder %v1662, inf
      %v3675 = vsel %vm3674, %v1662, %v3673
      %vm3676 = vcmp.eq.f32.partialorder %v1662, 0.0
      %v3677 = vand.u32 %v1662, 2147483648
      %v3678 = vsel %vm3676, %v3677, %v3675
      %v3679 = vrsqrt.pop %v1663
      %v3680 = vmul.f32 %v1663, %v3679
      %vm3681 = vcmp.eq.f32.partialorder %v1663, inf
      %v3682 = vsel %vm3681, %v1663, %v3680
      %vm3683 = vcmp.eq.f32.partialorder %v1663, 0.0
      %v3684 = vand.u32 %v1663, 2147483648
      %v3685 = vsel %vm3683, %v3684, %v3682
      %v3686 = vrsqrt.pop %v1664
      %v3687 = vmul.f32 %v1664, %v3686
      %vm3688 = vcmp.eq.f32.partialorder %v1664, inf
      %v3689 = vsel %vm3688, %v1664, %v3687
      %vm3690 = vcmp.eq.f32.partialorder %v1664, 0.0
      %v3691 = vand.u32 %v1664, 2147483648
      %v3692 = vsel %vm3690, %v3691, %v3689
      %v3693 = vrsqrt.pop %v1665
      %v3694 = vmul.f32 %v1665, %v3693
      %vm3695 = vcmp.eq.f32.partialorder %v1665, inf
      %v3696 = vsel %vm3695, %v1665, %v3694
      %vm3697 = vcmp.eq.f32.partialorder %v1665, 0.0
      %v3698 = vand.u32 %v1665, 2147483648
      %v3699 = vsel %vm3697, %v3698, %v3696
      %v3700 = vrsqrt.pop %v1666
      %v3701 = vmul.f32 %v1666, %v3700
      %vm3702 = vcmp.eq.f32.partialorder %v1666, inf
      %v3703 = vsel %vm3702, %v1666, %v3701
      %vm3704 = vcmp.eq.f32.partialorder %v1666, 0.0
      %v3705 = vand.u32 %v1666, 2147483648
      %v3706 = vsel %vm3704, %v3705, %v3703
      %v3707 = vrsqrt.pop %v1667
      %v3708 = vmul.f32 %v1667, %v3707
      %vm3709 = vcmp.eq.f32.partialorder %v1667, inf
      %v3710 = vsel %vm3709, %v1667, %v3708
      %vm3711 = vcmp.eq.f32.partialorder %v1667, 0.0
      %v3712 = vand.u32 %v1667, 2147483648
      %v3713 = vsel %vm3711, %v3712, %v3710
      %v3714 = vrsqrt.pop %v1668
      %v3715 = vmul.f32 %v1668, %v3714
      %vm3716 = vcmp.eq.f32.partialorder %v1668, inf
      %v3717 = vsel %vm3716, %v1668, %v3715
      %vm3718 = vcmp.eq.f32.partialorder %v1668, 0.0
      %v3719 = vand.u32 %v1668, 2147483648
      %v3720 = vsel %vm3718, %v3719, %v3717
      %v3721 = vrsqrt.pop %v1669
      %v3722 = vmul.f32 %v1669, %v3721
      %vm3723 = vcmp.eq.f32.partialorder %v1669, inf
      %v3724 = vsel %vm3723, %v1669, %v3722
      %vm3725 = vcmp.eq.f32.partialorder %v1669, 0.0
      %v3726 = vand.u32 %v1669, 2147483648
      %v3727 = vsel %vm3725, %v3726, %v3724
      %v3728 = vrsqrt.pop %v1670
      %v3729 = vmul.f32 %v1670, %v3728
      %vm3730 = vcmp.eq.f32.partialorder %v1670, inf
      %v3731 = vsel %vm3730, %v1670, %v3729
      %vm3732 = vcmp.eq.f32.partialorder %v1670, 0.0
      %v3733 = vand.u32 %v1670, 2147483648
      %v3734 = vsel %vm3732, %v3733, %v3731
      %v3735 = vrsqrt.pop %v1671
      %v3736 = vmul.f32 %v1671, %v3735
      %vm3737 = vcmp.eq.f32.partialorder %v1671, inf
      %v3738 = vsel %vm3737, %v1671, %v3736
      %vm3739 = vcmp.eq.f32.partialorder %v1671, 0.0
      %v3740 = vand.u32 %v1671, 2147483648
      %v3741 = vsel %vm3739, %v3740, %v3738
      %v3742 = vrsqrt.pop %v1672
      %v3743 = vmul.f32 %v1672, %v3742
      %vm3744 = vcmp.eq.f32.partialorder %v1672, inf
      %v3745 = vsel %vm3744, %v1672, %v3743
      %vm3746 = vcmp.eq.f32.partialorder %v1672, 0.0
      %v3747 = vand.u32 %v1672, 2147483648
      %v3748 = vsel %vm3746, %v3747, %v3745
      %v3749 = vrsqrt.pop %v1673
      %v3750 = vmul.f32 %v1673, %v3749
      %vm3751 = vcmp.eq.f32.partialorder %v1673, inf
      %v3752 = vsel %vm3751, %v1673, %v3750
      %vm3753 = vcmp.eq.f32.partialorder %v1673, 0.0
      %v3754 = vand.u32 %v1673, 2147483648
      %v3755 = vsel %vm3753, %v3754, %v3752
      %v3756 = vrsqrt.pop %v1674
      %v3757 = vmul.f32 %v1674, %v3756
      %vm3758 = vcmp.eq.f32.partialorder %v1674, inf
      %v3759 = vsel %vm3758, %v1674, %v3757
      %vm3760 = vcmp.eq.f32.partialorder %v1674, 0.0
      %v3761 = vand.u32 %v1674, 2147483648
      %v3762 = vsel %vm3760, %v3761, %v3759
      %v3763 = vrsqrt.pop %v1675
      %v3764 = vmul.f32 %v1675, %v3763
      %vm3765 = vcmp.eq.f32.partialorder %v1675, inf
      %v3766 = vsel %vm3765, %v1675, %v3764
      %vm3767 = vcmp.eq.f32.partialorder %v1675, 0.0
      %v3768 = vand.u32 %v1675, 2147483648
      %v3769 = vsel %vm3767, %v3768, %v3766
      %v3770 = vrsqrt.pop %v1676
      %v3771 = vmul.f32 %v1676, %v3770
      %vm3772 = vcmp.eq.f32.partialorder %v1676, inf
      %v3773 = vsel %vm3772, %v1676, %v3771
      %vm3774 = vcmp.eq.f32.partialorder %v1676, 0.0
      %v3775 = vand.u32 %v1676, 2147483648
      %v3776 = vsel %vm3774, %v3775, %v3773
      %3777 = vst [vmem:[%s175] sm:$0xff] %v1683
      %3778 = vst [vmem:[%s175 + $0x8] sm:$0xff] %v1690
      %3779 = vst [vmem:[%s175 + $0x10] sm:$0xff] %v1697
      %3780 = vst [vmem:[%s175 + $0x18] sm:$0xff] %v1704
      %3781 = vst [vmem:[%s175 + $0x20] sm:$0xff] %v1711
      %3782 = vst [vmem:[%s175 + $0x28] sm:$0xff] %v1718
      %3783 = vst [vmem:[%s175 + $0x30] sm:$0xff] %v1725
      %3784 = vst [vmem:[%s175 + $0x38] sm:$0xff] %v1732
      %3785 = vst [vmem:[%s175 + $0x40] sm:$0xff] %v1739
      %3786 = vst [vmem:[%s175 + $0x48] sm:$0xff] %v1746
      %3787 = vst [vmem:[%s175 + $0x50] sm:$0xff] %v1753
      %3788 = vst [vmem:[%s175 + $0x58] sm:$0xff] %v1760
      %3789 = vst [vmem:[%s175 + $0x60] sm:$0xff] %v1767
      %3790 = vst [vmem:[%s175 + $0x68] sm:$0xff] %v1774
      %3791 = vst [vmem:[%s175 + $0x70] sm:$0xff] %v1781
      %3792 = vst [vmem:[%s175 + $0x78] sm:$0xff] %v1788
      %3793 = vst [vmem:[%s175 + $0x80] sm:$0xff] %v1795
      %3794 = vst [vmem:[%s175 + $0x88] sm:$0xff] %v1802
      %3795 = vst [vmem:[%s175 + $0x90] sm:$0xff] %v1809
      %3796 = vst [vmem:[%s175 + $0x98] sm:$0xff] %v1816
      %3797 = vst [vmem:[%s175 + $0xa0] sm:$0xff] %v1823
      %3798 = vst [vmem:[%s175 + $0xa8] sm:$0xff] %v1830
      %3799 = vst [vmem:[%s175 + $0xb0] sm:$0xff] %v1837
      %3800 = vst [vmem:[%s175 + $0xb8] sm:$0xff] %v1844
      %3801 = vst [vmem:[%s175 + $0xc0] sm:$0xff] %v1851
      %3802 = vst [vmem:[%s175 + $0xc8] sm:$0xff] %v1858
      %3803 = vst [vmem:[%s175 + $0xd0] sm:$0xff] %v1865
      %3804 = vst [vmem:[%s175 + $0xd8] sm:$0xff] %v1872
      %3805 = vst [vmem:[%s175 + $0xe0] sm:$0xff] %v1879
      %3806 = vst [vmem:[%s175 + $0xe8] sm:$0xff] %v1886
      %3807 = vst [vmem:[%s175 + $0xf0] sm:$0xff] %v1893
      %3808 = vst [vmem:[%s175 + $0xf8] sm:$0xff] %v1900
      %3809 = vst [vmem:[%s175 + $0x100] sm:$0xff] %v1907
      %3810 = vst [vmem:[%s175 + $0x108] sm:$0xff] %v1914
      %3811 = vst [vmem:[%s175 + $0x110] sm:$0xff] %v1921
      %3812 = vst [vmem:[%s175 + $0x118] sm:$0xff] %v1928
      %3813 = vst [vmem:[%s175 + $0x120] sm:$0xff] %v1935
      %3814 = vst [vmem:[%s175 + $0x128] sm:$0xff] %v1942
      %3815 = vst [vmem:[%s175 + $0x130] sm:$0xff] %v1949
      %3816 = vst [vmem:[%s175 + $0x138] sm:$0xff] %v1956
      %3817 = vst [vmem:[%s175 + $0x140] sm:$0xff] %v1963
      %3818 = vst [vmem:[%s175 + $0x148] sm:$0xff] %v1970
      %3819 = vst [vmem:[%s175 + $0x150] sm:$0xff] %v1977
      %3820 = vst [vmem:[%s175 + $0x158] sm:$0xff] %v1984
      %3821 = vst [vmem:[%s175 + $0x160] sm:$0xff] %v1991
      %3822 = vst [vmem:[%s175 + $0x168] sm:$0xff] %v1998
      %3823 = vst [vmem:[%s175 + $0x170] sm:$0xff] %v2005
      %3824 = vst [vmem:[%s175 + $0x178] sm:$0xff] %v2012
      %3825 = vst [vmem:[%s175 + $0x180] sm:$0xff] %v2019
      %3826 = vst [vmem:[%s175 + $0x188] sm:$0xff] %v2026
      %3827 = vst [vmem:[%s175 + $0x190] sm:$0xff] %v2033
      %3828 = vst [vmem:[%s175 + $0x198] sm:$0xff] %v2040
      %3829 = vst [vmem:[%s175 + $0x1a0] sm:$0xff] %v2047
      %3830 = vst [vmem:[%s175 + $0x1a8] sm:$0xff] %v2054
      %3831 = vst [vmem:[%s175 + $0x1b0] sm:$0xff] %v2061
      %3832 = vst [vmem:[%s175 + $0x1b8] sm:$0xff] %v2068
      %3833 = vst [vmem:[%s175 + $0x1c0] sm:$0xff] %v2075
      %3834 = vst [vmem:[%s175 + $0x1c8] sm:$0xff] %v2082
      %3835 = vst [vmem:[%s175 + $0x1d0] sm:$0xff] %v2089
      %3836 = vst [vmem:[%s175 + $0x1d8] sm:$0xff] %v2096
      %3837 = vst [vmem:[%s175 + $0x1e0] sm:$0xff] %v2103
      %3838 = vst [vmem:[%s175 + $0x1e8] sm:$0xff] %v2110
      %3839 = vst [vmem:[%s175 + $0x1f0] sm:$0xff] %v2117
      %3840 = vst [vmem:[%s175 + $0x1f8] sm:$0xff] %v2124
      %3841 = vst [vmem:[%s175 + $0x200] sm:$0xff] %v2131
      %3842 = vst [vmem:[%s175 + $0x208] sm:$0xff] %v2138
      %3843 = vst [vmem:[%s175 + $0x210] sm:$0xff] %v2145
      %3844 = vst [vmem:[%s175 + $0x218] sm:$0xff] %v2152
      %3845 = vst [vmem:[%s175 + $0x220] sm:$0xff] %v2159
      %3846 = vst [vmem:[%s175 + $0x228] sm:$0xff] %v2166
      %3847 = vst [vmem:[%s175 + $0x230] sm:$0xff] %v2173
      %3848 = vst [vmem:[%s175 + $0x238] sm:$0xff] %v2180
      %3849 = vst [vmem:[%s175 + $0x240] sm:$0xff] %v2187
      %3850 = vst [vmem:[%s175 + $0x248] sm:$0xff] %v2194
      %3851 = vst [vmem:[%s175 + $0x250] sm:$0xff] %v2201
      %3852 = vst [vmem:[%s175 + $0x258] sm:$0xff] %v2208
      %3853 = vst [vmem:[%s175 + $0x260] sm:$0xff] %v2215
      %3854 = vst [vmem:[%s175 + $0x268] sm:$0xff] %v2222
      %3855 = vst [vmem:[%s175 + $0x270] sm:$0xff] %v2229
      %3856 = vst [vmem:[%s175 + $0x278] sm:$0xff] %v2236
      %3857 = vst [vmem:[%s175 + $0x280] sm:$0xff] %v2243
      %3858 = vst [vmem:[%s175 + $0x288] sm:$0xff] %v2250
      %3859 = vst [vmem:[%s175 + $0x290] sm:$0xff] %v2257
      %3860 = vst [vmem:[%s175 + $0x298] sm:$0xff] %v2264
      %3861 = vst [vmem:[%s175 + $0x2a0] sm:$0xff] %v2271
      %3862 = vst [vmem:[%s175 + $0x2a8] sm:$0xff] %v2278
      %3863 = vst [vmem:[%s175 + $0x2b0] sm:$0xff] %v2285
      %3864 = vst [vmem:[%s175 + $0x2b8] sm:$0xff] %v2292
      %3865 = vst [vmem:[%s175 + $0x2c0] sm:$0xff] %v2299
      %3866 = vst [vmem:[%s175 + $0x2c8] sm:$0xff] %v2306
      %3867 = vst [vmem:[%s175 + $0x2d0] sm:$0xff] %v2313
      %3868 = vst [vmem:[%s175 + $0x2d8] sm:$0xff] %v2320
      %3869 = vst [vmem:[%s175 + $0x2e0] sm:$0xff] %v2327
      %3870 = vst [vmem:[%s175 + $0x2e8] sm:$0xff] %v2334
      %3871 = vst [vmem:[%s175 + $0x2f0] sm:$0xff] %v2341
      %3872 = vst [vmem:[%s175 + $0x2f8] sm:$0xff] %v2348
      %3873 = vst [vmem:[%s175 + $0x300] sm:$0xff] %v2355
      %3874 = vst [vmem:[%s175 + $0x308] sm:$0xff] %v2362
      %3875 = vst [vmem:[%s175 + $0x310] sm:$0xff] %v2369
      %3876 = vst [vmem:[%s175 + $0x318] sm:$0xff] %v2376
      %3877 = vst [vmem:[%s175 + $0x320] sm:$0xff] %v2383
      %3878 = vst [vmem:[%s175 + $0x328] sm:$0xff] %v2390
      %3879 = vst [vmem:[%s175 + $0x330] sm:$0xff] %v2397
      %3880 = vst [vmem:[%s175 + $0x338] sm:$0xff] %v2404
      %3881 = vst [vmem:[%s175 + $0x340] sm:$0xff] %v2411
      %3882 = vst [vmem:[%s175 + $0x348] sm:$0xff] %v2418
      %3883 = vst [vmem:[%s175 + $0x350] sm:$0xff] %v2425
      %3884 = vst [vmem:[%s175 + $0x358] sm:$0xff] %v2432
      %3885 = vst [vmem:[%s175 + $0x360] sm:$0xff] %v2439
      %3886 = vst [vmem:[%s175 + $0x368] sm:$0xff] %v2446
      %3887 = vst [vmem:[%s175 + $0x370] sm:$0xff] %v2453
      %3888 = vst [vmem:[%s175 + $0x378] sm:$0xff] %v2460
      %3889 = vst [vmem:[%s175 + $0x380] sm:$0xff] %v2467
      %3890 = vst [vmem:[%s175 + $0x388] sm:$0xff] %v2474
      %3891 = vst [vmem:[%s175 + $0x390] sm:$0xff] %v2481
      %3892 = vst [vmem:[%s175 + $0x398] sm:$0xff] %v2488
      %3893 = vst [vmem:[%s175 + $0x3a0] sm:$0xff] %v2495
      %3894 = vst [vmem:[%s175 + $0x3a8] sm:$0xff] %v2502
      %3895 = vst [vmem:[%s175 + $0x3b0] sm:$0xff] %v2509
      %3896 = vst [vmem:[%s175 + $0x3b8] sm:$0xff] %v2516
      %3897 = vst [vmem:[%s175 + $0x3c0] sm:$0xff] %v2523
      %3898 = vst [vmem:[%s175 + $0x3c8] sm:$0xff] %v2530
      %3899 = vst [vmem:[%s175 + $0x3d0] sm:$0xff] %v2537
      %3900 = vst [vmem:[%s175 + $0x3d8] sm:$0xff] %v2544
      %3901 = vst [vmem:[%s175 + $0x3e0] sm:$0xff] %v2551
      %3902 = vst [vmem:[%s175 + $0x3e8] sm:$0xff] %v2558
      %3903 = vst [vmem:[%s175 + $0x3f0] sm:$0xff] %v2565
      %3904 = vst [vmem:[%s175 + $0x3f8] sm:$0xff] %v2572
      %3905 = vst [vmem:[%s175 + $0x400] sm:$0xff] %v2579
      %3906 = vst [vmem:[%s175 + $0x408] sm:$0xff] %v2586
      %3907 = vst [vmem:[%s175 + $0x410] sm:$0xff] %v2593
      %3908 = vst [vmem:[%s175 + $0x418] sm:$0xff] %v2600
      %3909 = vst [vmem:[%s175 + $0x420] sm:$0xff] %v2607
      %3910 = vst [vmem:[%s175 + $0x428] sm:$0xff] %v2614
      %3911 = vst [vmem:[%s175 + $0x430] sm:$0xff] %v2621
      %3912 = vst [vmem:[%s175 + $0x438] sm:$0xff] %v2628
      %3913 = vst [vmem:[%s175 + $0x440] sm:$0xff] %v2635
      %3914 = vst [vmem:[%s175 + $0x448] sm:$0xff] %v2642
      %3915 = vst [vmem:[%s175 + $0x450] sm:$0xff] %v2649
      %3916 = vst [vmem:[%s175 + $0x458] sm:$0xff] %v2656
      %3917 = vst [vmem:[%s175 + $0x460] sm:$0xff] %v2663
      %3918 = vst [vmem:[%s175 + $0x468] sm:$0xff] %v2670
      %3919 = vst [vmem:[%s175 + $0x470] sm:$0xff] %v2677
      %3920 = vst [vmem:[%s175 + $0x478] sm:$0xff] %v2684
      %3921 = vst [vmem:[%s175 + $0x480] sm:$0xff] %v2691
      %3922 = vst [vmem:[%s175 + $0x488] sm:$0xff] %v2698
      %3923 = vst [vmem:[%s175 + $0x490] sm:$0xff] %v2705
      %3924 = vst [vmem:[%s175 + $0x498] sm:$0xff] %v2712
      %3925 = vst [vmem:[%s175 + $0x4a0] sm:$0xff] %v2719
      %3926 = vst [vmem:[%s175 + $0x4a8] sm:$0xff] %v2726
      %3927 = vst [vmem:[%s175 + $0x4b0] sm:$0xff] %v2733
      %3928 = vst [vmem:[%s175 + $0x4b8] sm:$0xff] %v2740
      %3929 = vst [vmem:[%s175 + $0x4c0] sm:$0xff] %v2747
      %3930 = vst [vmem:[%s175 + $0x4c8] sm:$0xff] %v2754
      %3931 = vst [vmem:[%s175 + $0x4d0] sm:$0xff] %v2761
      %3932 = vst [vmem:[%s175 + $0x4d8] sm:$0xff] %v2768
      %3933 = vst [vmem:[%s175 + $0x4e0] sm:$0xff] %v2775
      %3934 = vst [vmem:[%s175 + $0x4e8] sm:$0xff] %v2782
      %3935 = vst [vmem:[%s175 + $0x4f0] sm:$0xff] %v2789
      %3936 = vst [vmem:[%s175 + $0x4f8] sm:$0xff] %v2796
      %3937 = vst [vmem:[%s175 + $0x500] sm:$0xff] %v2803
      %3938 = vst [vmem:[%s175 + $0x508] sm:$0xff] %v2810
      %3939 = vst [vmem:[%s175 + $0x510] sm:$0xff] %v2817
      %3940 = vst [vmem:[%s175 + $0x518] sm:$0xff] %v2824
      %3941 = vst [vmem:[%s175 + $0x520] sm:$0xff] %v2831
      %3942 = vst [vmem:[%s175 + $0x528] sm:$0xff] %v2838
      %3943 = vst [vmem:[%s175 + $0x530] sm:$0xff] %v2845
      %3944 = vst [vmem:[%s175 + $0x538] sm:$0xff] %v2852
      %3945 = vst [vmem:[%s175 + $0x540] sm:$0xff] %v2859
      %3946 = vst [vmem:[%s175 + $0x548] sm:$0xff] %v2866
      %3947 = vst [vmem:[%s175 + $0x550] sm:$0xff] %v2873
      %3948 = vst [vmem:[%s175 + $0x558] sm:$0xff] %v2880
      %3949 = vst [vmem:[%s175 + $0x560] sm:$0xff] %v2887
      %3950 = vst [vmem:[%s175 + $0x568] sm:$0xff] %v2894
      %3951 = vst [vmem:[%s175 + $0x570] sm:$0xff] %v2901
      %3952 = vst [vmem:[%s175 + $0x578] sm:$0xff] %v2908
      %3953 = vst [vmem:[%s175 + $0x580] sm:$0xff] %v2915
      %3954 = vst [vmem:[%s175 + $0x588] sm:$0xff] %v2922
      %3955 = vst [vmem:[%s175 + $0x590] sm:$0xff] %v2929
      %3956 = vst [vmem:[%s175 + $0x598] sm:$0xff] %v2936
      %3957 = vst [vmem:[%s175 + $0x5a0] sm:$0xff] %v2943
      %3958 = vst [vmem:[%s175 + $0x5a8] sm:$0xff] %v2950
      %3959 = vst [vmem:[%s175 + $0x5b0] sm:$0xff] %v2957
      %3960 = vst [vmem:[%s175 + $0x5b8] sm:$0xff] %v2964
      %3961 = vst [vmem:[%s175 + $0x5c0] sm:$0xff] %v2971
      %3962 = vst [vmem:[%s175 + $0x5c8] sm:$0xff] %v2978
      %3963 = vst [vmem:[%s175 + $0x5d0] sm:$0xff] %v2985
      %3964 = vst [vmem:[%s175 + $0x5d8] sm:$0xff] %v2992
      %3965 = vst [vmem:[%s175 + $0x5e0] sm:$0xff] %v2999
      %3966 = vst [vmem:[%s175 + $0x5e8] sm:$0xff] %v3006
      %3967 = vst [vmem:[%s175 + $0x5f0] sm:$0xff] %v3013
      %3968 = vst [vmem:[%s175 + $0x5f8] sm:$0xff] %v3020
      %3969 = vst [vmem:[%s175 + $0x600] sm:$0xff] %v3027
      %3970 = vst [vmem:[%s175 + $0x608] sm:$0xff] %v3034
      %3971 = vst [vmem:[%s175 + $0x610] sm:$0xff] %v3041
      %3972 = vst [vmem:[%s175 + $0x618] sm:$0xff] %v3048
      %3973 = vst [vmem:[%s175 + $0x620] sm:$0xff] %v3055
      %3974 = vst [vmem:[%s175 + $0x628] sm:$0xff] %v3062
      %3975 = vst [vmem:[%s175 + $0x630] sm:$0xff] %v3069
      %3976 = vst [vmem:[%s175 + $0x638] sm:$0xff] %v3076
      %3977 = vst [vmem:[%s175 + $0x640] sm:$0xff] %v3083
      %3978 = vst [vmem:[%s175 + $0x648] sm:$0xff] %v3090
      %3979 = vst [vmem:[%s175 + $0x650] sm:$0xff] %v3097
      %3980 = vst [vmem:[%s175 + $0x658] sm:$0xff] %v3104
      %3981 = vst [vmem:[%s175 + $0x660] sm:$0xff] %v3111
      %3982 = vst [vmem:[%s175 + $0x668] sm:$0xff] %v3118
      %3983 = vst [vmem:[%s175 + $0x670] sm:$0xff] %v3125
      %3984 = vst [vmem:[%s175 + $0x678] sm:$0xff] %v3132
      %3985 = vst [vmem:[%s175 + $0x680] sm:$0xff] %v3139
      %3986 = vst [vmem:[%s175 + $0x688] sm:$0xff] %v3146
      %3987 = vst [vmem:[%s175 + $0x690] sm:$0xff] %v3153
      %3988 = vst [vmem:[%s175 + $0x698] sm:$0xff] %v3160
      %3989 = vst [vmem:[%s175 + $0x6a0] sm:$0xff] %v3167
      %3990 = vst [vmem:[%s175 + $0x6a8] sm:$0xff] %v3174
      %3991 = vst [vmem:[%s175 + $0x6b0] sm:$0xff] %v3181
      %3992 = vst [vmem:[%s175 + $0x6b8] sm:$0xff] %v3188
      %3993 = vst [vmem:[%s175 + $0x6c0] sm:$0xff] %v3195
      %3994 = vst [vmem:[%s175 + $0x6c8] sm:$0xff] %v3202
      %3995 = vst [vmem:[%s175 + $0x6d0] sm:$0xff] %v3209
      %3996 = vst [vmem:[%s175 + $0x6d8] sm:$0xff] %v3216
      %3997 = vst [vmem:[%s175 + $0x6e0] sm:$0xff] %v3223
      %3998 = vst [vmem:[%s175 + $0x6e8] sm:$0xff] %v3230
      %3999 = vst [vmem:[%s175 + $0x6f0] sm:$0xff] %v3237
      %4000 = vst [vmem:[%s175 + $0x6f8] sm:$0xff] %v3244
      %4001 = vst [vmem:[%s175 + $0x700] sm:$0xff] %v3251
      %4002 = vst [vmem:[%s175 + $0x708] sm:$0xff] %v3258
      %4003 = vst [vmem:[%s175 + $0x710] sm:$0xff] %v3265
      %4004 = vst [vmem:[%s175 + $0x718] sm:$0xff] %v3272
      %4005 = vst [vmem:[%s175 + $0x720] sm:$0xff] %v3279
      %4006 = vst [vmem:[%s175 + $0x728] sm:$0xff] %v3286
      %4007 = vst [vmem:[%s175 + $0x730] sm:$0xff] %v3293
      %4008 = vst [vmem:[%s175 + $0x738] sm:$0xff] %v3300
      %4009 = vst [vmem:[%s175 + $0x740] sm:$0xff] %v3307
      %4010 = vst [vmem:[%s175 + $0x748] sm:$0xff] %v3314
      %4011 = vst [vmem:[%s175 + $0x750] sm:$0xff] %v3321
      %4012 = vst [vmem:[%s175 + $0x758] sm:$0xff] %v3328
      %4013 = vst [vmem:[%s175 + $0x760] sm:$0xff] %v3335
      %4014 = vst [vmem:[%s175 + $0x768] sm:$0xff] %v3342
      %4015 = vst [vmem:[%s175 + $0x770] sm:$0xff] %v3349
      %4016 = vst [vmem:[%s175 + $0x778] sm:$0xff] %v3356
      %4017 = vst [vmem:[%s175 + $0x780] sm:$0xff] %v3363
      %4018 = vst [vmem:[%s175 + $0x788] sm:$0xff] %v3370
      %4019 = vst [vmem:[%s175 + $0x790] sm:$0xff] %v3377
      %4020 = vst [vmem:[%s175 + $0x798] sm:$0xff] %v3384
      %4021 = vst [vmem:[%s175 + $0x7a0] sm:$0xff] %v3391
      %4022 = vst [vmem:[%s175 + $0x7a8] sm:$0xff] %v3398
      %4023 = vst [vmem:[%s175 + $0x7b0] sm:$0xff] %v3405
      %4024 = vst [vmem:[%s175 + $0x7b8] sm:$0xff] %v3412
      %4025 = vst [vmem:[%s175 + $0x7c0] sm:$0xff] %v3419
      %4026 = vst [vmem:[%s175 + $0x7c8] sm:$0xff] %v3426
      %4027 = vst [vmem:[%s175 + $0x7d0] sm:$0xff] %v3433
      %4028 = vst [vmem:[%s175 + $0x7d8] sm:$0xff] %v3440
      %4029 = vst [vmem:[%s175 + $0x7e0] sm:$0xff] %v3447
      %4030 = vst [vmem:[%s175 + $0x7e8] sm:$0xff] %v3454
      %4031 = vst [vmem:[%s175 + $0x7f0] sm:$0xff] %v3461
      %4032 = vst [vmem:[%s175 + $0x7f8] sm:$0xff] %v3468
      %4033 = vst [vmem:[%s175 + $0x800] sm:$0xff] %v3475
      %4034 = vst [vmem:[%s175 + $0x808] sm:$0xff] %v3482
      %4035 = vst [vmem:[%s175 + $0x810] sm:$0xff] %v3489
      %4036 = vst [vmem:[%s175 + $0x818] sm:$0xff] %v3496
      %4037 = vst [vmem:[%s175 + $0x820] sm:$0xff] %v3503
      %4038 = vst [vmem:[%s175 + $0x828] sm:$0xff] %v3510
      %4039 = vst [vmem:[%s175 + $0x830] sm:$0xff] %v3517
      %4040 = vst [vmem:[%s175 + $0x838] sm:$0xff] %v3524
      %4041 = vst [vmem:[%s175 + $0x840] sm:$0xff] %v3531
      %4042 = vst [vmem:[%s175 + $0x848] sm:$0xff] %v3538
      %4043 = vst [vmem:[%s175 + $0x850] sm:$0xff] %v3545
      %4044 = vst [vmem:[%s175 + $0x858] sm:$0xff] %v3552
      %4045 = vst [vmem:[%s175 + $0x860] sm:$0xff] %v3559
      %4046 = vst [vmem:[%s175 + $0x868] sm:$0xff] %v3566
      %4047 = vst [vmem:[%s175 + $0x870] sm:$0xff] %v3573
      %4048 = vst [vmem:[%s175 + $0x878] sm:$0xff] %v3580
      %4049 = vst [vmem:[%s175 + $0x880] sm:$0xff] %v3587
      %4050 = vst [vmem:[%s175 + $0x888] sm:$0xff] %v3594
      %4051 = vst [vmem:[%s175 + $0x890] sm:$0xff] %v3601
      %4052 = vst [vmem:[%s175 + $0x898] sm:$0xff] %v3608
      %4053 = vst [vmem:[%s175 + $0x8a0] sm:$0xff] %v3615
      %4054 = vst [vmem:[%s175 + $0x8a8] sm:$0xff] %v3622
      %4055 = vst [vmem:[%s175 + $0x8b0] sm:$0xff] %v3629
      %4056 = vst [vmem:[%s175 + $0x8b8] sm:$0xff] %v3636
      %4057 = vst [vmem:[%s175 + $0x8c0] sm:$0xff] %v3643
      %4058 = vst [vmem:[%s175 + $0x8c8] sm:$0xff] %v3650
      %4059 = vst [vmem:[%s175 + $0x8d0] sm:$0xff] %v3657
      %4060 = vst [vmem:[%s175 + $0x8d8] sm:$0xff] %v3664
      %4061 = vst [vmem:[%s175 + $0x8e0] sm:$0xff] %v3671
      %4062 = vst [vmem:[%s175 + $0x8e8] sm:$0xff] %v3678
      %4063 = vst [vmem:[%s175 + $0x8f0] sm:$0xff] %v3685
      %4064 = vst [vmem:[%s175 + $0x8f8] sm:$0xff] %v3692
      %4065 = vst [vmem:[%s175 + $0x900] sm:$0xff] %v3699
      %4066 = vst [vmem:[%s175 + $0x908] sm:$0xff] %v3706
      %4067 = vst [vmem:[%s175 + $0x910] sm:$0xff] %v3713
      %4068 = vst [vmem:[%s175 + $0x918] sm:$0xff] %v3720
      %4069 = vst [vmem:[%s175 + $0x920] sm:$0xff] %v3727
      %4070 = vst [vmem:[%s175 + $0x928] sm:$0xff] %v3734
      %4071 = vst [vmem:[%s175 + $0x930] sm:$0xff] %v3741
      %4072 = vst [vmem:[%s175 + $0x938] sm:$0xff] %v3748
      %4073 = vst [vmem:[%s175 + $0x940] sm:$0xff] %v3755
      %4074 = vst [vmem:[%s175 + $0x948] sm:$0xff] %v3762
      %4075 = vst [vmem:[%s175 + $0x950] sm:$0xff] %v3769
      %4076 = vst [vmem:[%s175 + $0x958] sm:$0xff] %v3776
      %s4077 = smul.u32 12, %s13
      %p4078 = scmp.lt.s32.totalorder %s4077, 23
      %s4079 = scalar_select %p4078, %s4077, 23
      %s4080 = smul.addr %s4079, 25
      %s4081 = smul.addr %s4080, 8
      %s4082 = scalar_lea.vmem %s2, %s4081
      // Predicated region
      $region29: #{_lambda_.4} parent=27 // pred_check
        %p4083 = pneg %p83
      $region30: #{_lambda_.4} parent=27 // pred_check_branch
        %4085 = sbr.rel (%p4083) target = $region32
      $region31: #{_lambda_.4} parent=27 // pred_region
        %s4086 = smul.u32 12, %s13
      $region32: #{_lambda_.4} parent=27 // pred_fallthru
        _
    $region28: #{_lambda_.4} parent=5 // pred_fallthru
      _
    %p4087 = scmp.le.s32.totalorder 2, %s8
    // Predicated region
    $region33: #{_lambda_.4} parent=5 // pred_check
      %p4088 = pneg %p4087
    $region34: #{_lambda_.4} parent=5 // pred_check_branch
      %4090 = sbr.rel (%p4088) target = $region36
    $region35: #{_lambda_.4} parent=5 // pred_region
      %s4091 = ssub.s32 %s8, 2
      // Predicated region
      $region37: #{_lambda_.4} parent=35 // pred_check
        %p4092 = pneg %p89
      $region38: #{_lambda_.4} parent=35 // pred_check_branch
        %4094 = sbr.rel (%p4092) target = $region40
      $region39: #{_lambda_.4} parent=35 // pred_region
        %s4095 = smul.u32 12, %s14
        %p4096 = scmp.lt.s32.totalorder %s4095, 23
        %s4097 = scalar_select %p4096, %s4095, 23
        %s4098 = smul.addr %s4097, 25
        %s4099 = smul.addr %s4098, 8
        %s4100 = scalar_lea.vmem %s2, %s4099
      $region40: #{_lambda_.4} parent=35 // pred_fallthru
        _
    $region36: #{_lambda_.4} parent=5 // pred_fallthru
      _
  $region6: #{_lambda_.4} parent=0 // loop_footer
    %s12 = sadd.s32 1, %s8
  $region7: #{_lambda_.4} parent=0 // loop_footer_branch
    %7 = sbr.rel target = $region3
  $region8: #{_lambda_.4} parent=0 // loop_exit
    _

// kernel: _lambda_.5
$region0: #{_lambda_.5}
  #allocation0 [shape = 'u32[]', space=smem, size = 0x4, offset = 0x4, fixed_abs, tag = 'smem constant byte address 0x4 - core index']
  #allocation1 [shape = 'u32[144,128]{1,0:T(1,128)}', space=vmem, size = 0x12000, scoped, tag = 'internal scratch']
  %s0 = inlined_call_operand.vmem [shape: bf16[2,1953], index: 0, kind: input, shape index: {}]
  %s1 = inlined_call_operand.vmem [shape: bf16[1953,128], index: 1, kind: input, shape index: {}]
  %s2 = inlined_call_operand.vmem [shape: f32[1,128], index: 2, kind: input, shape index: {}]
  %s3 = inlined_call_operand.vmem [shape: bf16[128,128], index: 3, kind: input, shape index: {}]
  %s4 = inlined_call_operand.vmem [shape: f32[1,128], index: 4, kind: input, shape index: {}]
  %s5 = inlined_call_operand.hbm [shape: f32[2,128], index: 5, kind: output, shape index: {}]
  %s6 = sld [smem:[#allocation0]]
  $region30: #{_lambda_.5} parent=0
    _
  %s8 = ssub.s32 1, %s6
  %s9 = scalar_select 0, %s8, %s6
  $region1: #{_lambda_.5} parent=0
    #allocation2 [shape = 'u8[1024]{0}', space=vmem, size = 0x400, scoped, tag = 'output window, operand 0, single buffered']
    #allocation3 [shape = 's32[1]{0}', space=sflag, size = 0x4, scoped, tag = 'scoped memory for _lambda_.5']
    %10 = vsyncpa [#allocation3], 0
    // Predicated region
    $region2: #{_lambda_.5} parent=1 // pred_check
      _
    $region3: #{_lambda_.5} parent=1 // pred_check_branch
      %12 = sbr.rel (0) target = $region5
    $region4: #{_lambda_.5} parent=1 // pred_region
      _
    $region5: #{_lambda_.5} parent=1 // pred_fallthru
      _
    // Predicated region
    $region6: #{_lambda_.5} parent=1 // pred_check
      _
    $region7: #{_lambda_.5} parent=1 // pred_check_branch
      %14 = sbr.rel (0) target = $region9
    $region8: #{_lambda_.5} parent=1 // pred_region
      _
    $region9: #{_lambda_.5} parent=1 // pred_fallthru
      _
    // Predicated region
    $region10: #{_lambda_.5} parent=1 // pred_check
      _
    $region11: #{_lambda_.5} parent=1 // pred_check_branch
      %16 = sbr.rel (0) target = $region13
    $region12: #{_lambda_.5} parent=1 // pred_region
      _
    $region13: #{_lambda_.5} parent=1 // pred_fallthru
      _
    // Predicated region
    $region14: #{_lambda_.5} parent=1 // pred_check
      _
    $region15: #{_lambda_.5} parent=1 // pred_check_branch
      %18 = sbr.rel (0) target = $region17
    $region16: #{_lambda_.5} parent=1 // pred_region
      _
    $region17: #{_lambda_.5} parent=1 // pred_fallthru
      _
    // Predicated region
    $region18: #{_lambda_.5} parent=1 // pred_check
      _
    $region19: #{_lambda_.5} parent=1 // pred_check_branch
      %20 = sbr.rel (0) target = $region21
    $region20: #{_lambda_.5} parent=1 // pred_region
      _
    $region21: #{_lambda_.5} parent=1 // pred_fallthru
      _
    %v22 = vld [vmem:[%s0] sm:$0xff]
    %v23 = vld [vmem:[%s0 + $0x8] sm:$0xff]
    %v24 = vld [vmem:[%s1] sm:$0xf]
    %v25 = vld [vmem:[%s1 + $0x4] sm:$0xf]
    %v26 = vld [vmem:[%s1 + $0x8] sm:$0xf]
    %v27 = vld [vmem:[%s1 + $0xc] sm:$0xf]
    %v28 = vld [vmem:[%s1 + $0x10] sm:$0xf]
    %v29 = vld [vmem:[%s1 + $0x14] sm:$0xf]
    %v30 = vld [vmem:[%s1 + $0x18] sm:$0xf]
    %v31 = vld [vmem:[%s1 + $0x1c] sm:$0xf]
    %v32 = vld [vmem:[%s1 + $0x20] sm:$0xf]
    %v33 = vld [vmem:[%s1 + $0x24] sm:$0xf]
    %v34 = vld [vmem:[%s1 + $0x28] sm:$0xf]
    %v35 = vld [vmem:[%s1 + $0x2c] sm:$0xf]
    %v36 = vld [vmem:[%s1 + $0x30] sm:$0xf]
    %v37 = vld [vmem:[%s1 + $0x34] sm:$0xf]
    %v38 = vld [vmem:[%s1 + $0x38] sm:$0xf]
    %v39 = vld [vmem:[%s1 + $0x3c] sm:$0xf]
    %v40 = vld [vmem:[%s1 + $0x40] sm:$0xf]
    %v41 = vld [vmem:[%s1 + $0x44] sm:$0xf]
    %v42 = vld [vmem:[%s1 + $0x48] sm:$0xf]
    %v43 = vld [vmem:[%s1 + $0x4c] sm:$0xf]
    %v44 = vld [vmem:[%s1 + $0x50] sm:$0xf]
    %v45 = vld [vmem:[%s1 + $0x54] sm:$0xf]
    %v46 = vld [vmem:[%s1 + $0x58] sm:$0xf]
    %v47 = vld [vmem:[%s1 + $0x5c] sm:$0xf]
    %v48 = vld [vmem:[%s1 + $0x60] sm:$0xf]
    %v49 = vld [vmem:[%s1 + $0x64] sm:$0xf]
    %v50 = vld [vmem:[%s1 + $0x68] sm:$0xf]
    %v51 = vld [vmem:[%s1 + $0x6c] sm:$0xf]
    %v52 = vld [vmem:[%s1 + $0x70] sm:$0xf]
    %v53 = vld [vmem:[%s1 + $0x74] sm:$0xf]
    %v54 = vld [vmem:[%s1 + $0x78] sm:$0xf]
    %v55 = vld [vmem:[%s1 + $0x7c] sm:$0xf]
    %v56 = vld [vmem:[%s1 + $0x80] sm:$0xf]
    %v57 = vld [vmem:[%s1 + $0x84] sm:$0xf]
    %v58 = vld [vmem:[%s1 + $0x88] sm:$0xf]
    %v59 = vld [vmem:[%s1 + $0x8c] sm:$0xf]
    %v60 = vld [vmem:[%s1 + $0x90] sm:$0xf]
    %v61 = vld [vmem:[%s1 + $0x94] sm:$0xf]
    %v62 = vld [vmem:[%s1 + $0x98] sm:$0xf]
    %v63 = vld [vmem:[%s1 + $0x9c] sm:$0xf]
    %v64 = vld [vmem:[%s1 + $0xa0] sm:$0xf]
    %v65 = vld [vmem:[%s1 + $0xa4] sm:$0xf]
    %v66 = vld [vmem:[%s1 + $0xa8] sm:$0xf]
    %v67 = vld [vmem:[%s1 + $0xac] sm:$0xf]
    %v68 = vld [vmem:[%s1 + $0xb0] sm:$0xf]
    %v69 = vld [vmem:[%s1 + $0xb4] sm:$0xf]
    %v70 = vld [vmem:[%s1 + $0xb8] sm:$0xf]
    %v71 = vld [vmem:[%s1 + $0xbc] sm:$0xf]
    %v72 = vld [vmem:[%s1 + $0xc0] sm:$0xf]
    %v73 = vld [vmem:[%s1 + $0xc4] sm:$0xf]
    %v74 = vld [vmem:[%s1 + $0xc8] sm:$0xf]
    %v75 = vld [vmem:[%s1 + $0xcc] sm:$0xf]
    %v76 = vld [vmem:[%s1 + $0xd0] sm:$0xf]
    %v77 = vld [vmem:[%s1 + $0xd4] sm:$0xf]
    %v78 = vld [vmem:[%s1 + $0xd8] sm:$0xf]
    %v79 = vld [vmem:[%s1 + $0xdc] sm:$0xf]
    %v80 = vld [vmem:[%s1 + $0xe0] sm:$0xf]
    %v81 = vld [vmem:[%s1 + $0xe4] sm:$0xf]
    %v82 = vld [vmem:[%s1 + $0xe8] sm:$0xf]
    %v83 = vld [vmem:[%s1 + $0xec] sm:$0xf]
    %v84 = vld [vmem:[%s1 + $0xf0] sm:$0xf]
    %v85 = vld [vmem:[%s1 + $0xf4] sm:$0xf]
    %v86 = vld [vmem:[%s1 + $0xf8] sm:$0xf]
    %v87 = vld [vmem:[%s1 + $0xfc] sm:$0xf]
    %v88 = vld [vmem:[%s1 + $0x100] sm:$0xf]
    %v89 = vld [vmem:[%s1 + $0x104] sm:$0xf]
    %v90 = vld [vmem:[%s1 + $0x108] sm:$0xf]
    %v91 = vld [vmem:[%s1 + $0x10c] sm:$0xf]
    %v92 = vld [vmem:[%s1 + $0x110] sm:$0xf]
    %v93 = vld [vmem:[%s1 + $0x114] sm:$0xf]
    %v94 = vld [vmem:[%s1 + $0x118] sm:$0xf]
    %v95 = vld [vmem:[%s1 + $0x11c] sm:$0xf]
    %v96 = vld [vmem:[%s1 + $0x120] sm:$0xf]
    %v97 = vld [vmem:[%s1 + $0x124] sm:$0xf]
    %v98 = vld [vmem:[%s1 + $0x128] sm:$0xf]
    %v99 = vld [vmem:[%s1 + $0x12c] sm:$0xf]
    %v100 = vld [vmem:[%s1 + $0x130] sm:$0xf]
    %v101 = vld [vmem:[%s1 + $0x134] sm:$0xf]
    %v102 = vld [vmem:[%s1 + $0x138] sm:$0xf]
    %v103 = vld [vmem:[%s1 + $0x13c] sm:$0xf]
    %v104 = vld [vmem:[%s1 + $0x140] sm:$0xf]
    %v105 = vld [vmem:[%s1 + $0x144] sm:$0xf]
    %v106 = vld [vmem:[%s1 + $0x148] sm:$0xf]
    %v107 = vld [vmem:[%s1 + $0x14c] sm:$0xf]
    %v108 = vld [vmem:[%s1 + $0x150] sm:$0xf]
    %v109 = vld [vmem:[%s1 + $0x154] sm:$0xf]
    %v110 = vld [vmem:[%s1 + $0x158] sm:$0xf]
    %v111 = vld [vmem:[%s1 + $0x15c] sm:$0xf]
    %v112 = vld [vmem:[%s1 + $0x160] sm:$0xf]
    %v113 = vld [vmem:[%s1 + $0x164] sm:$0xf]
    %v114 = vld [vmem:[%s1 + $0x168] sm:$0xf]
    %v115 = vld [vmem:[%s1 + $0x16c] sm:$0xf]
    %v116 = vld [vmem:[%s1 + $0x170] sm:$0xf]
    %v117 = vld [vmem:[%s1 + $0x174] sm:$0xf]
    %v118 = vld [vmem:[%s1 + $0x178] sm:$0xf]
    %v119 = vld [vmem:[%s1 + $0x17c] sm:$0xf]
    %v120 = vld [vmem:[%s1 + $0x180] sm:$0xf]
    %v121 = vld [vmem:[%s1 + $0x184] sm:$0xf]
    %v122 = vld [vmem:[%s1 + $0x188] sm:$0xf]
    %v123 = vld [vmem:[%s1 + $0x18c] sm:$0xf]
    %v124 = vld [vmem:[%s1 + $0x190] sm:$0xf]
    %v125 = vld [vmem:[%s1 + $0x194] sm:$0xf]
    %v126 = vld [vmem:[%s1 + $0x198] sm:$0xf]
    %v127 = vld [vmem:[%s1 + $0x19c] sm:$0xf]
    %v128 = vld [vmem:[%s1 + $0x1a0] sm:$0xf]
    %v129 = vld [vmem:[%s1 + $0x1a4] sm:$0xf]
    %v130 = vld [vmem:[%s1 + $0x1a8] sm:$0xf]
    %v131 = vld [vmem:[%s1 + $0x1ac] sm:$0xf]
    %v132 = vld [vmem:[%s1 + $0x1b0] sm:$0xf]
    %v133 = vld [vmem:[%s1 + $0x1b4] sm:$0xf]
    %v134 = vld [vmem:[%s1 + $0x1b8] sm:$0xf]
    %v135 = vld [vmem:[%s1 + $0x1bc] sm:$0xf]
    %v136 = vld [vmem:[%s1 + $0x1c0] sm:$0xf]
    %v137 = vld [vmem:[%s1 + $0x1c4] sm:$0xf]
    %v138 = vld [vmem:[%s1 + $0x1c8] sm:$0xf]
    %v139 = vld [vmem:[%s1 + $0x1cc] sm:$0xf]
    %v140 = vld [vmem:[%s1 + $0x1d0] sm:$0xf]
    %v141 = vld [vmem:[%s1 + $0x1d4] sm:$0xf]
    %v142 = vld [vmem:[%s1 + $0x1d8] sm:$0xf]
    %v143 = vld [vmem:[%s1 + $0x1dc] sm:$0xf]
    %v144 = vld [vmem:[%s1 + $0x1e0] sm:$0xf]
    %v145 = vld [vmem:[%s1 + $0x1e4] sm:$0xf]
    %v146 = vld [vmem:[%s1 + $0x1e8] sm:$0xf]
    %v147 = vld [vmem:[%s1 + $0x1ec] sm:$0xf]
    %v148 = vld [vmem:[%s1 + $0x1f0] sm:$0xf]
    %v149 = vld [vmem:[%s1 + $0x1f4] sm:$0xf]
    %v150 = vld [vmem:[%s1 + $0x1f8] sm:$0xf]
    %v151 = vld [vmem:[%s1 + $0x1fc] sm:$0xf]
    %v152 = vld [vmem:[%s1 + $0x200] sm:$0xf]
    %v153 = vld [vmem:[%s1 + $0x204] sm:$0xf]
    %v154 = vld [vmem:[%s1 + $0x208] sm:$0xf]
    %v155 = vld [vmem:[%s1 + $0x20c] sm:$0xf]
    %v156 = vld [vmem:[%s1 + $0x210] sm:$0xf]
    %v157 = vld [vmem:[%s1 + $0x214] sm:$0xf]
    %v158 = vld [vmem:[%s1 + $0x218] sm:$0xf]
    %v159 = vld [vmem:[%s1 + $0x21c] sm:$0xf]
    %v160 = vld [vmem:[%s1 + $0x220] sm:$0xf]
    %v161 = vld [vmem:[%s1 + $0x224] sm:$0xf]
    %v162 = vld [vmem:[%s1 + $0x228] sm:$0xf]
    %v163 = vld [vmem:[%s1 + $0x22c] sm:$0xf]
    %v164 = vld [vmem:[%s1 + $0x230] sm:$0xf]
    %v165 = vld [vmem:[%s1 + $0x234] sm:$0xf]
    %v166 = vld [vmem:[%s1 + $0x238] sm:$0xf]
    %v167 = vld [vmem:[%s1 + $0x23c] sm:$0xf]
    %v168 = vld [vmem:[%s1 + $0x240] sm:$0xf]
    %v169 = vld [vmem:[%s1 + $0x244] sm:$0xf]
    %v170 = vld [vmem:[%s1 + $0x248] sm:$0xf]
    %v171 = vld [vmem:[%s1 + $0x24c] sm:$0xf]
    %v172 = vld [vmem:[%s1 + $0x250] sm:$0xf]
    %v173 = vld [vmem:[%s1 + $0x254] sm:$0xf]
    %v174 = vld [vmem:[%s1 + $0x258] sm:$0xf]
    %v175 = vld [vmem:[%s1 + $0x25c] sm:$0xf]
    %v176 = vld [vmem:[%s1 + $0x260] sm:$0xf]
    %v177 = vld [vmem:[%s1 + $0x264] sm:$0xf]
    %v178 = vld [vmem:[%s1 + $0x268] sm:$0xf]
    %v179 = vld [vmem:[%s1 + $0x26c] sm:$0xf]
    %v180 = vld [vmem:[%s1 + $0x270] sm:$0xf]
    %v181 = vld [vmem:[%s1 + $0x274] sm:$0xf]
    %v182 = vld [vmem:[%s1 + $0x278] sm:$0xf]
    %v183 = vld [vmem:[%s1 + $0x27c] sm:$0xf]
    %v184 = vld [vmem:[%s1 + $0x280] sm:$0xf]
    %v185 = vld [vmem:[%s1 + $0x284] sm:$0xf]
    %v186 = vld [vmem:[%s1 + $0x288] sm:$0xf]
    %v187 = vld [vmem:[%s1 + $0x28c] sm:$0xf]
    %v188 = vld [vmem:[%s1 + $0x290] sm:$0xf]
    %v189 = vld [vmem:[%s1 + $0x294] sm:$0xf]
    %v190 = vld [vmem:[%s1 + $0x298] sm:$0xf]
    %v191 = vld [vmem:[%s1 + $0x29c] sm:$0xf]
    %v192 = vld [vmem:[%s1 + $0x2a0] sm:$0xf]
    %v193 = vld [vmem:[%s1 + $0x2a4] sm:$0xf]
    %v194 = vld [vmem:[%s1 + $0x2a8] sm:$0xf]
    %v195 = vld [vmem:[%s1 + $0x2ac] sm:$0xf]
    %v196 = vld [vmem:[%s1 + $0x2b0] sm:$0xf]
    %v197 = vld [vmem:[%s1 + $0x2b4] sm:$0xf]
    %v198 = vld [vmem:[%s1 + $0x2b8] sm:$0xf]
    %v199 = vld [vmem:[%s1 + $0x2bc] sm:$0xf]
    %v200 = vld [vmem:[%s1 + $0x2c0] sm:$0xf]
    %v201 = vld [vmem:[%s1 + $0x2c4] sm:$0xf]
    %v202 = vld [vmem:[%s1 + $0x2c8] sm:$0xf]
    %v203 = vld [vmem:[%s1 + $0x2cc] sm:$0xf]
    %v204 = vld [vmem:[%s1 + $0x2d0] sm:$0xf]
    %v205 = vld [vmem:[%s1 + $0x2d4] sm:$0xf]
    %v206 = vld [vmem:[%s1 + $0x2d8] sm:$0xf]
    %v207 = vld [vmem:[%s1 + $0x2dc] sm:$0xf]
    %v208 = vld [vmem:[%s1 + $0x2e0] sm:$0xf]
    %v209 = vld [vmem:[%s1 + $0x2e4] sm:$0xf]
    %v210 = vld [vmem:[%s1 + $0x2e8] sm:$0xf]
    %v211 = vld [vmem:[%s1 + $0x2ec] sm:$0xf]
    %v212 = vld [vmem:[%s1 + $0x2f0] sm:$0xf]
    %v213 = vld [vmem:[%s1 + $0x2f4] sm:$0xf]
    %v214 = vld [vmem:[%s1 + $0x2f8] sm:$0xf]
    %v215 = vld [vmem:[%s1 + $0x2fc] sm:$0xf]
    %v216 = vld [vmem:[%s1 + $0x300] sm:$0xf]
    %v217 = vld [vmem:[%s1 + $0x304] sm:$0xf]
    %v218 = vld [vmem:[%s1 + $0x308] sm:$0xf]
    %v219 = vld [vmem:[%s1 + $0x30c] sm:$0xf]
    %v220 = vld [vmem:[%s1 + $0x310] sm:$0xf]
    %v221 = vld [vmem:[%s1 + $0x314] sm:$0xf]
    %v222 = vld [vmem:[%s1 + $0x318] sm:$0xf]
    %v223 = vld [vmem:[%s1 + $0x31c] sm:$0xf]
    %v224 = vld [vmem:[%s1 + $0x320] sm:$0xf]
    %v225 = vld [vmem:[%s1 + $0x324] sm:$0xf]
    %v226 = vld [vmem:[%s1 + $0x328] sm:$0xf]
    %v227 = vld [vmem:[%s1 + $0x32c] sm:$0xf]
    %v228 = vld [vmem:[%s1 + $0x330] sm:$0xf]
    %v229 = vld [vmem:[%s1 + $0x334] sm:$0xf]
    %v230 = vld [vmem:[%s1 + $0x338] sm:$0xf]
    %v231 = vld [vmem:[%s1 + $0x33c] sm:$0xf]
    %v232 = vld [vmem:[%s1 + $0x340] sm:$0xf]
    %v233 = vld [vmem:[%s1 + $0x344] sm:$0xf]
    %v234 = vld [vmem:[%s1 + $0x348] sm:$0xf]
    %v235 = vld [vmem:[%s1 + $0x34c] sm:$0xf]
    %v236 = vld [vmem:[%s1 + $0x350] sm:$0xf]
    %v237 = vld [vmem:[%s1 + $0x354] sm:$0xf]
    %v238 = vld [vmem:[%s1 + $0x358] sm:$0xf]
    %v239 = vld [vmem:[%s1 + $0x35c] sm:$0xf]
    %v240 = vld [vmem:[%s1 + $0x360] sm:$0xf]
    %v241 = vld [vmem:[%s1 + $0x364] sm:$0xf]
    %v242 = vld [vmem:[%s1 + $0x368] sm:$0xf]
    %v243 = vld [vmem:[%s1 + $0x36c] sm:$0xf]
    %v244 = vld [vmem:[%s1 + $0x370] sm:$0xf]
    %v245 = vld [vmem:[%s1 + $0x374] sm:$0xf]
    %v246 = vld [vmem:[%s1 + $0x378] sm:$0xf]
    %v247 = vld [vmem:[%s1 + $0x37c] sm:$0xf]
    %v248 = vld [vmem:[%s1 + $0x380] sm:$0xf]
    %v249 = vld [vmem:[%s1 + $0x384] sm:$0xf]
    %v250 = vld [vmem:[%s1 + $0x388] sm:$0xf]
    %v251 = vld [vmem:[%s1 + $0x38c] sm:$0xf]
    %v252 = vld [vmem:[%s1 + $0x390] sm:$0xf]
    %v253 = vld [vmem:[%s1 + $0x394] sm:$0xf]
    %v254 = vld [vmem:[%s1 + $0x398] sm:$0xf]
    %v255 = vld [vmem:[%s1 + $0x39c] sm:$0xf]
    %v256 = vld [vmem:[%s1 + $0x3a0] sm:$0xf]
    %v257 = vld [vmem:[%s1 + $0x3a4] sm:$0xf]
    %v258 = vld [vmem:[%s1 + $0x3a8] sm:$0xf]
    %v259 = vld [vmem:[%s1 + $0x3ac] sm:$0xf]
    %v260 = vld [vmem:[%s1 + $0x3b0] sm:$0xf]
    %v261 = vld [vmem:[%s1 + $0x3b4] sm:$0xf]
    %v262 = vld [vmem:[%s1 + $0x3b8] sm:$0xf]
    %v263 = vld [vmem:[%s1 + $0x3bc] sm:$0xf]
    %v264 = vld [vmem:[%s1 + $0x3c0] sm:$0xf]
    %v265 = vld [vmem:[%s1 + $0x3c4] sm:$0xf]
    %v266 = vld [vmem:[%s1 + $0x3c8] sm:$0xf]
    %v267 = vld [vmem:[%s1 + $0x3cc] sm:$0xf]
    %v268 = vld [vmem:[%s1 + $0x3d0] sm:$0x1]
    %v269 = vld [vmem:[%s2] sm:$0x1]
    %v271 = vlaneseq
    %v272 = vshrl.u32 %v271, 7
    %v273 = vsub.s32 0, %v272
    %v274 = vrot.slane %v269, %v273
    %v278 = vcombine.high %v22, %v22
    %v280 = vunpack.c.l.s4 1966171168
    %v281 = vunpack.c.0.s8 %v280
    %v282 = vlaneseq
    %v283 = vshrl.u32 %v282, 7
    %v284 = vsub.s32 %v281, %v283
    %v285 = vrot.slane %v22, %v284
    %v287 = vunpack.c.l.s4 1966171168
    %v288 = vunpack.c.0.s8 %v287
    %v289 = vlaneseq
    %v290 = vshrl.u32 %v289, 7
    %v291 = vsub.s32 %v288, %v290
    %v292 = vrot.slane %v278, %v291
    %v293 = vcombine.high %v285, %v285
    %v294 = vcombine.high %v292, %v292
    %v296 = vunpack.c.l.s4 1966171168
    %v297 = vunpack.c.0.s8 %v296
    %v298 = vlaneseq
    %v299 = vshrl.u32 %v298, 7
    %v300 = vsub.s32 %v297, %v299
    %v301 = vrot.slane %v285, %v300
    %v303 = vunpack.c.l.s4 1966171168
    %v304 = vunpack.c.0.s8 %v303
    %v305 = vlaneseq
    %v306 = vshrl.u32 %v305, 7
    %v307 = vsub.s32 %v304, %v306
    %v308 = vrot.slane %v292, %v307
    %v310 = vunpack.c.l.s4 1966171168
    %v311 = vunpack.c.0.s8 %v310
    %v312 = vlaneseq
    %v313 = vshrl.u32 %v312, 7
    %v314 = vsub.s32 %v311, %v313
    %v315 = vrot.slane %v293, %v314
    %v317 = vunpack.c.l.s4 1966171168
    %v318 = vunpack.c.0.s8 %v317
    %v319 = vlaneseq
    %v320 = vshrl.u32 %v319, 7
    %v321 = vsub.s32 %v318, %v320
    %v322 = vrot.slane %v294, %v321
    %v323 = vcombine.high %v301, %v301
    %v324 = vcombine.high %v308, %v308
    %v325 = vcombine.high %v315, %v315
    %v326 = vcombine.high %v322, %v322
    %v327 = vcombine.high %v23, %v23
    %v329 = vunpack.c.l.s4 1966171168
    %v330 = vunpack.c.0.s8 %v329
    %v331 = vlaneseq
    %v332 = vshrl.u32 %v331, 7
    %v333 = vsub.s32 %v330, %v332
    %v334 = vrot.slane %v23, %v333
    %v336 = vunpack.c.l.s4 1966171168
    %v337 = vunpack.c.0.s8 %v336
    %v338 = vlaneseq
    %v339 = vshrl.u32 %v338, 7
    %v340 = vsub.s32 %v337, %v339
    %v341 = vrot.slane %v327, %v340
    %v342 = vcombine.high %v334, %v334
    %v343 = vcombine.high %v341, %v341
    %v345 = vunpack.c.l.s4 1966171168
    %v346 = vunpack.c.0.s8 %v345
    %v347 = vlaneseq
    %v348 = vshrl.u32 %v347, 7
    %v349 = vsub.s32 %v346, %v348
    %v350 = vrot.slane %v334, %v349
    %v352 = vunpack.c.l.s4 1966171168
    %v353 = vunpack.c.0.s8 %v352
    %v354 = vlaneseq
    %v355 = vshrl.u32 %v354, 7
    %v356 = vsub.s32 %v353, %v355
    %v357 = vrot.slane %v341, %v356
    %v359 = vunpack.c.l.s4 1966171168
    %v360 = vunpack.c.0.s8 %v359
    %v361 = vlaneseq
    %v362 = vshrl.u32 %v361, 7
    %v363 = vsub.s32 %v360, %v362
    %v364 = vrot.slane %v342, %v363
    %v366 = vunpack.c.l.s4 1966171168
    %v367 = vunpack.c.0.s8 %v366
    %v368 = vlaneseq
    %v369 = vshrl.u32 %v368, 7
    %v370 = vsub.s32 %v367, %v369
    %v371 = vrot.slane %v343, %v370
    %v372 = vcombine.high %v350, %v350
    %v373 = vcombine.high %v357, %v357
    %v374 = vcombine.high %v364, %v364
    %v375 = vcombine.high %v371, %v371
    %v636 = vunpack.c.l.b16 %v24
    %v637 = vunpack.c.l.b16 %v25
    %v638 = vunpack.c.l.b16 %v26
    %v639 = vunpack.c.l.b16 %v27
    %v640 = vunpack.c.l.b16 %v28
    %v641 = vunpack.c.l.b16 %v29
    %v642 = vunpack.c.l.b16 %v30
    %v643 = vunpack.c.l.b16 %v31
    %v644 = vunpack.c.l.b16 %v32
    %v645 = vunpack.c.l.b16 %v33
    %v646 = vunpack.c.l.b16 %v34
    %v647 = vunpack.c.l.b16 %v35
    %v648 = vunpack.c.l.b16 %v36
    %v649 = vunpack.c.l.b16 %v37
    %v650 = vunpack.c.l.b16 %v38
    %v651 = vunpack.c.l.b16 %v39
    %v652 = vunpack.c.l.b16 %v40
    %v653 = vunpack.c.l.b16 %v41
    %v654 = vunpack.c.l.b16 %v42
    %v655 = vunpack.c.l.b16 %v43
    %v656 = vunpack.c.l.b16 %v44
    %v657 = vunpack.c.l.b16 %v45
    %v658 = vunpack.c.l.b16 %v46
    %v659 = vunpack.c.l.b16 %v47
    %v660 = vunpack.c.l.b16 %v48
    %v661 = vunpack.c.l.b16 %v49
    %v662 = vunpack.c.l.b16 %v50
    %v663 = vunpack.c.l.b16 %v51
    %v664 = vunpack.c.l.b16 %v52
    %v665 = vunpack.c.l.b16 %v53
    %v666 = vunpack.c.l.b16 %v54
    %v667 = vunpack.c.l.b16 %v55
    %v668 = vunpack.c.l.b16 %v56
    %v669 = vunpack.c.l.b16 %v57
    %v670 = vunpack.c.l.b16 %v58
    %v671 = vunpack.c.l.b16 %v59
    %v672 = vunpack.c.l.b16 %v60
    %v673 = vunpack.c.l.b16 %v61
    %v674 = vunpack.c.l.b16 %v62
    %v675 = vunpack.c.l.b16 %v63
    %v676 = vunpack.c.l.b16 %v64
    %v677 = vunpack.c.l.b16 %v65
    %v678 = vunpack.c.l.b16 %v66
    %v679 = vunpack.c.l.b16 %v67
    %v680 = vunpack.c.l.b16 %v68
    %v681 = vunpack.c.l.b16 %v69
    %v682 = vunpack.c.l.b16 %v70
    %v683 = vunpack.c.l.b16 %v71
    %v684 = vunpack.c.l.b16 %v72
    %v685 = vunpack.c.l.b16 %v73
    %v686 = vunpack.c.l.b16 %v74
    %v687 = vunpack.c.l.b16 %v75
    %v688 = vunpack.c.l.b16 %v76
    %v689 = vunpack.c.l.b16 %v77
    %v690 = vunpack.c.l.b16 %v78
    %v691 = vunpack.c.l.b16 %v79
    %v692 = vunpack.c.l.b16 %v80
    %v693 = vunpack.c.l.b16 %v81
    %v694 = vunpack.c.l.b16 %v82
    %v695 = vunpack.c.l.b16 %v83
    %v696 = vunpack.c.l.b16 %v84
    %v697 = vunpack.c.l.b16 %v85
    %v698 = vunpack.c.l.b16 %v86
    %v699 = vunpack.c.l.b16 %v87
    %v700 = vunpack.c.l.b16 %v88
    %v701 = vunpack.c.l.b16 %v89
    %v702 = vunpack.c.l.b16 %v90
    %v703 = vunpack.c.l.b16 %v91
    %v704 = vunpack.c.l.b16 %v92
    %v705 = vunpack.c.l.b16 %v93
    %v706 = vunpack.c.l.b16 %v94
    %v707 = vunpack.c.l.b16 %v95
    %v708 = vunpack.c.l.b16 %v96
    %v709 = vunpack.c.l.b16 %v97
    %v710 = vunpack.c.l.b16 %v98
    %v711 = vunpack.c.l.b16 %v99
    %v712 = vunpack.c.l.b16 %v100
    %v713 = vunpack.c.l.b16 %v101
    %v714 = vunpack.c.l.b16 %v102
    %v715 = vunpack.c.l.b16 %v103
    %v716 = vunpack.c.l.b16 %v104
    %v717 = vunpack.c.l.b16 %v105
    %v718 = vunpack.c.l.b16 %v106
    %v719 = vunpack.c.l.b16 %v107
    %v720 = vunpack.c.l.b16 %v108
    %v721 = vunpack.c.l.b16 %v109
    %v722 = vunpack.c.l.b16 %v110
    %v723 = vunpack.c.l.b16 %v111
    %v724 = vunpack.c.l.b16 %v112
    %v725 = vunpack.c.l.b16 %v113
    %v726 = vunpack.c.l.b16 %v114
    %v727 = vunpack.c.l.b16 %v115
    %v728 = vunpack.c.l.b16 %v116
    %v729 = vunpack.c.l.b16 %v117
    %v730 = vunpack.c.l.b16 %v118
    %v731 = vunpack.c.l.b16 %v119
    %v732 = vunpack.c.l.b16 %v120
    %v733 = vunpack.c.l.b16 %v121
    %v734 = vunpack.c.l.b16 %v122
    %v735 = vunpack.c.l.b16 %v123
    %v736 = vunpack.c.l.b16 %v124
    %v737 = vunpack.c.l.b16 %v125
    %v738 = vunpack.c.l.b16 %v126
    %v739 = vunpack.c.l.b16 %v127
    %v740 = vunpack.c.l.b16 %v128
    %v741 = vunpack.c.l.b16 %v129
    %v742 = vunpack.c.l.b16 %v130
    %v743 = vunpack.c.l.b16 %v131
    %v744 = vunpack.c.l.b16 %v132
    %v745 = vunpack.c.l.b16 %v133
    %v746 = vunpack.c.l.b16 %v134
    %v747 = vunpack.c.l.b16 %v135
    %v748 = vunpack.c.l.b16 %v136
    %v749 = vunpack.c.l.b16 %v137
    %v750 = vunpack.c.l.b16 %v138
    %v751 = vunpack.c.l.b16 %v139
    %v752 = vunpack.c.l.b16 %v140
    %v753 = vunpack.c.l.b16 %v141
    %v754 = vunpack.c.l.b16 %v142
    %v755 = vunpack.c.l.b16 %v143
    %v756 = vunpack.c.l.b16 %v144
    %v757 = vunpack.c.l.b16 %v145
    %v758 = vunpack.c.l.b16 %v146
    %v759 = vunpack.c.l.b16 %v147
    %v760 = vunpack.c.l.b16 %v148
    %v761 = vunpack.c.l.b16 %v149
    %v762 = vunpack.c.l.b16 %v150
    %v763 = vunpack.c.l.b16 %v151
    %v764 = vunpack.c.l.b16 %v152
    %v765 = vunpack.c.l.b16 %v153
    %v766 = vunpack.c.l.b16 %v154
    %v767 = vunpack.c.l.b16 %v155
    %v768 = vunpack.c.l.b16 %v156
    %v769 = vunpack.c.l.b16 %v157
    %v770 = vunpack.c.l.b16 %v158
    %v771 = vunpack.c.l.b16 %v159
    %v772 = vunpack.c.l.b16 %v160
    %v773 = vunpack.c.l.b16 %v161
    %v774 = vunpack.c.l.b16 %v162
    %v775 = vunpack.c.l.b16 %v163
    %v776 = vunpack.c.l.b16 %v164
    %v777 = vunpack.c.l.b16 %v165
    %v778 = vunpack.c.l.b16 %v166
    %v779 = vunpack.c.l.b16 %v167
    %v780 = vunpack.c.l.b16 %v168
    %v781 = vunpack.c.l.b16 %v169
    %v782 = vunpack.c.l.b16 %v170
    %v783 = vunpack.c.l.b16 %v171
    %v784 = vunpack.c.l.b16 %v172
    %v785 = vunpack.c.l.b16 %v173
    %v786 = vunpack.c.l.b16 %v174
    %v787 = vunpack.c.l.b16 %v175
    %v788 = vunpack.c.l.b16 %v176
    %v789 = vunpack.c.l.b16 %v177
    %v790 = vunpack.c.l.b16 %v178
    %v791 = vunpack.c.l.b16 %v179
    %v792 = vunpack.c.l.b16 %v180
    %v793 = vunpack.c.l.b16 %v181
    %v794 = vunpack.c.l.b16 %v182
    %v795 = vunpack.c.l.b16 %v183
    %v796 = vunpack.c.l.b16 %v184
    %v797 = vunpack.c.l.b16 %v185
    %v798 = vunpack.c.l.b16 %v186
    %v799 = vunpack.c.l.b16 %v187
    %v800 = vunpack.c.l.b16 %v188
    %v801 = vunpack.c.l.b16 %v189
    %v802 = vunpack.c.l.b16 %v190
    %v803 = vunpack.c.l.b16 %v191
    %v804 = vunpack.c.l.b16 %v192
    %v805 = vunpack.c.l.b16 %v193
    %v806 = vunpack.c.l.b16 %v194
    %v807 = vunpack.c.l.b16 %v195
    %v808 = vunpack.c.l.b16 %v196
    %v809 = vunpack.c.l.b16 %v197
    %v810 = vunpack.c.l.b16 %v198
    %v811 = vunpack.c.l.b16 %v199
    %v812 = vunpack.c.l.b16 %v200
    %v813 = vunpack.c.l.b16 %v201
    %v814 = vunpack.c.l.b16 %v202
    %v815 = vunpack.c.l.b16 %v203
    %v816 = vunpack.c.l.b16 %v204
    %v817 = vunpack.c.l.b16 %v205
    %v818 = vunpack.c.l.b16 %v206
    %v819 = vunpack.c.l.b16 %v207
    %v820 = vunpack.c.l.b16 %v208
    %v821 = vunpack.c.l.b16 %v209
    %v822 = vunpack.c.l.b16 %v210
    %v823 = vunpack.c.l.b16 %v211
    %v824 = vunpack.c.l.b16 %v212
    %v825 = vunpack.c.l.b16 %v213
    %v826 = vunpack.c.l.b16 %v214
    %v827 = vunpack.c.l.b16 %v215
    %v828 = vunpack.c.l.b16 %v216
    %v829 = vunpack.c.l.b16 %v217
    %v830 = vunpack.c.l.b16 %v218
    %v831 = vunpack.c.l.b16 %v219
    %v832 = vunpack.c.l.b16 %v220
    %v833 = vunpack.c.l.b16 %v221
    %v834 = vunpack.c.l.b16 %v222
    %v835 = vunpack.c.l.b16 %v223
    %v836 = vunpack.c.l.b16 %v224
    %v837 = vunpack.c.l.b16 %v225
    %v838 = vunpack.c.l.b16 %v226
    %v839 = vunpack.c.l.b16 %v227
    %v840 = vunpack.c.l.b16 %v228
    %v841 = vunpack.c.l.b16 %v229
    %v842 = vunpack.c.l.b16 %v230
    %v843 = vunpack.c.l.b16 %v231
    %v844 = vunpack.c.l.b16 %v232
    %v845 = vunpack.c.l.b16 %v233
    %v846 = vunpack.c.l.b16 %v234
    %v847 = vunpack.c.l.b16 %v235
    %v848 = vunpack.c.l.b16 %v236
    %v849 = vunpack.c.l.b16 %v237
    %v850 = vunpack.c.l.b16 %v238
    %v851 = vunpack.c.l.b16 %v239
    %v852 = vunpack.c.l.b16 %v240
    %v853 = vunpack.c.l.b16 %v241
    %v854 = vunpack.c.l.b16 %v242
    %v855 = vunpack.c.l.b16 %v243
    %v856 = vunpack.c.l.b16 %v244
    %v857 = vunpack.c.l.b16 %v245
    %v858 = vunpack.c.l.b16 %v246
    %v859 = vunpack.c.l.b16 %v247
    %v860 = vunpack.c.l.b16 %v248
    %v861 = vunpack.c.l.b16 %v249
    %v862 = vunpack.c.l.b16 %v250
    %v863 = vunpack.c.l.b16 %v251
    %v864 = vunpack.c.l.b16 %v252
    %v865 = vunpack.c.l.b16 %v253
    %v866 = vunpack.c.l.b16 %v254
    %v867 = vunpack.c.l.b16 %v255
    %v868 = vunpack.c.l.b16 %v256
    %v869 = vunpack.c.l.b16 %v257
    %v870 = vunpack.c.l.b16 %v258
    %v871 = vunpack.c.l.b16 %v259
    %v872 = vunpack.c.l.b16 %v260
    %v873 = vunpack.c.l.b16 %v261
    %v874 = vunpack.c.l.b16 %v262
    %v875 = vunpack.c.l.b16 %v263
    %v876 = vunpack.c.l.b16 %v264
    %v877 = vunpack.c.l.b16 %v265
    %v878 = vunpack.c.l.b16 %v266
    %v879 = vunpack.c.l.b16 %v267
    %v880 = vunpack.c.l.b16 %v268
    %v881 = vpack.c.b16 %v637, %v636
    %v882 = vpack.c.b16 %v639, %v638
    %v883 = vpack.c.b16 %v641, %v640
    %v884 = vpack.c.b16 %v643, %v642
    %v885 = vpack.c.b16 %v645, %v644
    %v886 = vpack.c.b16 %v647, %v646
    %v887 = vpack.c.b16 %v649, %v648
    %v888 = vpack.c.b16 %v651, %v650
    %v889 = vpack.c.b16 %v653, %v652
    %v890 = vpack.c.b16 %v655, %v654
    %v891 = vpack.c.b16 %v657, %v656
    %v892 = vpack.c.b16 %v659, %v658
    %v893 = vpack.c.b16 %v661, %v660
    %v894 = vpack.c.b16 %v663, %v662
    %v895 = vpack.c.b16 %v665, %v664
    %v896 = vpack.c.b16 %v667, %v666
    %v897 = vpack.c.b16 %v669, %v668
    %v898 = vpack.c.b16 %v671, %v670
    %v899 = vpack.c.b16 %v673, %v672
    %v900 = vpack.c.b16 %v675, %v674
    %v901 = vpack.c.b16 %v677, %v676
    %v902 = vpack.c.b16 %v679, %v678
    %v903 = vpack.c.b16 %v681, %v680
    %v904 = vpack.c.b16 %v683, %v682
    %v905 = vpack.c.b16 %v685, %v684
    %v906 = vpack.c.b16 %v687, %v686
    %v907 = vpack.c.b16 %v689, %v688
    %v908 = vpack.c.b16 %v691, %v690
    %v909 = vpack.c.b16 %v693, %v692
    %v910 = vpack.c.b16 %v695, %v694
    %v911 = vpack.c.b16 %v697, %v696
    %v912 = vpack.c.b16 %v699, %v698
    %v913 = vpack.c.b16 %v701, %v700
    %v914 = vpack.c.b16 %v703, %v702
    %v915 = vpack.c.b16 %v705, %v704
    %v916 = vpack.c.b16 %v707, %v706
    %v917 = vpack.c.b16 %v709, %v708
    %v918 = vpack.c.b16 %v711, %v710
    %v919 = vpack.c.b16 %v713, %v712
    %v920 = vpack.c.b16 %v715, %v714
    %v921 = vpack.c.b16 %v717, %v716
    %v922 = vpack.c.b16 %v719, %v718
    %v923 = vpack.c.b16 %v721, %v720
    %v924 = vpack.c.b16 %v723, %v722
    %v925 = vpack.c.b16 %v725, %v724
    %v926 = vpack.c.b16 %v727, %v726
    %v927 = vpack.c.b16 %v729, %v728
    %v928 = vpack.c.b16 %v731, %v730
    %v929 = vpack.c.b16 %v733, %v732
    %v930 = vpack.c.b16 %v735, %v734
    %v931 = vpack.c.b16 %v737, %v736
    %v932 = vpack.c.b16 %v739, %v738
    %v933 = vpack.c.b16 %v741, %v740
    %v934 = vpack.c.b16 %v743, %v742
    %v935 = vpack.c.b16 %v745, %v744
    %v936 = vpack.c.b16 %v747, %v746
    %v937 = vpack.c.b16 %v749, %v748
    %v938 = vpack.c.b16 %v751, %v750
    %v939 = vpack.c.b16 %v753, %v752
    %v940 = vpack.c.b16 %v755, %v754
    %v941 = vpack.c.b16 %v757, %v756
    %v942 = vpack.c.b16 %v759, %v758
    %v943 = vpack.c.b16 %v761, %v760
    %v944 = vpack.c.b16 %v763, %v762
    %v945 = vpack.c.b16 %v765, %v764
    %v946 = vpack.c.b16 %v767, %v766
    %v947 = vpack.c.b16 %v769, %v768
    %v948 = vpack.c.b16 %v771, %v770
    %v949 = vpack.c.b16 %v773, %v772
    %v950 = vpack.c.b16 %v775, %v774
    %v951 = vpack.c.b16 %v777, %v776
    %v952 = vpack.c.b16 %v779, %v778
    %v953 = vpack.c.b16 %v781, %v780
    %v954 = vpack.c.b16 %v783, %v782
    %v955 = vpack.c.b16 %v785, %v784
    %v956 = vpack.c.b16 %v787, %v786
    %v957 = vpack.c.b16 %v789, %v788
    %v958 = vpack.c.b16 %v791, %v790
    %v959 = vpack.c.b16 %v793, %v792
    %v960 = vpack.c.b16 %v795, %v794
    %v961 = vpack.c.b16 %v797, %v796
    %v962 = vpack.c.b16 %v799, %v798
    %v963 = vpack.c.b16 %v801, %v800
    %v964 = vpack.c.b16 %v803, %v802
    %v965 = vpack.c.b16 %v805, %v804
    %v966 = vpack.c.b16 %v807, %v806
    %v967 = vpack.c.b16 %v809, %v808
    %v968 = vpack.c.b16 %v811, %v810
    %v969 = vpack.c.b16 %v813, %v812
    %v970 = vpack.c.b16 %v815, %v814
    %v971 = vpack.c.b16 %v817, %v816
    %v972 = vpack.c.b16 %v819, %v818
    %v973 = vpack.c.b16 %v821, %v820
    %v974 = vpack.c.b16 %v823, %v822
    %v975 = vpack.c.b16 %v825, %v824
    %v976 = vpack.c.b16 %v827, %v826
    %v977 = vpack.c.b16 %v829, %v828
    %v978 = vpack.c.b16 %v831, %v830
    %v979 = vpack.c.b16 %v833, %v832
    %v980 = vpack.c.b16 %v835, %v834
    %v981 = vpack.c.b16 %v837, %v836
    %v982 = vpack.c.b16 %v839, %v838
    %v983 = vpack.c.b16 %v841, %v840
    %v984 = vpack.c.b16 %v843, %v842
    %v985 = vpack.c.b16 %v845, %v844
    %v986 = vpack.c.b16 %v847, %v846
    %v987 = vpack.c.b16 %v849, %v848
    %v988 = vpack.c.b16 %v851, %v850
    %v989 = vpack.c.b16 %v853, %v852
    %v990 = vpack.c.b16 %v855, %v854
    %v991 = vpack.c.b16 %v857, %v856
    %v992 = vpack.c.b16 %v859, %v858
    %v993 = vpack.c.b16 %v861, %v860
    %v994 = vpack.c.b16 %v863, %v862
    %v995 = vpack.c.b16 %v865, %v864
    %v996 = vpack.c.b16 %v867, %v866
    %v997 = vpack.c.b16 %v869, %v868
    %v998 = vpack.c.b16 %v871, %v870
    %v999 = vpack.c.b16 %v873, %v872
    %v1000 = vpack.c.b16 %v875, %v874
    %v1001 = vpack.c.b16 %v877, %v876
    %v1002 = vpack.c.b16 %v879, %v878
    %v1003 = vpack.c.b16 %v880, %v880
    %vm1126 = vcmask 269312
    %v1128 = vsel %vm1126, %v375, 0
    %vm1130 = vcmask 1040384
    %v1131 = vsel 0, 4294967295, 65535
    %v1132 = vsel %vm1130, %v1131, 0
    %v1134 = vand.u32 %v1003, %v1132
    %1136 = vmatprep.subr.bf16.mxu0 0
    %1137 = vmatpush1.bf16.msra.mxu0 %v881
    %1138 = vmatprep.subr.bf16.mxu0 0
    %1139 = vmatpush1.bf16.msra.mxu0 %v882
    %1140 = vmatprep.subr.bf16.mxu0 0
    %1141 = vmatpush1.bf16.msra.mxu0 %v883
    %1142 = vmatprep.subr.bf16.mxu0 0
    %1143 = vmatpush1.bf16.msra.mxu0 %v884
    %1144 = vmatprep.subr.bf16.mxu0 0
    %1145 = vmatpush1.bf16.msra.mxu0 %v885
    %1146 = vmatprep.subr.bf16.mxu0 0
    %1147 = vmatpush1.bf16.msra.mxu0 %v886
    %1148 = vmatprep.subr.bf16.mxu0 0
    %1149 = vmatpush1.bf16.msra.mxu0 %v887
    %1150 = vmatprep.subr.bf16.mxu0 0
    %1151 = vmatpush1.bf16.msra.mxu0 %v888
    %1152 = vmatprep.subr.bf16.mxu0 0
    %1153 = vmatpush1.bf16.msra.mxu0 %v889
    %1154 = vmatprep.subr.bf16.mxu0 0
    %1155 = vmatpush1.bf16.msra.mxu0 %v890
    %1156 = vmatprep.subr.bf16.mxu0 0
    %1157 = vmatpush1.bf16.msra.mxu0 %v891
    %1158 = vmatprep.subr.bf16.mxu0 0
    %1159 = vmatpush1.bf16.msra.mxu0 %v892
    %1160 = vmatprep.subr.bf16.mxu0 0
    %1161 = vmatpush1.bf16.msra.mxu0 %v893
    %1162 = vmatprep.subr.bf16.mxu0 0
    %1163 = vmatpush1.bf16.msra.mxu0 %v894
    %1164 = vmatprep.subr.bf16.mxu0 0
    %1165 = vmatpush1.bf16.msra.mxu0 %v895
    %1166 = vmatprep.subr.bf16.mxu0 0
    %1167 = vmatpush1.bf16.msra.mxu0 %v896
    %1168 = vmatprep.mubr.bf16.mxu0 %v315
    %1169 = vmatmul.mubr.bf16.gmra.mrb[0].mxu0 %v301
    %v1170 = vpop.f32.mrb[0].mxu0
    %v1171 = vadd.f32 %v274, %v1170
    %v1172 = vpop.f32.mrb[0].mxu0
    %v1173 = vpop.f32.mrb[0].mxu0
    %v1174 = vpop.f32.mrb[0].mxu0
    %1175 = vdwg.mxu0
    %1176 = vmatprep.subr.bf16.mxu0 0
    %1177 = vmatpush1.bf16.msra.mxu0 %v897
    %1178 = vmatprep.subr.bf16.mxu0 0
    %1179 = vmatpush1.bf16.msra.mxu0 %v898
    %1180 = vmatprep.subr.bf16.mxu0 0
    %1181 = vmatpush1.bf16.msra.mxu0 %v899
    %1182 = vmatprep.subr.bf16.mxu0 0
    %1183 = vmatpush1.bf16.msra.mxu0 %v900
    %1184 = vmatprep.subr.bf16.mxu0 0
    %1185 = vmatpush1.bf16.msra.mxu0 %v901
    %1186 = vmatprep.subr.bf16.mxu0 0
    %1187 = vmatpush1.bf16.msra.mxu0 %v902
    %1188 = vmatprep.subr.bf16.mxu0 0
    %1189 = vmatpush1.bf16.msra.mxu0 %v903
    %1190 = vmatprep.subr.bf16.mxu0 0
    %1191 = vmatpush1.bf16.msra.mxu0 %v904
    %1192 = vmatprep.subr.bf16.mxu0 0
    %1193 = vmatpush1.bf16.msra.mxu0 %v905
    %1194 = vmatprep.subr.bf16.mxu0 0
    %1195 = vmatpush1.bf16.msra.mxu0 %v906
    %1196 = vmatprep.subr.bf16.mxu0 0
    %1197 = vmatpush1.bf16.msra.mxu0 %v907
    %1198 = vmatprep.subr.bf16.mxu0 0
    %1199 = vmatpush1.bf16.msra.mxu0 %v908
    %1200 = vmatprep.subr.bf16.mxu0 0
    %1201 = vmatpush1.bf16.msra.mxu0 %v909
    %1202 = vmatprep.subr.bf16.mxu0 0
    %1203 = vmatpush1.bf16.msra.mxu0 %v910
    %1204 = vmatprep.subr.bf16.mxu0 0
    %1205 = vmatpush1.bf16.msra.mxu0 %v911
    %1206 = vmatprep.subr.bf16.mxu0 0
    %1207 = vmatpush1.bf16.msra.mxu0 %v912
    %1208 = vmatprep.mubr.bf16.mxu0 %v325
    %1209 = vmatmul.mubr.bf16.gmra.mrb[0].mxu0 %v323
    %v1210 = vpop.f32.mrb[0].mxu0
    %v1211 = vadd.f32 %v1171, %v1210
    %v1212 = vpop.f32.mrb[0].mxu0
    %v1213 = vpop.f32.mrb[0].mxu0
    %v1214 = vpop.f32.mrb[0].mxu0
    %1215 = vdwg.mxu0
    %1216 = vmatprep.subr.bf16.mxu0 0
    %1217 = vmatpush1.bf16.msra.mxu0 %v913
    %1218 = vmatprep.subr.bf16.mxu0 0
    %1219 = vmatpush1.bf16.msra.mxu0 %v914
    %1220 = vmatprep.subr.bf16.mxu0 0
    %1221 = vmatpush1.bf16.msra.mxu0 %v915
    %1222 = vmatprep.subr.bf16.mxu0 0
    %1223 = vmatpush1.bf16.msra.mxu0 %v916
    %1224 = vmatprep.subr.bf16.mxu0 0
    %1225 = vmatpush1.bf16.msra.mxu0 %v917
    %1226 = vmatprep.subr.bf16.mxu0 0
    %1227 = vmatpush1.bf16.msra.mxu0 %v918
    %1228 = vmatprep.subr.bf16.mxu0 0
    %1229 = vmatpush1.bf16.msra.mxu0 %v919
    %1230 = vmatprep.subr.bf16.mxu0 0
    %1231 = vmatpush1.bf16.msra.mxu0 %v920
    %1232 = vmatprep.subr.bf16.mxu0 0
    %1233 = vmatpush1.bf16.msra.mxu0 %v921
    %1234 = vmatprep.subr.bf16.mxu0 0
    %1235 = vmatpush1.bf16.msra.mxu0 %v922
    %1236 = vmatprep.subr.bf16.mxu0 0
    %1237 = vmatpush1.bf16.msra.mxu0 %v923
    %1238 = vmatprep.subr.bf16.mxu0 0
    %1239 = vmatpush1.bf16.msra.mxu0 %v924
    %1240 = vmatprep.subr.bf16.mxu0 0
    %1241 = vmatpush1.bf16.msra.mxu0 %v925
    %1242 = vmatprep.subr.bf16.mxu0 0
    %1243 = vmatpush1.bf16.msra.mxu0 %v926
    %1244 = vmatprep.subr.bf16.mxu0 0
    %1245 = vmatpush1.bf16.msra.mxu0 %v927
    %1246 = vmatprep.subr.bf16.mxu0 0
    %1247 = vmatpush1.bf16.msra.mxu0 %v928
    %1248 = vmatprep.mubr.bf16.mxu0 %v322
    %1249 = vmatmul.mubr.bf16.gmra.mrb[0].mxu0 %v308
    %v1250 = vpop.f32.mrb[0].mxu0
    %v1251 = vadd.f32 %v1211, %v1250
    %v1252 = vpop.f32.mrb[0].mxu0
    %v1253 = vpop.f32.mrb[0].mxu0
    %v1254 = vpop.f32.mrb[0].mxu0
    %1255 = vdwg.mxu0
    %1256 = vmatprep.subr.bf16.mxu0 0
    %1257 = vmatpush1.bf16.msra.mxu0 %v929
    %1258 = vmatprep.subr.bf16.mxu0 0
    %1259 = vmatpush1.bf16.msra.mxu0 %v930
    %1260 = vmatprep.subr.bf16.mxu0 0
    %1261 = vmatpush1.bf16.msra.mxu0 %v931
    %1262 = vmatprep.subr.bf16.mxu0 0
    %1263 = vmatpush1.bf16.msra.mxu0 %v932
    %1264 = vmatprep.subr.bf16.mxu0 0
    %1265 = vmatpush1.bf16.msra.mxu0 %v933
    %1266 = vmatprep.subr.bf16.mxu0 0
    %1267 = vmatpush1.bf16.msra.mxu0 %v934
    %1268 = vmatprep.subr.bf16.mxu0 0
    %1269 = vmatpush1.bf16.msra.mxu0 %v935
    %1270 = vmatprep.subr.bf16.mxu0 0
    %1271 = vmatpush1.bf16.msra.mxu0 %v936
    %1272 = vmatprep.subr.bf16.mxu0 0
    %1273 = vmatpush1.bf16.msra.mxu0 %v937
    %1274 = vmatprep.subr.bf16.mxu0 0
    %1275 = vmatpush1.bf16.msra.mxu0 %v938
    %1276 = vmatprep.subr.bf16.mxu0 0
    %1277 = vmatpush1.bf16.msra.mxu0 %v939
    %1278 = vmatprep.subr.bf16.mxu0 0
    %1279 = vmatpush1.bf16.msra.mxu0 %v940
    %1280 = vmatprep.subr.bf16.mxu0 0
    %1281 = vmatpush1.bf16.msra.mxu0 %v941
    %1282 = vmatprep.subr.bf16.mxu0 0
    %1283 = vmatpush1.bf16.msra.mxu0 %v942
    %1284 = vmatprep.subr.bf16.mxu0 0
    %1285 = vmatpush1.bf16.msra.mxu0 %v943
    %1286 = vmatprep.subr.bf16.mxu0 0
    %1287 = vmatpush1.bf16.msra.mxu0 %v944
    %1288 = vmatprep.mubr.bf16.mxu0 %v326
    %1289 = vmatmul.mubr.bf16.gmra.mrb[0].mxu0 %v324
    %v1290 = vpop.f32.mrb[0].mxu0
    %v1291 = vadd.f32 %v1251, %v1290
    %v1292 = vpop.f32.mrb[0].mxu0
    %v1293 = vpop.f32.mrb[0].mxu0
    %v1294 = vpop.f32.mrb[0].mxu0
    %1295 = vdwg.mxu0
    %1296 = vmatprep.subr.bf16.mxu0 0
    %1297 = vmatpush1.bf16.msra.mxu0 %v945
    %1298 = vmatprep.subr.bf16.mxu0 0
    %1299 = vmatpush1.bf16.msra.mxu0 %v946
    %1300 = vmatprep.subr.bf16.mxu0 0
    %1301 = vmatpush1.bf16.msra.mxu0 %v947
    %1302 = vmatprep.subr.bf16.mxu0 0
    %1303 = vmatpush1.bf16.msra.mxu0 %v948
    %1304 = vmatprep.subr.bf16.mxu0 0
    %1305 = vmatpush1.bf16.msra.mxu0 %v949
    %1306 = vmatprep.subr.bf16.mxu0 0
    %1307 = vmatpush1.bf16.msra.mxu0 %v950
    %1308 = vmatprep.subr.bf16.mxu0 0
    %1309 = vmatpush1.bf16.msra.mxu0 %v951
    %1310 = vmatprep.subr.bf16.mxu0 0
    %1311 = vmatpush1.bf16.msra.mxu0 %v952
    %1312 = vmatprep.subr.bf16.mxu0 0
    %1313 = vmatpush1.bf16.msra.mxu0 %v953
    %1314 = vmatprep.subr.bf16.mxu0 0
    %1315 = vmatpush1.bf16.msra.mxu0 %v954
    %1316 = vmatprep.subr.bf16.mxu0 0
    %1317 = vmatpush1.bf16.msra.mxu0 %v955
    %1318 = vmatprep.subr.bf16.mxu0 0
    %1319 = vmatpush1.bf16.msra.mxu0 %v956
    %1320 = vmatprep.subr.bf16.mxu0 0
    %1321 = vmatpush1.bf16.msra.mxu0 %v957
    %1322 = vmatprep.subr.bf16.mxu0 0
    %1323 = vmatpush1.bf16.msra.mxu0 %v958
    %1324 = vmatprep.subr.bf16.mxu0 0
    %1325 = vmatpush1.bf16.msra.mxu0 %v959
    %1326 = vmatprep.subr.bf16.mxu0 0
    %1327 = vmatpush1.bf16.msra.mxu0 %v960
    %1328 = vmatprep.mubr.bf16.mxu0 %v364
    %1329 = vmatmul.mubr.bf16.gmra.mrb[0].mxu0 %v350
    %v1330 = vpop.f32.mrb[0].mxu0
    %v1331 = vadd.f32 %v1291, %v1330
    %v1332 = vpop.f32.mrb[0].mxu0
    %v1333 = vpop.f32.mrb[0].mxu0
    %v1334 = vpop.f32.mrb[0].mxu0
    %1335 = vdwg.mxu0
    %1336 = vmatprep.subr.bf16.mxu0 0
    %1337 = vmatpush1.bf16.msra.mxu0 %v961
    %1338 = vmatprep.subr.bf16.mxu0 0
    %1339 = vmatpush1.bf16.msra.mxu0 %v962
    %1340 = vmatprep.subr.bf16.mxu0 0
    %1341 = vmatpush1.bf16.msra.mxu0 %v963
    %1342 = vmatprep.subr.bf16.mxu0 0
    %1343 = vmatpush1.bf16.msra.mxu0 %v964
    %1344 = vmatprep.subr.bf16.mxu0 0
    %1345 = vmatpush1.bf16.msra.mxu0 %v965
    %1346 = vmatprep.subr.bf16.mxu0 0
    %1347 = vmatpush1.bf16.msra.mxu0 %v966
    %1348 = vmatprep.subr.bf16.mxu0 0
    %1349 = vmatpush1.bf16.msra.mxu0 %v967
    %1350 = vmatprep.subr.bf16.mxu0 0
    %1351 = vmatpush1.bf16.msra.mxu0 %v968
    %1352 = vmatprep.subr.bf16.mxu0 0
    %1353 = vmatpush1.bf16.msra.mxu0 %v969
    %1354 = vmatprep.subr.bf16.mxu0 0
    %1355 = vmatpush1.bf16.msra.mxu0 %v970
    %1356 = vmatprep.subr.bf16.mxu0 0
    %1357 = vmatpush1.bf16.msra.mxu0 %v971
    %1358 = vmatprep.subr.bf16.mxu0 0
    %1359 = vmatpush1.bf16.msra.mxu0 %v972
    %1360 = vmatprep.subr.bf16.mxu0 0
    %1361 = vmatpush1.bf16.msra.mxu0 %v973
    %1362 = vmatprep.subr.bf16.mxu0 0
    %1363 = vmatpush1.bf16.msra.mxu0 %v974
    %1364 = vmatprep.subr.bf16.mxu0 0
    %1365 = vmatpush1.bf16.msra.mxu0 %v975
    %1366 = vmatprep.subr.bf16.mxu0 0
    %1367 = vmatpush1.bf16.msra.mxu0 %v976
    %1368 = vmatprep.mubr.bf16.mxu0 %v374
    %1369 = vmatmul.mubr.bf16.gmra.mrb[0].mxu0 %v372
    %v1370 = vpop.f32.mrb[0].mxu0
    %v1371 = vadd.f32 %v1331, %v1370
    %v1372 = vpop.f32.mrb[0].mxu0
    %v1373 = vpop.f32.mrb[0].mxu0
    %v1374 = vpop.f32.mrb[0].mxu0
    %1375 = vdwg.mxu0
    %1376 = vmatprep.subr.bf16.mxu0 0
    %1377 = vmatpush1.bf16.msra.mxu0 %v977
    %1378 = vmatprep.subr.bf16.mxu0 0
    %1379 = vmatpush1.bf16.msra.mxu0 %v978
    %1380 = vmatprep.subr.bf16.mxu0 0
    %1381 = vmatpush1.bf16.msra.mxu0 %v979
    %1382 = vmatprep.subr.bf16.mxu0 0
    %1383 = vmatpush1.bf16.msra.mxu0 %v980
    %1384 = vmatprep.subr.bf16.mxu0 0
    %1385 = vmatpush1.bf16.msra.mxu0 %v981
    %1386 = vmatprep.subr.bf16.mxu0 0
    %1387 = vmatpush1.bf16.msra.mxu0 %v982
    %1388 = vmatprep.subr.bf16.mxu0 0
    %1389 = vmatpush1.bf16.msra.mxu0 %v983
    %1390 = vmatprep.subr.bf16.mxu0 0
    %1391 = vmatpush1.bf16.msra.mxu0 %v984
    %1392 = vmatprep.subr.bf16.mxu0 0
    %1393 = vmatpush1.bf16.msra.mxu0 %v985
    %1394 = vmatprep.subr.bf16.mxu0 0
    %1395 = vmatpush1.bf16.msra.mxu0 %v986
    %1396 = vmatprep.subr.bf16.mxu0 0
    %1397 = vmatpush1.bf16.msra.mxu0 %v987
    %1398 = vmatprep.subr.bf16.mxu0 0
    %1399 = vmatpush1.bf16.msra.mxu0 %v988
    %1400 = vmatprep.subr.bf16.mxu0 0
    %1401 = vmatpush1.bf16.msra.mxu0 %v989
    %1402 = vmatprep.subr.bf16.mxu0 0
    %1403 = vmatpush1.bf16.msra.mxu0 %v990
    %1404 = vmatprep.subr.bf16.mxu0 0
    %1405 = vmatpush1.bf16.msra.mxu0 %v991
    %1406 = vmatprep.subr.bf16.mxu0 0
    %1407 = vmatpush1.bf16.msra.mxu0 %v992
    %1408 = vmatprep.mubr.bf16.mxu0 %v371
    %1409 = vmatmul.mubr.bf16.gmra.mrb[0].mxu0 %v357
    %v1410 = vpop.f32.mrb[0].mxu0
    %v1411 = vadd.f32 %v1371, %v1410
    %v1412 = vpop.f32.mrb[0].mxu0
    %v1413 = vpop.f32.mrb[0].mxu0
    %v1414 = vpop.f32.mrb[0].mxu0
    %1415 = vdwg.mxu0
    %1416 = vmatprep.subr.bf16.mxu0 0
    %1417 = vmatpush1.bf16.msra.mxu0 %v993
    %1418 = vmatprep.subr.bf16.mxu0 0
    %1419 = vmatpush1.bf16.msra.mxu0 %v994
    %1420 = vmatprep.subr.bf16.mxu0 0
    %1421 = vmatpush1.bf16.msra.mxu0 %v995
    %1422 = vmatprep.subr.bf16.mxu0 0
    %1423 = vmatpush1.bf16.msra.mxu0 %v996
    %1424 = vmatprep.subr.bf16.mxu0 0
    %1425 = vmatpush1.bf16.msra.mxu0 %v997
    %1426 = vmatprep.subr.bf16.mxu0 0
    %1427 = vmatpush1.bf16.msra.mxu0 %v998
    %1428 = vmatprep.subr.bf16.mxu0 0
    %1429 = vmatpush1.bf16.msra.mxu0 %v999
    %1430 = vmatprep.subr.bf16.mxu0 0
    %1431 = vmatpush1.bf16.msra.mxu0 %v1000
    %1432 = vmatprep.subr.bf16.mxu0 0
    %1433 = vmatpush1.bf16.msra.mxu0 %v1001
    %1434 = vmatprep.subr.bf16.mxu0 0
    %1435 = vmatpush1.bf16.msra.mxu0 %v1002
    %1436 = vmatprep.subr.bf16.mxu0 0
    %1437 = vmatpush1.bf16.msra.mxu0 %v1134
    %1438 = vmatprep.subr.bf16.mxu0 0
    %1439 = vmatpush1.bf16.msra.mxu0 0
    %1440 = vmatprep.subr.bf16.mxu0 0
    %1441 = vmatpush1.bf16.msra.mxu0 0
    %1442 = vmatprep.subr.bf16.mxu0 0
    %1443 = vmatpush1.bf16.msra.mxu0 0
    %1444 = vmatprep.subr.bf16.mxu0 0
    %1445 = vmatpush1.bf16.msra.mxu0 0
    %1446 = vmatprep.subr.bf16.mxu0 0
    %1447 = vmatpush1.bf16.msra.mxu0 0
    %1448 = vmatprep.mubr.bf16.mxu0 %v1128
    %1449 = vmatmul.mubr.bf16.gmra.mrb[0].mxu0 %v373
    %v1450 = vpop.f32.mrb[0].mxu0
    %v1451 = vadd.f32 %v1411, %v1450
    %v1452 = vpop.f32.mrb[0].mxu0
    %v1453 = vpop.f32.mrb[0].mxu0
    %v1454 = vpop.f32.mrb[0].mxu0
    %1455 = vdwg.mxu0
    %v1456 = vmax.f32 %v1451, 0.0
    %v1457 = vpack.c.bf16 %v1456, %v1456
    %v1458 = vld [vmem:[%s3] sm:$0xf]
    %v1459 = vld [vmem:[%s3 + $0x4] sm:$0xf]
    %v1460 = vld [vmem:[%s3 + $0x8] sm:$0xf]
    %v1461 = vld [vmem:[%s3 + $0xc] sm:$0xf]
    %v1462 = vld [vmem:[%s3 + $0x10] sm:$0xf]
    %v1463 = vld [vmem:[%s3 + $0x14] sm:$0xf]
    %v1464 = vld [vmem:[%s3 + $0x18] sm:$0xf]
    %v1465 = vld [vmem:[%s3 + $0x1c] sm:$0xf]
    %v1466 = vld [vmem:[%s3 + $0x20] sm:$0xf]
    %v1467 = vld [vmem:[%s3 + $0x24] sm:$0xf]
    %v1468 = vld [vmem:[%s3 + $0x28] sm:$0xf]
    %v1469 = vld [vmem:[%s3 + $0x2c] sm:$0xf]
    %v1470 = vld [vmem:[%s3 + $0x30] sm:$0xf]
    %v1471 = vld [vmem:[%s3 + $0x34] sm:$0xf]
    %v1472 = vld [vmem:[%s3 + $0x38] sm:$0xf]
    %v1473 = vld [vmem:[%s3 + $0x3c] sm:$0xf]
    %v1474 = vld [vmem:[%s4] sm:$0x1]
    %v1476 = vlaneseq
    %v1477 = vshrl.u32 %v1476, 7
    %v1478 = vsub.s32 0, %v1477
    %v1479 = vrot.slane %v1474, %v1478
    %v1497 = vunpack.c.l.b16 %v1458
    %v1498 = vunpack.c.l.b16 %v1459
    %v1499 = vunpack.c.l.b16 %v1460
    %v1500 = vunpack.c.l.b16 %v1461
    %v1501 = vunpack.c.l.b16 %v1462
    %v1502 = vunpack.c.l.b16 %v1463
    %v1503 = vunpack.c.l.b16 %v1464
    %v1504 = vunpack.c.l.b16 %v1465
    %v1505 = vunpack.c.l.b16 %v1466
    %v1506 = vunpack.c.l.b16 %v1467
    %v1507 = vunpack.c.l.b16 %v1468
    %v1508 = vunpack.c.l.b16 %v1469
    %v1509 = vunpack.c.l.b16 %v1470
    %v1510 = vunpack.c.l.b16 %v1471
    %v1511 = vunpack.c.l.b16 %v1472
    %v1512 = vunpack.c.l.b16 %v1473
    %v1513 = vpack.c.b16 %v1498, %v1497
    %v1514 = vpack.c.b16 %v1500, %v1499
    %v1515 = vpack.c.b16 %v1502, %v1501
    %v1516 = vpack.c.b16 %v1504, %v1503
    %v1517 = vpack.c.b16 %v1506, %v1505
    %v1518 = vpack.c.b16 %v1508, %v1507
    %v1519 = vpack.c.b16 %v1510, %v1509
    %v1520 = vpack.c.b16 %v1512, %v1511
    %1529 = vmatprep.subr.bf16.mxu0 0
    %1530 = vmatpush1.bf16.msra.mxu0 %v1513
    %1531 = vmatprep.subr.bf16.mxu0 0
    %1532 = vmatpush1.bf16.msra.mxu0 %v1514
    %1533 = vmatprep.subr.bf16.mxu0 0
    %1534 = vmatpush1.bf16.msra.mxu0 %v1515
    %1535 = vmatprep.subr.bf16.mxu0 0
    %1536 = vmatpush1.bf16.msra.mxu0 %v1516
    %1537 = vmatprep.subr.bf16.mxu0 0
    %1538 = vmatpush1.bf16.msra.mxu0 %v1517
    %1539 = vmatprep.subr.bf16.mxu0 0
    %1540 = vmatpush1.bf16.msra.mxu0 %v1518
    %1541 = vmatprep.subr.bf16.mxu0 0
    %1542 = vmatpush1.bf16.msra.mxu0 %v1519
    %1543 = vmatprep.subr.bf16.mxu0 0
    %1544 = vmatpush1.bf16.msra.mxu0 %v1520
    %1545 = vmatprep.subr.bf16.mxu0 0
    %1546 = vmatpush1.bf16.msra.mxu0 0
    %1547 = vmatprep.subr.bf16.mxu0 0
    %1548 = vmatpush1.bf16.msra.mxu0 0
    %1549 = vmatprep.subr.bf16.mxu0 0
    %1550 = vmatpush1.bf16.msra.mxu0 0
    %1551 = vmatprep.subr.bf16.mxu0 0
    %1552 = vmatpush1.bf16.msra.mxu0 0
    %1553 = vmatprep.subr.bf16.mxu0 0
    %1554 = vmatpush1.bf16.msra.mxu0 0
    %1555 = vmatprep.subr.bf16.mxu0 0
    %1556 = vmatpush1.bf16.msra.mxu0 0
    %1557 = vmatprep.subr.bf16.mxu0 0
    %1558 = vmatpush1.bf16.msra.mxu0 0
    %1559 = vmatprep.subr.bf16.mxu0 0
    %1560 = vmatpush1.bf16.msra.mxu0 0
    %1561 = vmatprep.mubr.bf16.mxu0 0
    %1562 = vmatmul.mubr.bf16.gmra.mrb[0].mxu0 %v1457
    %v1563 = vpop.f32.mrb[0].mxu0
    %v1564 = vadd.f32 %v1479, %v1563
    %v1565 = vpop.f32.mrb[0].mxu0
    %v1566 = vpop.f32.mrb[0].mxu0
    %v1567 = vpop.f32.mrb[0].mxu0
    %1568 = vdwg.mxu0
    %1569 = vst [vmem:[#allocation2] sm:$0x3] %v1564
    // Predicated region
    $region22: #{_lambda_.5} parent=1 // pred_check
      _
    $region23: #{_lambda_.5} parent=1 // pred_check_branch
      %1571 = sbr.rel (0) target = $region25
    $region24: #{_lambda_.5} parent=1 // pred_region
      %s1573 = ssub.s32 32, 32
      %1574 = vsyncadd [#allocation3], %s1573
      %s1576 = sshll.u32 [#allocation2], 4
      %s1577 = int_to_ptr.vmem [resolvable:$true] %s1576
      %1579 = dma.vmem_to_hbm [thread:$0]  %s1577, 32, %s5, [#allocation3]
    $region25: #{_lambda_.5} parent=1 // pred_fallthru
      _
    // Predicated region
    $region26: #{_lambda_.5} parent=1 // pred_check
      _
    $region27: #{_lambda_.5} parent=1 // pred_check_branch
      %1581 = sbr.rel (0) target = $region29
    $region28: #{_lambda_.5} parent=1 // pred_region
      %1582 = dma.done [#allocation3], 32
    $region29: #{_lambda_.5} parent=1 // pred_fallthru
      _
    %1583 = vsyncpa [#allocation3], 1

</llo_original>
